<compile_context>
chip_gen: v5e
topology: v5e:2x2
jax: 0.10.0
libtpu: 0.0.40
codegen_flags: <defaults>
</compile_context>

<pallas_src>
import functools

import numpy as np

import jax
import jax.numpy as jnp
from jax.experimental import pallas as pl
from jax.experimental.pallas import tpu as pltpu


# ---------------------------------------------------------------------------
# Generation-aware budgets (v5e/v6e: 128 MiB VMEM, 1 TC; v7x: 64 MiB, 2 TCs).
# ---------------------------------------------------------------------------

@functools.lru_cache(maxsize=None)
def _vmem_capacity_bytes() -> int:
    """Per-TensorCore VMEM capacity; conservative fallback if query fails."""
    try:
        return int(pltpu.get_tpu_info().vmem_capacity_bytes)
    except Exception:
        return 64 * 1024 * 1024  # v7x per-TensorCore value; safe everywhere


@functools.lru_cache(maxsize=None)
def _num_tensorcores() -> int:
    # Heuristic: v7x exposes 64 MiB VMEM per TensorCore and has 2 TCs/chip;
    # v5e/v6e expose 128 MiB and have a single TC.
    return 2 if _vmem_capacity_bytes() <= 64 * 1024 * 1024 else 1


@functools.lru_cache(maxsize=None)
def _budgets() -> tuple:
    """(vmem_limit_bytes, block_budget_bytes, kron_weight_max_bytes)."""
    cap = _vmem_capacity_bytes()
    vmem_limit = (cap * 3) // 4               # ~96 MiB v5e/v6e, ~48 MiB v7x
    block_budget = (cap * 2) // 5             # ~51 MiB v5e/v6e, ~25 MiB v7x
    kron_max = min(8 * 1024 * 1024, cap // 16)  # 8 MiB v5e/v6e, 4 MiB v7x
    return vmem_limit, block_budget, kron_max


# ---------------------------------------------------------------------------
# Interpolation weights (numpy, cached -> trace-time constants).
# ---------------------------------------------------------------------------

@functools.lru_cache(maxsize=None)
def _interp_matrix(out_size: int, in_size: int, s: int, mode: str) -> np.ndarray:
    """1-D interpolation matrix (out_size, in_size) as an f32 numpy array."""
    w = np.zeros((out_size, in_size), dtype=np.float32)
    o = np.arange(out_size)
    if mode == "nearest":
        # torch 'nearest': src = floor(out * in/out)
        src = np.clip((o * in_size) // out_size, 0, in_size - 1)
        w[o, src] = 1.0
    else:  # bilinear, half-pixel centers (torch align_corners=False)
        src = (o.astype(np.float64) + 0.5) / float(s) - 0.5
        src = np.clip(src, 0.0, in_size - 1)
        i0 = np.floor(src).astype(np.int64)
        i1 = np.minimum(i0 + 1, in_size - 1)
        w1 = (src - i0).astype(np.float32)
        w0 = (1.0 - w1).astype(np.float32)
        np.add.at(w, (o, i0), w0)
        np.add.at(w, (o, i1), w1)
    return w


@functools.lru_cache(maxsize=None)
def _kron_weight(H: int, W: int, s: int, mode: str) -> np.ndarray:
    """Wk[h*W+w, ho*(W*s)+wo] = Wy[ho, h] * Wx[wo, w], f32 numpy."""
    wy = _interp_matrix(H * s, H, s, mode)   # (Ho, H)
    wx = _interp_matrix(W * s, W, s, mode)   # (Wo, W)
    return np.einsum("oh,pw->hwop", wy, wx).reshape(H * W, H * s * W * s)


# ---------------------------------------------------------------------------
# Kernels.
# ---------------------------------------------------------------------------

def _kron_kernel(wk_ref, x_ref, o_ref):
    # (m, H*W) @ (H*W, Ho*Wo) -> (m, Ho*Wo): single lane-dense MXU matmul.
    prec = jax.lax.Precision.HIGHEST if x_ref.dtype == jnp.float32 else None
    o_ref[...] = jnp.dot(
        x_ref[...], wk_ref[...],
        preferred_element_type=jnp.float32, precision=prec,
    ).astype(o_ref.dtype)


def _sep_kernel(wy_ref, wxT_ref, x_ref, o_ref):
    # Batched separable upsample: out[b] = Wy @ x[b] @ WxT for every plane in
    # the block.  Two 2-D MXU matmuls per plane, no in-kernel relayouts.
    wy = wy_ref[...]       # (Ho, H)
    wxT = wxT_ref[...]     # (W, Wo)
    prec = jax.lax.Precision.HIGHEST if x_ref.dtype == jnp.float32 else None
    nb = x_ref.shape[0]
    for b in range(nb):    # static, fully unrolled; planes are independent
        t = jnp.dot(wy, x_ref[b], preferred_element_type=jnp.float32,
                    precision=prec)                       # (Ho, W) f32
        # Cast the accumulator down to the weight dtype so the second matmul
        # stays on the native bf16 MXU path for bf16 inputs (no per-step VPU
        # up-cast of the constant weight).  No-op for f32 inputs.
        t = t.astype(wxT.dtype)
        o_ref[b] = jnp.dot(
            t, wxT, preferred_element_type=jnp.float32, precision=prec
        ).astype(o_ref.dtype)                             # (Ho, Wo)


# ---------------------------------------------------------------------------
# Tile-size selection.
# ---------------------------------------------------------------------------

def _choose_rows_per_block(nc: int, row_in_bytes: int, row_out_bytes: int) -> int:
    """Rows of the (nc, H*W) activation per grid step (Kron path)."""
    _, block_budget, _ = _budgets()
    per_row = 2 * (row_in_bytes + row_out_bytes)   # in + out blocks, double-buffered
    m = max(8, block_budget // max(per_row, 1))
    m = min(m, nc)
    num_tc = _num_tensorcores()
    if num_tc > 1 and nc >= 16 * num_tc:
        # Multi-TensorCore part: keep >= 2 blocks per core so each core's own
        # pipeline still overlaps the i+1 prefetch with compute.  Single-TC
        # parts (v5e/v6e) keep one maximal block instead of splitting.
        m = min(m, -(-nc // (2 * num_tc)))
    if m < nc:
        # MXU M dimension pads to 256 on v6e/v7x (128 on v5e); keep the tile a
        # multiple when large, otherwise a multiple of the 8-sublane tile.
        if m >= 256:
            m -= m % 256
        else:
            m -= m % 8
        m = max(m, 8)
    return int(max(min(m, nc), 1))


def _choose_planes_per_block(nc: int, plane_in_bytes: int, plane_out_bytes: int) -> int:
    """Planes per grid step for the batched separable path."""
    _, block_budget, _ = _budgets()
    per_plane = 2 * (plane_in_bytes + plane_out_bytes)
    b = max(1, block_budget // max(per_plane, 1))
    b = min(b, nc, 16)   # cap the unrolled in-kernel plane loop
    num_tc = _num_tensorcores()
    if num_tc > 1 and nc >= 4 * num_tc:
        b = min(b, -(-nc // (2 * num_tc)))
    return int(max(b, 1))


# ---------------------------------------------------------------------------
# Public entry point.
# ---------------------------------------------------------------------------

@functools.partial(jax.jit, static_argnames=("scale_factor", "mode"))
def upsample_one(x: jax.Array, scale_factor: int, mode: str = "bilinear") -> jax.Array:
    """Upsample a single NCHW feature map by an integer factor (Pallas TPU)."""
    if mode not in ("bilinear", "nearest"):
        raise ValueError(f"unsupported mode: {mode}")
    s = int(scale_factor)
    if s != scale_factor or s < 1:
        raise ValueError("scale_factor must be a positive integer")
    if s == 1:
        return x

    N, C, H, W = x.shape
    Ho, Wo = H * s, W * s
    nc = N * C
    itemsize = x.dtype.itemsize
    w_dtype = jnp.bfloat16 if x.dtype == jnp.bfloat16 else jnp.float32
    w_itemsize = np.dtype(w_dtype).itemsize
    vmem_limit, _, kron_max = _budgets()

    # --- dispatch: Kronecker single-matmul vs batched separable -------------
    wk_bytes = (H * W) * (Ho * Wo) * w_itemsize
    lane_dense_kron = (Ho * Wo) % 128 == 0
    if mode == "nearest":
        # TODO(synk): a pure-VPU replication kernel (broadcast + reshape) would
        # avoid one-hot matmuls entirely; the one-hot weights used below are
        # tiny, so the kernel stays on the HBM roofline regardless.
        prefer_kron = Wo < 128
    else:
        # Kron pays off when the per-plane output row is not lane-dense
        # (Wo < 128) or the contraction depth H*W is small; otherwise the
        # separable path does ~(W + H/s) MACs/output instead of 2*H*W.
        prefer_kron = (Wo < 128) or (H * W <= 512)
    use_kron = prefer_kron and lane_dense_kron and (wk_bytes <= kron_max)

    if use_kron:
        # out_flat (nc, Ho*Wo) = x_flat (nc, H*W) @ Wk (H*W, Ho*Wo)
        wk = jnp.asarray(_kron_weight(H, W, s, mode), dtype=w_dtype)
        x_flat = x.reshape(nc, H * W)
        m_tile = _choose_rows_per_block(nc, H * W * itemsize, Ho * Wo * itemsize)
        grid = (pl.cdiv(nc, m_tile),)
        out_flat = pl.pallas_call(
            _kron_kernel,
            out_shape=jax.ShapeDtypeStruct((nc, Ho * Wo), x.dtype),
            grid_spec=pltpu.PrefetchScalarGridSpec(
                num_scalar_prefetch=0,
                grid=grid,
                in_specs=[
                    # Grid-invariant weight: single VMEM buffer, fetched once.
                    pl.BlockSpec((H * W, Ho * Wo), lambda i: (0, 0),
                                 pipeline_mode=pl.Buffered(1)),
                    pl.BlockSpec((m_tile, H * W), lambda i: (i, 0)),
                ],
                out_specs=pl.BlockSpec((m_tile, Ho * Wo), lambda i: (i, 0)),
            ),
            compiler_params=pltpu.CompilerParams(
                # TODO(synk): switch to pltpu.CORE_PARALLEL on multi-TC parts
                # (v7x) once its grid constraints are verified on hardware.
                dimension_semantics=("parallel",),
                vmem_limit_bytes=vmem_limit,
            ),
        )(wk, x_flat)
        return out_flat.reshape(N, C, Ho, Wo)

    # --- batched separable path: out[b] = Wy @ x[b] @ WxT --------------------
    # TODO(synk): for very large H/W, band the contraction (2-tap bilinear)
    # instead of dense (Ho, H)/(W, Wo) weights to avoid O(H)+O(W) MACs/output.
    wy = jnp.asarray(_interp_matrix(Ho, H, s, mode), dtype=w_dtype)            # (Ho, H)
    wxT = jnp.asarray(_interp_matrix(Wo, W, s, mode).T.copy(), dtype=w_dtype)  # (W, Wo)
    x_pl = x.reshape(nc, H, W)
    bpp = _choose_planes_per_block(nc, H * W * itemsize, Ho * Wo * itemsize)
    grid = (pl.cdiv(nc, bpp),)
    out_pl = pl.pallas_call(
        _sep_kernel,
        out_shape=jax.ShapeDtypeStruct((nc, Ho, Wo), x.dtype),
        grid_spec=pltpu.PrefetchScalarGridSpec(
            num_scalar_prefetch=0,
            grid=grid,
            in_specs=[
                pl.BlockSpec((Ho, H), lambda i: (0, 0), pipeline_mode=pl.Buffered(1)),
                pl.BlockSpec((W, Wo), lambda i: (0, 0), pipeline_mode=pl.Buffered(1)),
                pl.BlockSpec((bpp, H, W), lambda i: (i, 0, 0)),
            ],
            out_specs=pl.BlockSpec((bpp, Ho, Wo), lambda i: (i, 0, 0)),
        ),
        compiler_params=pltpu.CompilerParams(
            dimension_semantics=("parallel",),
            vmem_limit_bytes=vmem_limit,
        ),
    )(wy, wxT, x_pl)
    return out_pl.reshape(N, C, Ho, Wo)


class Upsample:
    """JAX/Pallas port of rslearn.models.upsample.Upsample (forward only)."""

    def __init__(self, scale_factor: int, mode: str = "bilinear"):
        self.scale_factor = int(scale_factor)
        self.mode = mode

    def __call__(self, features, inputs=None):
        # `inputs` is ignored, matching the PyTorch module's forward signature.
        return [
            upsample_one(f, scale_factor=self.scale_factor, mode=self.mode)
            for f in features
        ]


if __name__ == "__main__":
    key = jax.random.PRNGKey(0)
    k1, k2, k3 = jax.random.split(key, 3)

    # Multi-scale NCHW feature maps, as produced by an FPN-style backbone.
    feat0 = jax.random.normal(k1, (2, 4, 16, 16), dtype=jnp.float32)
    feat1 = jax.random.normal(k2, (2, 4, 8, 8), dtype=jnp.float32)

    model = Upsample(scale_factor=2, mode="bilinear")
    outs = model([feat0, feat1], inputs=None)
    outs = [jax.block_until_ready(o) for o in outs]
    assert outs[0].shape == (2, 4, 32, 32), outs[0].shape
    assert outs[1].shape == (2, 4, 16, 16), outs[1].shape

    # Reference: jax.image.resize bilinear == torch align_corners=False upsample.
    ref0 = jax.image.resize(feat0, (2, 4, 32, 32), method="bilinear")
    ref1 = jax.image.resize(feat1, (2, 4, 16, 16), method="bilinear")
    assert jnp.max(jnp.abs(outs[0] - ref0)) < 1e-4
    assert jnp.max(jnp.abs(outs[1] - ref1)) < 1e-4

    # Exercise the batched separable path (H*W > 512, Wo >= 128).
    feat2 = jax.random.normal(k3, (1, 2, 32, 72), dtype=jnp.float32)
    out2 = jax.block_until_ready(model([feat2], inputs=None)[0])
    assert out2.shape == (1, 2, 64, 144), out2.shape
    ref2 = jax.image.resize(feat2, (1, 2, 64, 144), method="bilinear")
    assert jnp.max(jnp.abs(out2 - ref2)) < 1e-4

    # Nearest mode: integer-factor torch 'nearest' == pixel repetition.
    nn_model = Upsample(scale_factor=2, mode="nearest")
    out_nn = jax.block_until_ready(nn_model([feat1], inputs=None)[0])
    ref_nn = jnp.repeat(jnp.repeat(feat1, 2, axis=2), 2, axis=3)
    assert jnp.max(jnp.abs(out_nn - ref_nn)) < 1e-5

    print("KERNEL_OK")
</pallas_src>

<mosaic_0001>
module attributes {stable_mosaic.version = 11 : i64} {
  func.func @_kron_kernel(%arg0: i32, %arg1: memref<256x1024xf32, #tpu.memory_space<vmem>>, %arg2: memref<8x256xf32, #tpu.memory_space<vmem>>, %arg3: memref<8x1024xf32, #tpu.memory_space<vmem>>) attributes {dimension_semantics = [#tpu.dimension_semantics<parallel>], iteration_bounds = array<i64: 1>, scalar_prefetch = 0 : i64, scratch_operands = 0 : i64, tpu.core_type = #tpu.core_type<tc>, window_params = [{pipeline_mode = #tpu.pipeline_mode<synchronous>, transform_indices = @transform_0, window_bounds = array<i64: 256, 1024>}, {transform_indices = @transform_1, window_bounds = array<i64: 8, 256>}, {transform_indices = @transform_2, window_bounds = array<i64: 8, 1024>}]} {
    %c0 = arith.constant 0 : index
    %c0_0 = arith.constant 0 : index
    %0 = vector.load %arg2[%c0, %c0_0] : memref<8x256xf32, #tpu.memory_space<vmem>>, vector<8x256xf32>
    %c0_1 = arith.constant 0 : index
    %c0_2 = arith.constant 0 : index
    %1 = vector.load %arg1[%c0_1, %c0_2] : memref<256x1024xf32, #tpu.memory_space<vmem>>, vector<256x1024xf32>
    %cst = arith.constant dense<0.000000e+00> : vector<8x1024xf32>
    %2 = tpu.matmul %0, %1, %cst {dimension_numbers = #tpu.dot_dimension_numbers<[1], [0], [0], [1], [0, 0, 1, 1], [], []>, precision = #tpu.contract_precision<fp32>} : vector<8x256xf32>, vector<256x1024xf32>, vector<8x1024xf32> -> vector<8x1024xf32>
    %c0_3 = arith.constant 0 : index
    %c0_4 = arith.constant 0 : index
    %3 = vector.load %arg3[%c0_3, %c0_4] : memref<8x1024xf32, #tpu.memory_space<vmem>>, vector<8x1024xf32>
    tpu.vector_store %arg3[%c0_3, %c0_4], %2 {strides = array<i32>} : memref<8x1024xf32, #tpu.memory_space<vmem>>, vector<8x1024xf32>,
    return
  }
  func.func @transform_0(%arg0: i32) -> (i32, i32) {
    %c0_i32 = arith.constant 0 : i32
    %c0_i32_0 = arith.constant 0 : i32
    %c0_i32_1 = arith.constant 0 : i32
    return %c0_i32, %c0_i32_0 : i32, i32
  }
  func.func @transform_1(%arg0: i32) -> (i32, i32) {
    %c0_i32 = arith.constant 0 : i32
    %c0_i32_0 = arith.constant 0 : i32
    return %arg0, %c0_i32 : i32, i32
  }
  func.func @transform_2(%arg0: i32) -> (i32, i32) {
    %c0_i32 = arith.constant 0 : i32
    %c0_i32_0 = arith.constant 0 : i32
    return %arg0, %c0_i32 : i32, i32
  }
}

</mosaic_0001>

<llo_original>
// kernel: upsample_one.1
$region0: #{upsample_one.1}
  #allocation0 [shape = 'u32[]', space=smem, size = 0x4, offset = 0x4, fixed_abs, tag = 'smem constant byte address 0x4 - core index']
  #allocation1 [shape = 'u32[72,128]{1,0:T(1,128)}', space=vmem, size = 0x9000, scoped, tag = 'internal scratch']
  %s0 = inlined_call_operand.hbm [shape: f32[256,1024], index: 0, kind: input, shape index: {}]
  %s1 = inlined_call_operand.vmem [shape: f32[8,256], index: 1, kind: input, shape index: {}]
  %s2 = inlined_call_operand.vmem [shape: f32[8,1024], index: 2, kind: output, shape index: {}]
  %s3 = sld [smem:[#allocation0]]
  $region22: #{upsample_one.1} parent=0
    _
  %s5 = ssub.s32 1, %s3
  %s6 = scalar_select 0, %s5, %s3
  $region1: #{upsample_one.1} parent=0
    #allocation2 [shape = 'u8[1048576]{0}', space=vmem, size = 0x100000, scoped, tag = 'input window, operand 0, single buffered']
    #allocation3 [shape = 's32[1]{0}', space=sflag, size = 0x4, scoped, tag = 'scoped memory for upsample_one.1']
    %7 = vsyncpa [#allocation3], 0
    // Predicated region
    $region2: #{upsample_one.1} parent=1 // pred_check
      _
    $region3: #{upsample_one.1} parent=1 // pred_check_branch
      %9 = sbr.rel (0) target = $region5
    $region4: #{upsample_one.1} parent=1 // pred_region
      %11 = vsyncadd [#allocation3], 0
      %s12 = sshll.u32 %s0, 4
      %s13 = int_to_ptr.hbm [resolvable:$true] %s12
      %s14 = sshll.u32 [#allocation2], 4
      %s15 = int_to_ptr.vmem [resolvable:$true] %s14
      %20 = dma.hbm_to_vmem [thread:$0]  %s13, 32768, %s15, [#allocation3], 1024, 1024, 64
    $region5: #{upsample_one.1} parent=1 // pred_fallthru
      _
    // Predicated region
    $region6: #{upsample_one.1} parent=1 // pred_check
      _
    $region7: #{upsample_one.1} parent=1 // pred_check_branch
      %22 = sbr.rel (0) target = $region9
    $region8: #{upsample_one.1} parent=1 // pred_region
      _
    $region9: #{upsample_one.1} parent=1 // pred_fallthru
      _
    // Predicated region
    $region10: #{upsample_one.1} parent=1 // pred_check
      _
    $region11: #{upsample_one.1} parent=1 // pred_check_branch
      %24 = sbr.rel (0) target = $region13
    $region12: #{upsample_one.1} parent=1 // pred_region
      %26 = dma.done [#allocation3], 32768
    $region13: #{upsample_one.1} parent=1 // pred_fallthru
      _
    %v27 = vld [vmem:[%s1] sm:$0xff]
    %v28 = vld [vmem:[%s1 + $0x8] sm:$0xff]
    %v29 = vld [vmem:[#allocation2] sm:$0xff]
    %v30 = vld [vmem:[#allocation2 + $0x8] sm:$0xff]
    %v31 = vld [vmem:[#allocation2 + $0x10] sm:$0xff]
    %v32 = vld [vmem:[#allocation2 + $0x18] sm:$0xff]
    %v33 = vld [vmem:[#allocation2 + $0x20] sm:$0xff]
    %v34 = vld [vmem:[#allocation2 + $0x28] sm:$0xff]
    %v35 = vld [vmem:[#allocation2 + $0x30] sm:$0xff]
    %v36 = vld [vmem:[#allocation2 + $0x38] sm:$0xff]
    %v37 = vld [vmem:[#allocation2 + $0x40] sm:$0xff]
    %v38 = vld [vmem:[#allocation2 + $0x48] sm:$0xff]
    %v39 = vld [vmem:[#allocation2 + $0x50] sm:$0xff]
    %v40 = vld [vmem:[#allocation2 + $0x58] sm:$0xff]
    %v41 = vld [vmem:[#allocation2 + $0x60] sm:$0xff]
    %v42 = vld [vmem:[#allocation2 + $0x68] sm:$0xff]
    %v43 = vld [vmem:[#allocation2 + $0x70] sm:$0xff]
    %v44 = vld [vmem:[#allocation2 + $0x78] sm:$0xff]
    %v45 = vld [vmem:[#allocation2 + $0x80] sm:$0xff]
    %v46 = vld [vmem:[#allocation2 + $0x88] sm:$0xff]
    %v47 = vld [vmem:[#allocation2 + $0x90] sm:$0xff]
    %v48 = vld [vmem:[#allocation2 + $0x98] sm:$0xff]
    %v49 = vld [vmem:[#allocation2 + $0xa0] sm:$0xff]
    %v50 = vld [vmem:[#allocation2 + $0xa8] sm:$0xff]
    %v51 = vld [vmem:[#allocation2 + $0xb0] sm:$0xff]
    %v52 = vld [vmem:[#allocation2 + $0xb8] sm:$0xff]
    %v53 = vld [vmem:[#allocation2 + $0xc0] sm:$0xff]
    %v54 = vld [vmem:[#allocation2 + $0xc8] sm:$0xff]
    %v55 = vld [vmem:[#allocation2 + $0xd0] sm:$0xff]
    %v56 = vld [vmem:[#allocation2 + $0xd8] sm:$0xff]
    %v57 = vld [vmem:[#allocation2 + $0xe0] sm:$0xff]
    %v58 = vld [vmem:[#allocation2 + $0xe8] sm:$0xff]
    %v59 = vld [vmem:[#allocation2 + $0xf0] sm:$0xff]
    %v60 = vld [vmem:[#allocation2 + $0xf8] sm:$0xff]
    %v61 = vld [vmem:[#allocation2 + $0x100] sm:$0xff]
    %v62 = vld [vmem:[#allocation2 + $0x108] sm:$0xff]
    %v63 = vld [vmem:[#allocation2 + $0x110] sm:$0xff]
    %v64 = vld [vmem:[#allocation2 + $0x118] sm:$0xff]
    %v65 = vld [vmem:[#allocation2 + $0x120] sm:$0xff]
    %v66 = vld [vmem:[#allocation2 + $0x128] sm:$0xff]
    %v67 = vld [vmem:[#allocation2 + $0x130] sm:$0xff]
    %v68 = vld [vmem:[#allocation2 + $0x138] sm:$0xff]
    %v69 = vld [vmem:[#allocation2 + $0x140] sm:$0xff]
    %v70 = vld [vmem:[#allocation2 + $0x148] sm:$0xff]
    %v71 = vld [vmem:[#allocation2 + $0x150] sm:$0xff]
    %v72 = vld [vmem:[#allocation2 + $0x158] sm:$0xff]
    %v73 = vld [vmem:[#allocation2 + $0x160] sm:$0xff]
    %v74 = vld [vmem:[#allocation2 + $0x168] sm:$0xff]
    %v75 = vld [vmem:[#allocation2 + $0x170] sm:$0xff]
    %v76 = vld [vmem:[#allocation2 + $0x178] sm:$0xff]
    %v77 = vld [vmem:[#allocation2 + $0x180] sm:$0xff]
    %v78 = vld [vmem:[#allocation2 + $0x188] sm:$0xff]
    %v79 = vld [vmem:[#allocation2 + $0x190] sm:$0xff]
    %v80 = vld [vmem:[#allocation2 + $0x198] sm:$0xff]
    %v81 = vld [vmem:[#allocation2 + $0x1a0] sm:$0xff]
    %v82 = vld [vmem:[#allocation2 + $0x1a8] sm:$0xff]
    %v83 = vld [vmem:[#allocation2 + $0x1b0] sm:$0xff]
    %v84 = vld [vmem:[#allocation2 + $0x1b8] sm:$0xff]
    %v85 = vld [vmem:[#allocation2 + $0x1c0] sm:$0xff]
    %v86 = vld [vmem:[#allocation2 + $0x1c8] sm:$0xff]
    %v87 = vld [vmem:[#allocation2 + $0x1d0] sm:$0xff]
    %v88 = vld [vmem:[#allocation2 + $0x1d8] sm:$0xff]
    %v89 = vld [vmem:[#allocation2 + $0x1e0] sm:$0xff]
    %v90 = vld [vmem:[#allocation2 + $0x1e8] sm:$0xff]
    %v91 = vld [vmem:[#allocation2 + $0x1f0] sm:$0xff]
    %v92 = vld [vmem:[#allocation2 + $0x1f8] sm:$0xff]
    %v93 = vld [vmem:[#allocation2 + $0x200] sm:$0xff]
    %v94 = vld [vmem:[#allocation2 + $0x208] sm:$0xff]
    %v95 = vld [vmem:[#allocation2 + $0x210] sm:$0xff]
    %v96 = vld [vmem:[#allocation2 + $0x218] sm:$0xff]
    %v97 = vld [vmem:[#allocation2 + $0x220] sm:$0xff]
    %v98 = vld [vmem:[#allocation2 + $0x228] sm:$0xff]
    %v99 = vld [vmem:[#allocation2 + $0x230] sm:$0xff]
    %v100 = vld [vmem:[#allocation2 + $0x238] sm:$0xff]
    %v101 = vld [vmem:[#allocation2 + $0x240] sm:$0xff]
    %v102 = vld [vmem:[#allocation2 + $0x248] sm:$0xff]
    %v103 = vld [vmem:[#allocation2 + $0x250] sm:$0xff]
    %v104 = vld [vmem:[#allocation2 + $0x258] sm:$0xff]
    %v105 = vld [vmem:[#allocation2 + $0x260] sm:$0xff]
    %v106 = vld [vmem:[#allocation2 + $0x268] sm:$0xff]
    %v107 = vld [vmem:[#allocation2 + $0x270] sm:$0xff]
    %v108 = vld [vmem:[#allocation2 + $0x278] sm:$0xff]
    %v109 = vld [vmem:[#allocation2 + $0x280] sm:$0xff]
    %v110 = vld [vmem:[#allocation2 + $0x288] sm:$0xff]
    %v111 = vld [vmem:[#allocation2 + $0x290] sm:$0xff]
    %v112 = vld [vmem:[#allocation2 + $0x298] sm:$0xff]
    %v113 = vld [vmem:[#allocation2 + $0x2a0] sm:$0xff]
    %v114 = vld [vmem:[#allocation2 + $0x2a8] sm:$0xff]
    %v115 = vld [vmem:[#allocation2 + $0x2b0] sm:$0xff]
    %v116 = vld [vmem:[#allocation2 + $0x2b8] sm:$0xff]
    %v117 = vld [vmem:[#allocation2 + $0x2c0] sm:$0xff]
    %v118 = vld [vmem:[#allocation2 + $0x2c8] sm:$0xff]
    %v119 = vld [vmem:[#allocation2 + $0x2d0] sm:$0xff]
    %v120 = vld [vmem:[#allocation2 + $0x2d8] sm:$0xff]
    %v121 = vld [vmem:[#allocation2 + $0x2e0] sm:$0xff]
    %v122 = vld [vmem:[#allocation2 + $0x2e8] sm:$0xff]
    %v123 = vld [vmem:[#allocation2 + $0x2f0] sm:$0xff]
    %v124 = vld [vmem:[#allocation2 + $0x2f8] sm:$0xff]
    %v125 = vld [vmem:[#allocation2 + $0x300] sm:$0xff]
    %v126 = vld [vmem:[#allocation2 + $0x308] sm:$0xff]
    %v127 = vld [vmem:[#allocation2 + $0x310] sm:$0xff]
    %v128 = vld [vmem:[#allocation2 + $0x318] sm:$0xff]
    %v129 = vld [vmem:[#allocation2 + $0x320] sm:$0xff]
    %v130 = vld [vmem:[#allocation2 + $0x328] sm:$0xff]
    %v131 = vld [vmem:[#allocation2 + $0x330] sm:$0xff]
    %v132 = vld [vmem:[#allocation2 + $0x338] sm:$0xff]
    %v133 = vld [vmem:[#allocation2 + $0x340] sm:$0xff]
    %v134 = vld [vmem:[#allocation2 + $0x348] sm:$0xff]
    %v135 = vld [vmem:[#allocation2 + $0x350] sm:$0xff]
    %v136 = vld [vmem:[#allocation2 + $0x358] sm:$0xff]
    %v137 = vld [vmem:[#allocation2 + $0x360] sm:$0xff]
    %v138 = vld [vmem:[#allocation2 + $0x368] sm:$0xff]
    %v139 = vld [vmem:[#allocation2 + $0x370] sm:$0xff]
    %v140 = vld [vmem:[#allocation2 + $0x378] sm:$0xff]
    %v141 = vld [vmem:[#allocation2 + $0x380] sm:$0xff]
    %v142 = vld [vmem:[#allocation2 + $0x388] sm:$0xff]
    %v143 = vld [vmem:[#allocation2 + $0x390] sm:$0xff]
    %v144 = vld [vmem:[#allocation2 + $0x398] sm:$0xff]
    %v145 = vld [vmem:[#allocation2 + $0x3a0] sm:$0xff]
    %v146 = vld [vmem:[#allocation2 + $0x3a8] sm:$0xff]
    %v147 = vld [vmem:[#allocation2 + $0x3b0] sm:$0xff]
    %v148 = vld [vmem:[#allocation2 + $0x3b8] sm:$0xff]
    %v149 = vld [vmem:[#allocation2 + $0x3c0] sm:$0xff]
    %v150 = vld [vmem:[#allocation2 + $0x3c8] sm:$0xff]
    %v151 = vld [vmem:[#allocation2 + $0x3d0] sm:$0xff]
    %v152 = vld [vmem:[#allocation2 + $0x3d8] sm:$0xff]
    %v153 = vld [vmem:[#allocation2 + $0x3e0] sm:$0xff]
    %v154 = vld [vmem:[#allocation2 + $0x3e8] sm:$0xff]
    %v155 = vld [vmem:[#allocation2 + $0x3f0] sm:$0xff]
    %v156 = vld [vmem:[#allocation2 + $0x3f8] sm:$0xff]
    %v157 = vld [vmem:[#allocation2 + $0x400] sm:$0xff]
    %v158 = vld [vmem:[#allocation2 + $0x408] sm:$0xff]
    %v159 = vld [vmem:[#allocation2 + $0x410] sm:$0xff]
    %v160 = vld [vmem:[#allocation2 + $0x418] sm:$0xff]
    %v161 = vld [vmem:[#allocation2 + $0x420] sm:$0xff]
    %v162 = vld [vmem:[#allocation2 + $0x428] sm:$0xff]
    %v163 = vld [vmem:[#allocation2 + $0x430] sm:$0xff]
    %v164 = vld [vmem:[#allocation2 + $0x438] sm:$0xff]
    %v165 = vld [vmem:[#allocation2 + $0x440] sm:$0xff]
    %v166 = vld [vmem:[#allocation2 + $0x448] sm:$0xff]
    %v167 = vld [vmem:[#allocation2 + $0x450] sm:$0xff]
    %v168 = vld [vmem:[#allocation2 + $0x458] sm:$0xff]
    %v169 = vld [vmem:[#allocation2 + $0x460] sm:$0xff]
    %v170 = vld [vmem:[#allocation2 + $0x468] sm:$0xff]
    %v171 = vld [vmem:[#allocation2 + $0x470] sm:$0xff]
    %v172 = vld [vmem:[#allocation2 + $0x478] sm:$0xff]
    %v173 = vld [vmem:[#allocation2 + $0x480] sm:$0xff]
    %v174 = vld [vmem:[#allocation2 + $0x488] sm:$0xff]
    %v175 = vld [vmem:[#allocation2 + $0x490] sm:$0xff]
    %v176 = vld [vmem:[#allocation2 + $0x498] sm:$0xff]
    %v177 = vld [vmem:[#allocation2 + $0x4a0] sm:$0xff]
    %v178 = vld [vmem:[#allocation2 + $0x4a8] sm:$0xff]
    %v179 = vld [vmem:[#allocation2 + $0x4b0] sm:$0xff]
    %v180 = vld [vmem:[#allocation2 + $0x4b8] sm:$0xff]
    %v181 = vld [vmem:[#allocation2 + $0x4c0] sm:$0xff]
    %v182 = vld [vmem:[#allocation2 + $0x4c8] sm:$0xff]
    %v183 = vld [vmem:[#allocation2 + $0x4d0] sm:$0xff]
    %v184 = vld [vmem:[#allocation2 + $0x4d8] sm:$0xff]
    %v185 = vld [vmem:[#allocation2 + $0x4e0] sm:$0xff]
    %v186 = vld [vmem:[#allocation2 + $0x4e8] sm:$0xff]
    %v187 = vld [vmem:[#allocation2 + $0x4f0] sm:$0xff]
    %v188 = vld [vmem:[#allocation2 + $0x4f8] sm:$0xff]
    %v189 = vld [vmem:[#allocation2 + $0x500] sm:$0xff]
    %v190 = vld [vmem:[#allocation2 + $0x508] sm:$0xff]
    %v191 = vld [vmem:[#allocation2 + $0x510] sm:$0xff]
    %v192 = vld [vmem:[#allocation2 + $0x518] sm:$0xff]
    %v193 = vld [vmem:[#allocation2 + $0x520] sm:$0xff]
    %v194 = vld [vmem:[#allocation2 + $0x528] sm:$0xff]
    %v195 = vld [vmem:[#allocation2 + $0x530] sm:$0xff]
    %v196 = vld [vmem:[#allocation2 + $0x538] sm:$0xff]
    %v197 = vld [vmem:[#allocation2 + $0x540] sm:$0xff]
    %v198 = vld [vmem:[#allocation2 + $0x548] sm:$0xff]
    %v199 = vld [vmem:[#allocation2 + $0x550] sm:$0xff]
    %v200 = vld [vmem:[#allocation2 + $0x558] sm:$0xff]
    %v201 = vld [vmem:[#allocation2 + $0x560] sm:$0xff]
    %v202 = vld [vmem:[#allocation2 + $0x568] sm:$0xff]
    %v203 = vld [vmem:[#allocation2 + $0x570] sm:$0xff]
    %v204 = vld [vmem:[#allocation2 + $0x578] sm:$0xff]
    %v205 = vld [vmem:[#allocation2 + $0x580] sm:$0xff]
    %v206 = vld [vmem:[#allocation2 + $0x588] sm:$0xff]
    %v207 = vld [vmem:[#allocation2 + $0x590] sm:$0xff]
    %v208 = vld [vmem:[#allocation2 + $0x598] sm:$0xff]
    %v209 = vld [vmem:[#allocation2 + $0x5a0] sm:$0xff]
    %v210 = vld [vmem:[#allocation2 + $0x5a8] sm:$0xff]
    %v211 = vld [vmem:[#allocation2 + $0x5b0] sm:$0xff]
    %v212 = vld [vmem:[#allocation2 + $0x5b8] sm:$0xff]
    %v213 = vld [vmem:[#allocation2 + $0x5c0] sm:$0xff]
    %v214 = vld [vmem:[#allocation2 + $0x5c8] sm:$0xff]
    %v215 = vld [vmem:[#allocation2 + $0x5d0] sm:$0xff]
    %v216 = vld [vmem:[#allocation2 + $0x5d8] sm:$0xff]
    %v217 = vld [vmem:[#allocation2 + $0x5e0] sm:$0xff]
    %v218 = vld [vmem:[#allocation2 + $0x5e8] sm:$0xff]
    %v219 = vld [vmem:[#allocation2 + $0x5f0] sm:$0xff]
    %v220 = vld [vmem:[#allocation2 + $0x5f8] sm:$0xff]
    %v221 = vld [vmem:[#allocation2 + $0x600] sm:$0xff]
    %v222 = vld [vmem:[#allocation2 + $0x608] sm:$0xff]
    %v223 = vld [vmem:[#allocation2 + $0x610] sm:$0xff]
    %v224 = vld [vmem:[#allocation2 + $0x618] sm:$0xff]
    %v225 = vld [vmem:[#allocation2 + $0x620] sm:$0xff]
    %v226 = vld [vmem:[#allocation2 + $0x628] sm:$0xff]
    %v227 = vld [vmem:[#allocation2 + $0x630] sm:$0xff]
    %v228 = vld [vmem:[#allocation2 + $0x638] sm:$0xff]
    %v229 = vld [vmem:[#allocation2 + $0x640] sm:$0xff]
    %v230 = vld [vmem:[#allocation2 + $0x648] sm:$0xff]
    %v231 = vld [vmem:[#allocation2 + $0x650] sm:$0xff]
    %v232 = vld [vmem:[#allocation2 + $0x658] sm:$0xff]
    %v233 = vld [vmem:[#allocation2 + $0x660] sm:$0xff]
    %v234 = vld [vmem:[#allocation2 + $0x668] sm:$0xff]
    %v235 = vld [vmem:[#allocation2 + $0x670] sm:$0xff]
    %v236 = vld [vmem:[#allocation2 + $0x678] sm:$0xff]
    %v237 = vld [vmem:[#allocation2 + $0x680] sm:$0xff]
    %v238 = vld [vmem:[#allocation2 + $0x688] sm:$0xff]
    %v239 = vld [vmem:[#allocation2 + $0x690] sm:$0xff]
    %v240 = vld [vmem:[#allocation2 + $0x698] sm:$0xff]
    %v241 = vld [vmem:[#allocation2 + $0x6a0] sm:$0xff]
    %v242 = vld [vmem:[#allocation2 + $0x6a8] sm:$0xff]
    %v243 = vld [vmem:[#allocation2 + $0x6b0] sm:$0xff]
    %v244 = vld [vmem:[#allocation2 + $0x6b8] sm:$0xff]
    %v245 = vld [vmem:[#allocation2 + $0x6c0] sm:$0xff]
    %v246 = vld [vmem:[#allocation2 + $0x6c8] sm:$0xff]
    %v247 = vld [vmem:[#allocation2 + $0x6d0] sm:$0xff]
    %v248 = vld [vmem:[#allocation2 + $0x6d8] sm:$0xff]
    %v249 = vld [vmem:[#allocation2 + $0x6e0] sm:$0xff]
    %v250 = vld [vmem:[#allocation2 + $0x6e8] sm:$0xff]
    %v251 = vld [vmem:[#allocation2 + $0x6f0] sm:$0xff]
    %v252 = vld [vmem:[#allocation2 + $0x6f8] sm:$0xff]
    %v253 = vld [vmem:[#allocation2 + $0x700] sm:$0xff]
    %v254 = vld [vmem:[#allocation2 + $0x708] sm:$0xff]
    %v255 = vld [vmem:[#allocation2 + $0x710] sm:$0xff]
    %v256 = vld [vmem:[#allocation2 + $0x718] sm:$0xff]
    %v257 = vld [vmem:[#allocation2 + $0x720] sm:$0xff]
    %v258 = vld [vmem:[#allocation2 + $0x728] sm:$0xff]
    %v259 = vld [vmem:[#allocation2 + $0x730] sm:$0xff]
    %v260 = vld [vmem:[#allocation2 + $0x738] sm:$0xff]
    %v261 = vld [vmem:[#allocation2 + $0x740] sm:$0xff]
    %v262 = vld [vmem:[#allocation2 + $0x748] sm:$0xff]
    %v263 = vld [vmem:[#allocation2 + $0x750] sm:$0xff]
    %v264 = vld [vmem:[#allocation2 + $0x758] sm:$0xff]
    %v265 = vld [vmem:[#allocation2 + $0x760] sm:$0xff]
    %v266 = vld [vmem:[#allocation2 + $0x768] sm:$0xff]
    %v267 = vld [vmem:[#allocation2 + $0x770] sm:$0xff]
    %v268 = vld [vmem:[#allocation2 + $0x778] sm:$0xff]
    %v269 = vld [vmem:[#allocation2 + $0x780] sm:$0xff]
    %v270 = vld [vmem:[#allocation2 + $0x788] sm:$0xff]
    %v271 = vld [vmem:[#allocation2 + $0x790] sm:$0xff]
    %v272 = vld [vmem:[#allocation2 + $0x798] sm:$0xff]
    %v273 = vld [vmem:[#allocation2 + $0x7a0] sm:$0xff]
    %v274 = vld [vmem:[#allocation2 + $0x7a8] sm:$0xff]
    %v275 = vld [vmem:[#allocation2 + $0x7b0] sm:$0xff]
    %v276 = vld [vmem:[#allocation2 + $0x7b8] sm:$0xff]
    %v277 = vld [vmem:[#allocation2 + $0x7c0] sm:$0xff]
    %v278 = vld [vmem:[#allocation2 + $0x7c8] sm:$0xff]
    %v279 = vld [vmem:[#allocation2 + $0x7d0] sm:$0xff]
    %v280 = vld [vmem:[#allocation2 + $0x7d8] sm:$0xff]
    %v281 = vld [vmem:[#allocation2 + $0x7e0] sm:$0xff]
    %v282 = vld [vmem:[#allocation2 + $0x7e8] sm:$0xff]
    %v283 = vld [vmem:[#allocation2 + $0x7f0] sm:$0xff]
    %v284 = vld [vmem:[#allocation2 + $0x7f8] sm:$0xff]
    %v285 = vand.u32 %v149, 4294901760
    %286 = vmatpush.msra.mxu0 %v285
    %v287 = vand.u32 %v141, 4294901760
    %288 = vmatpush.msra.mxu0 %v287
    %v289 = vand.u32 %v133, 4294901760
    %290 = vmatpush.msra.mxu0 %v289
    %v291 = vand.u32 %v125, 4294901760
    %292 = vmatpush.msra.mxu0 %v291
    %v293 = vand.u32 %v117, 4294901760
    %294 = vmatpush.msra.mxu0 %v293
    %v295 = vand.u32 %v109, 4294901760
    %296 = vmatpush.msra.mxu0 %v295
    %v297 = vand.u32 %v101, 4294901760
    %298 = vmatpush.msra.mxu0 %v297
    %v299 = vand.u32 %v93, 4294901760
    %300 = vmatpush.msra.mxu0 %v299
    %v301 = vand.u32 %v85, 4294901760
    %302 = vmatpush.msra.mxu0 %v301
    %v303 = vand.u32 %v77, 4294901760
    %304 = vmatpush.msra.mxu0 %v303
    %v305 = vand.u32 %v69, 4294901760
    %306 = vmatpush.msra.mxu0 %v305
    %v307 = vand.u32 %v61, 4294901760
    %308 = vmatpush.msra.mxu0 %v307
    %v309 = vand.u32 %v53, 4294901760
    %310 = vmatpush.msra.mxu0 %v309
    %v311 = vand.u32 %v45, 4294901760
    %312 = vmatpush.msra.mxu0 %v311
    %v313 = vand.u32 %v37, 4294901760
    %314 = vmatpush.msra.mxu0 %v313
    %v315 = vand.u32 %v29, 4294901760
    %316 = vmatpush.msra.mxu0 %v315
    %v317 = vand.u32 %v27, 4294901760
    %v318 = vsub.f32 %v27, %v317
    %v319 = vand.u32 %v318, 4294901760
    %v320 = vsub.f32 %v318, %v319
    %v321 = vand.u32 %v320, 4294901760
    %322 = vmatmul.f32.gmra.mxu0 %v321
    %v323 = vpop.f32.mrf.mxu0
    %v324 = vadd.f32 0.0, %v323
    %325 = vdwg.mxu0
    %v326 = vand.u32 %v149, 4294901760
    %v327 = vsub.f32 %v149, %v326
    %v328 = vand.u32 %v327, 4294901760
    %v329 = vsub.f32 %v327, %v328
    %v330 = vand.u32 %v329, 4294901760
    %331 = vmatpush.msra.mxu0 %v330
    %v332 = vand.u32 %v141, 4294901760
    %v333 = vsub.f32 %v141, %v332
    %v334 = vand.u32 %v333, 4294901760
    %v335 = vsub.f32 %v333, %v334
    %v336 = vand.u32 %v335, 4294901760
    %337 = vmatpush.msra.mxu0 %v336
    %v338 = vand.u32 %v133, 4294901760
    %v339 = vsub.f32 %v133, %v338
    %v340 = vand.u32 %v339, 4294901760
    %v341 = vsub.f32 %v339, %v340
    %v342 = vand.u32 %v341, 4294901760
    %343 = vmatpush.msra.mxu0 %v342
    %v344 = vand.u32 %v125, 4294901760
    %v345 = vsub.f32 %v125, %v344
    %v346 = vand.u32 %v345, 4294901760
    %v347 = vsub.f32 %v345, %v346
    %v348 = vand.u32 %v347, 4294901760
    %349 = vmatpush.msra.mxu0 %v348
    %v350 = vand.u32 %v117, 4294901760
    %v351 = vsub.f32 %v117, %v350
    %v352 = vand.u32 %v351, 4294901760
    %v353 = vsub.f32 %v351, %v352
    %v354 = vand.u32 %v353, 4294901760
    %355 = vmatpush.msra.mxu0 %v354
    %v356 = vand.u32 %v109, 4294901760
    %v357 = vsub.f32 %v109, %v356
    %v358 = vand.u32 %v357, 4294901760
    %v359 = vsub.f32 %v357, %v358
    %v360 = vand.u32 %v359, 4294901760
    %361 = vmatpush.msra.mxu0 %v360
    %v362 = vand.u32 %v101, 4294901760
    %v363 = vsub.f32 %v101, %v362
    %v364 = vand.u32 %v363, 4294901760
    %v365 = vsub.f32 %v363, %v364
    %v366 = vand.u32 %v365, 4294901760
    %367 = vmatpush.msra.mxu0 %v366
    %v368 = vand.u32 %v93, 4294901760
    %v369 = vsub.f32 %v93, %v368
    %v370 = vand.u32 %v369, 4294901760
    %v371 = vsub.f32 %v369, %v370
    %v372 = vand.u32 %v371, 4294901760
    %373 = vmatpush.msra.mxu0 %v372
    %v374 = vand.u32 %v85, 4294901760
    %v375 = vsub.f32 %v85, %v374
    %v376 = vand.u32 %v375, 4294901760
    %v377 = vsub.f32 %v375, %v376
    %v378 = vand.u32 %v377, 4294901760
    %379 = vmatpush.msra.mxu0 %v378
    %v380 = vand.u32 %v77, 4294901760
    %v381 = vsub.f32 %v77, %v380
    %v382 = vand.u32 %v381, 4294901760
    %v383 = vsub.f32 %v381, %v382
    %v384 = vand.u32 %v383, 4294901760
    %385 = vmatpush.msra.mxu0 %v384
    %v386 = vand.u32 %v69, 4294901760
    %v387 = vsub.f32 %v69, %v386
    %v388 = vand.u32 %v387, 4294901760
    %v389 = vsub.f32 %v387, %v388
    %v390 = vand.u32 %v389, 4294901760
    %391 = vmatpush.msra.mxu0 %v390
    %v392 = vand.u32 %v61, 4294901760
    %v393 = vsub.f32 %v61, %v392
    %v394 = vand.u32 %v393, 4294901760
    %v395 = vsub.f32 %v393, %v394
    %v396 = vand.u32 %v395, 4294901760
    %397 = vmatpush.msra.mxu0 %v396
    %v398 = vand.u32 %v53, 4294901760
    %v399 = vsub.f32 %v53, %v398
    %v400 = vand.u32 %v399, 4294901760
    %v401 = vsub.f32 %v399, %v400
    %v402 = vand.u32 %v401, 4294901760
    %403 = vmatpush.msra.mxu0 %v402
    %v404 = vand.u32 %v45, 4294901760
    %v405 = vsub.f32 %v45, %v404
    %v406 = vand.u32 %v405, 4294901760
    %v407 = vsub.f32 %v405, %v406
    %v408 = vand.u32 %v407, 4294901760
    %409 = vmatpush.msra.mxu0 %v408
    %v410 = vand.u32 %v37, 4294901760
    %v411 = vsub.f32 %v37, %v410
    %v412 = vand.u32 %v411, 4294901760
    %v413 = vsub.f32 %v411, %v412
    %v414 = vand.u32 %v413, 4294901760
    %415 = vmatpush.msra.mxu0 %v414
    %v416 = vand.u32 %v29, 4294901760
    %v417 = vsub.f32 %v29, %v416
    %v418 = vand.u32 %v417, 4294901760
    %v419 = vsub.f32 %v417, %v418
    %v420 = vand.u32 %v419, 4294901760
    %421 = vmatpush.msra.mxu0 %v420
    %v422 = vand.u32 %v27, 4294901760
    %423 = vmatmul.f32.gmra.mxu0 %v422
    %v424 = vpop.f32.mrf.mxu0
    %v425 = vadd.f32 %v324, %v424
    %426 = vdwg.mxu0
    %v427 = vand.u32 %v149, 4294901760
    %v428 = vsub.f32 %v149, %v427
    %429 = vmatpush.msra.mxu0 %v428
    %v430 = vand.u32 %v141, 4294901760
    %v431 = vsub.f32 %v141, %v430
    %432 = vmatpush.msra.mxu0 %v431
    %v433 = vand.u32 %v133, 4294901760
    %v434 = vsub.f32 %v133, %v433
    %435 = vmatpush.msra.mxu0 %v434
    %v436 = vand.u32 %v125, 4294901760
    %v437 = vsub.f32 %v125, %v436
    %438 = vmatpush.msra.mxu0 %v437
    %v439 = vand.u32 %v117, 4294901760
    %v440 = vsub.f32 %v117, %v439
    %441 = vmatpush.msra.mxu0 %v440
    %v442 = vand.u32 %v109, 4294901760
    %v443 = vsub.f32 %v109, %v442
    %444 = vmatpush.msra.mxu0 %v443
    %v445 = vand.u32 %v101, 4294901760
    %v446 = vsub.f32 %v101, %v445
    %447 = vmatpush.msra.mxu0 %v446
    %v448 = vand.u32 %v93, 4294901760
    %v449 = vsub.f32 %v93, %v448
    %450 = vmatpush.msra.mxu0 %v449
    %v451 = vand.u32 %v85, 4294901760
    %v452 = vsub.f32 %v85, %v451
    %453 = vmatpush.msra.mxu0 %v452
    %v454 = vand.u32 %v77, 4294901760
    %v455 = vsub.f32 %v77, %v454
    %456 = vmatpush.msra.mxu0 %v455
    %v457 = vand.u32 %v69, 4294901760
    %v458 = vsub.f32 %v69, %v457
    %459 = vmatpush.msra.mxu0 %v458
    %v460 = vand.u32 %v61, 4294901760
    %v461 = vsub.f32 %v61, %v460
    %462 = vmatpush.msra.mxu0 %v461
    %v463 = vand.u32 %v53, 4294901760
    %v464 = vsub.f32 %v53, %v463
    %465 = vmatpush.msra.mxu0 %v464
    %v466 = vand.u32 %v45, 4294901760
    %v467 = vsub.f32 %v45, %v466
    %468 = vmatpush.msra.mxu0 %v467
    %v469 = vand.u32 %v37, 4294901760
    %v470 = vsub.f32 %v37, %v469
    %471 = vmatpush.msra.mxu0 %v470
    %v472 = vand.u32 %v29, 4294901760
    %v473 = vsub.f32 %v29, %v472
    %474 = vmatpush.msra.mxu0 %v473
    %v475 = vand.u32 %v27, 4294901760
    %v476 = vsub.f32 %v27, %v475
    %477 = vmatmul.f32.gmra.mxu0 %v476
    %v478 = vpop.f32.mrf.mxu0
    %v479 = vadd.f32 %v425, %v478
    %480 = vdwg.mxu0
    %v481 = vand.u32 %v149, 4294901760
    %482 = vmatpush.msra.mxu0 %v481
    %v483 = vand.u32 %v141, 4294901760
    %484 = vmatpush.msra.mxu0 %v483
    %v485 = vand.u32 %v133, 4294901760
    %486 = vmatpush.msra.mxu0 %v485
    %v487 = vand.u32 %v125, 4294901760
    %488 = vmatpush.msra.mxu0 %v487
    %v489 = vand.u32 %v117, 4294901760
    %490 = vmatpush.msra.mxu0 %v489
    %v491 = vand.u32 %v109, 4294901760
    %492 = vmatpush.msra.mxu0 %v491
    %v493 = vand.u32 %v101, 4294901760
    %494 = vmatpush.msra.mxu0 %v493
    %v495 = vand.u32 %v93, 4294901760
    %496 = vmatpush.msra.mxu0 %v495
    %v497 = vand.u32 %v85, 4294901760
    %498 = vmatpush.msra.mxu0 %v497
    %v499 = vand.u32 %v77, 4294901760
    %500 = vmatpush.msra.mxu0 %v499
    %v501 = vand.u32 %v69, 4294901760
    %502 = vmatpush.msra.mxu0 %v501
    %v503 = vand.u32 %v61, 4294901760
    %504 = vmatpush.msra.mxu0 %v503
    %v505 = vand.u32 %v53, 4294901760
    %506 = vmatpush.msra.mxu0 %v505
    %v507 = vand.u32 %v45, 4294901760
    %508 = vmatpush.msra.mxu0 %v507
    %v509 = vand.u32 %v37, 4294901760
    %510 = vmatpush.msra.mxu0 %v509
    %v511 = vand.u32 %v29, 4294901760
    %512 = vmatpush.msra.mxu0 %v511
    %v513 = vand.u32 %v27, 4294901760
    %v514 = vsub.f32 %v27, %v513
    %v515 = vand.u32 %v514, 4294901760
    %516 = vmatmul.f32.gmra.mxu0 %v515
    %v517 = vpop.f32.mrf.mxu0
    %v518 = vadd.f32 %v479, %v517
    %519 = vdwg.mxu0
    %v520 = vand.u32 %v149, 4294901760
    %v521 = vsub.f32 %v149, %v520
    %v522 = vand.u32 %v521, 4294901760
    %523 = vmatpush.msra.mxu0 %v522
    %v524 = vand.u32 %v141, 4294901760
    %v525 = vsub.f32 %v141, %v524
    %v526 = vand.u32 %v525, 4294901760
    %527 = vmatpush.msra.mxu0 %v526
    %v528 = vand.u32 %v133, 4294901760
    %v529 = vsub.f32 %v133, %v528
    %v530 = vand.u32 %v529, 4294901760
    %531 = vmatpush.msra.mxu0 %v530
    %v532 = vand.u32 %v125, 4294901760
    %v533 = vsub.f32 %v125, %v532
    %v534 = vand.u32 %v533, 4294901760
    %535 = vmatpush.msra.mxu0 %v534
    %v536 = vand.u32 %v117, 4294901760
    %v537 = vsub.f32 %v117, %v536
    %v538 = vand.u32 %v537, 4294901760
    %539 = vmatpush.msra.mxu0 %v538
    %v540 = vand.u32 %v109, 4294901760
    %v541 = vsub.f32 %v109, %v540
    %v542 = vand.u32 %v541, 4294901760
    %543 = vmatpush.msra.mxu0 %v542
    %v544 = vand.u32 %v101, 4294901760
    %v545 = vsub.f32 %v101, %v544
    %v546 = vand.u32 %v545, 4294901760
    %547 = vmatpush.msra.mxu0 %v546
    %v548 = vand.u32 %v93, 4294901760
    %v549 = vsub.f32 %v93, %v548
    %v550 = vand.u32 %v549, 4294901760
    %551 = vmatpush.msra.mxu0 %v550
    %v552 = vand.u32 %v85, 4294901760
    %v553 = vsub.f32 %v85, %v552
    %v554 = vand.u32 %v553, 4294901760
    %555 = vmatpush.msra.mxu0 %v554
    %v556 = vand.u32 %v77, 4294901760
    %v557 = vsub.f32 %v77, %v556
    %v558 = vand.u32 %v557, 4294901760
    %559 = vmatpush.msra.mxu0 %v558
    %v560 = vand.u32 %v69, 4294901760
    %v561 = vsub.f32 %v69, %v560
    %v562 = vand.u32 %v561, 4294901760
    %563 = vmatpush.msra.mxu0 %v562
    %v564 = vand.u32 %v61, 4294901760
    %v565 = vsub.f32 %v61, %v564
    %v566 = vand.u32 %v565, 4294901760
    %567 = vmatpush.msra.mxu0 %v566
    %v568 = vand.u32 %v53, 4294901760
    %v569 = vsub.f32 %v53, %v568
    %v570 = vand.u32 %v569, 4294901760
    %571 = vmatpush.msra.mxu0 %v570
    %v572 = vand.u32 %v45, 4294901760
    %v573 = vsub.f32 %v45, %v572
    %v574 = vand.u32 %v573, 4294901760
    %575 = vmatpush.msra.mxu0 %v574
    %v576 = vand.u32 %v37, 4294901760
    %v577 = vsub.f32 %v37, %v576
    %v578 = vand.u32 %v577, 4294901760
    %579 = vmatpush.msra.mxu0 %v578
    %v580 = vand.u32 %v29, 4294901760
    %v581 = vsub.f32 %v29, %v580
    %v582 = vand.u32 %v581, 4294901760
    %583 = vmatpush.msra.mxu0 %v582
    %v584 = vand.u32 %v27, 4294901760
    %585 = vmatmul.f32.gmra.mxu0 %v584
    %v586 = vpop.f32.mrf.mxu0
    %v587 = vadd.f32 %v518, %v586
    %588 = vdwg.mxu0
    %v589 = vand.u32 %v149, 4294901760
    %590 = vmatpush.msra.mxu0 %v589
    %v591 = vand.u32 %v141, 4294901760
    %592 = vmatpush.msra.mxu0 %v591
    %v593 = vand.u32 %v133, 4294901760
    %594 = vmatpush.msra.mxu0 %v593
    %v595 = vand.u32 %v125, 4294901760
    %596 = vmatpush.msra.mxu0 %v595
    %v597 = vand.u32 %v117, 4294901760
    %598 = vmatpush.msra.mxu0 %v597
    %v599 = vand.u32 %v109, 4294901760
    %600 = vmatpush.msra.mxu0 %v599
    %v601 = vand.u32 %v101, 4294901760
    %602 = vmatpush.msra.mxu0 %v601
    %v603 = vand.u32 %v93, 4294901760
    %604 = vmatpush.msra.mxu0 %v603
    %v605 = vand.u32 %v85, 4294901760
    %606 = vmatpush.msra.mxu0 %v605
    %v607 = vand.u32 %v77, 4294901760
    %608 = vmatpush.msra.mxu0 %v607
    %v609 = vand.u32 %v69, 4294901760
    %610 = vmatpush.msra.mxu0 %v609
    %v611 = vand.u32 %v61, 4294901760
    %612 = vmatpush.msra.mxu0 %v611
    %v613 = vand.u32 %v53, 4294901760
    %614 = vmatpush.msra.mxu0 %v613
    %v615 = vand.u32 %v45, 4294901760
    %616 = vmatpush.msra.mxu0 %v615
    %v617 = vand.u32 %v37, 4294901760
    %618 = vmatpush.msra.mxu0 %v617
    %v619 = vand.u32 %v29, 4294901760
    %620 = vmatpush.msra.mxu0 %v619
    %v621 = vand.u32 %v27, 4294901760
    %622 = vmatmul.f32.gmra.mxu0 %v621
    %v623 = vpop.f32.mrf.mxu0
    %v624 = vadd.f32 %v587, %v623
    %625 = vdwg.mxu0
    %v626 = vand.u32 %v277, 4294901760
    %627 = vmatpush.msra.mxu0 %v626
    %v628 = vand.u32 %v269, 4294901760
    %629 = vmatpush.msra.mxu0 %v628
    %v630 = vand.u32 %v261, 4294901760
    %631 = vmatpush.msra.mxu0 %v630
    %v632 = vand.u32 %v253, 4294901760
    %633 = vmatpush.msra.mxu0 %v632
    %v634 = vand.u32 %v245, 4294901760
    %635 = vmatpush.msra.mxu0 %v634
    %v636 = vand.u32 %v237, 4294901760
    %637 = vmatpush.msra.mxu0 %v636
    %v638 = vand.u32 %v229, 4294901760
    %639 = vmatpush.msra.mxu0 %v638
    %v640 = vand.u32 %v221, 4294901760
    %641 = vmatpush.msra.mxu0 %v640
    %v642 = vand.u32 %v213, 4294901760
    %643 = vmatpush.msra.mxu0 %v642
    %v644 = vand.u32 %v205, 4294901760
    %645 = vmatpush.msra.mxu0 %v644
    %v646 = vand.u32 %v197, 4294901760
    %647 = vmatpush.msra.mxu0 %v646
    %v648 = vand.u32 %v189, 4294901760
    %649 = vmatpush.msra.mxu0 %v648
    %v650 = vand.u32 %v181, 4294901760
    %651 = vmatpush.msra.mxu0 %v650
    %v652 = vand.u32 %v173, 4294901760
    %653 = vmatpush.msra.mxu0 %v652
    %v654 = vand.u32 %v165, 4294901760
    %655 = vmatpush.msra.mxu0 %v654
    %v656 = vand.u32 %v157, 4294901760
    %657 = vmatpush.msra.mxu0 %v656
    %v658 = vand.u32 %v28, 4294901760
    %v659 = vsub.f32 %v28, %v658
    %v660 = vand.u32 %v659, 4294901760
    %v661 = vsub.f32 %v659, %v660
    %v662 = vand.u32 %v661, 4294901760
    %663 = vmatmul.f32.gmra.mxu0 %v662
    %v664 = vpop.f32.mrf.mxu0
    %v665 = vadd.f32 %v624, %v664
    %666 = vdwg.mxu0
    %v667 = vand.u32 %v277, 4294901760
    %v668 = vsub.f32 %v277, %v667
    %v669 = vand.u32 %v668, 4294901760
    %v670 = vsub.f32 %v668, %v669
    %v671 = vand.u32 %v670, 4294901760
    %672 = vmatpush.msra.mxu0 %v671
    %v673 = vand.u32 %v269, 4294901760
    %v674 = vsub.f32 %v269, %v673
    %v675 = vand.u32 %v674, 4294901760
    %v676 = vsub.f32 %v674, %v675
    %v677 = vand.u32 %v676, 4294901760
    %678 = vmatpush.msra.mxu0 %v677
    %v679 = vand.u32 %v261, 4294901760
    %v680 = vsub.f32 %v261, %v679
    %v681 = vand.u32 %v680, 4294901760
    %v682 = vsub.f32 %v680, %v681
    %v683 = vand.u32 %v682, 4294901760
    %684 = vmatpush.msra.mxu0 %v683
    %v685 = vand.u32 %v253, 4294901760
    %v686 = vsub.f32 %v253, %v685
    %v687 = vand.u32 %v686, 4294901760
    %v688 = vsub.f32 %v686, %v687
    %v689 = vand.u32 %v688, 4294901760
    %690 = vmatpush.msra.mxu0 %v689
    %v691 = vand.u32 %v245, 4294901760
    %v692 = vsub.f32 %v245, %v691
    %v693 = vand.u32 %v692, 4294901760
    %v694 = vsub.f32 %v692, %v693
    %v695 = vand.u32 %v694, 4294901760
    %696 = vmatpush.msra.mxu0 %v695
    %v697 = vand.u32 %v237, 4294901760
    %v698 = vsub.f32 %v237, %v697
    %v699 = vand.u32 %v698, 4294901760
    %v700 = vsub.f32 %v698, %v699
    %v701 = vand.u32 %v700, 4294901760
    %702 = vmatpush.msra.mxu0 %v701
    %v703 = vand.u32 %v229, 4294901760
    %v704 = vsub.f32 %v229, %v703
    %v705 = vand.u32 %v704, 4294901760
    %v706 = vsub.f32 %v704, %v705
    %v707 = vand.u32 %v706, 4294901760
    %708 = vmatpush.msra.mxu0 %v707
    %v709 = vand.u32 %v221, 4294901760
    %v710 = vsub.f32 %v221, %v709
    %v711 = vand.u32 %v710, 4294901760
    %v712 = vsub.f32 %v710, %v711
    %v713 = vand.u32 %v712, 4294901760
    %714 = vmatpush.msra.mxu0 %v713
    %v715 = vand.u32 %v213, 4294901760
    %v716 = vsub.f32 %v213, %v715
    %v717 = vand.u32 %v716, 4294901760
    %v718 = vsub.f32 %v716, %v717
    %v719 = vand.u32 %v718, 4294901760
    %720 = vmatpush.msra.mxu0 %v719
    %v721 = vand.u32 %v205, 4294901760
    %v722 = vsub.f32 %v205, %v721
    %v723 = vand.u32 %v722, 4294901760
    %v724 = vsub.f32 %v722, %v723
    %v725 = vand.u32 %v724, 4294901760
    %726 = vmatpush.msra.mxu0 %v725
    %v727 = vand.u32 %v197, 4294901760
    %v728 = vsub.f32 %v197, %v727
    %v729 = vand.u32 %v728, 4294901760
    %v730 = vsub.f32 %v728, %v729
    %v731 = vand.u32 %v730, 4294901760
    %732 = vmatpush.msra.mxu0 %v731
    %v733 = vand.u32 %v189, 4294901760
    %v734 = vsub.f32 %v189, %v733
    %v735 = vand.u32 %v734, 4294901760
    %v736 = vsub.f32 %v734, %v735
    %v737 = vand.u32 %v736, 4294901760
    %738 = vmatpush.msra.mxu0 %v737
    %v739 = vand.u32 %v181, 4294901760
    %v740 = vsub.f32 %v181, %v739
    %v741 = vand.u32 %v740, 4294901760
    %v742 = vsub.f32 %v740, %v741
    %v743 = vand.u32 %v742, 4294901760
    %744 = vmatpush.msra.mxu0 %v743
    %v745 = vand.u32 %v173, 4294901760
    %v746 = vsub.f32 %v173, %v745
    %v747 = vand.u32 %v746, 4294901760
    %v748 = vsub.f32 %v746, %v747
    %v749 = vand.u32 %v748, 4294901760
    %750 = vmatpush.msra.mxu0 %v749
    %v751 = vand.u32 %v165, 4294901760
    %v752 = vsub.f32 %v165, %v751
    %v753 = vand.u32 %v752, 4294901760
    %v754 = vsub.f32 %v752, %v753
    %v755 = vand.u32 %v754, 4294901760
    %756 = vmatpush.msra.mxu0 %v755
    %v757 = vand.u32 %v157, 4294901760
    %v758 = vsub.f32 %v157, %v757
    %v759 = vand.u32 %v758, 4294901760
    %v760 = vsub.f32 %v758, %v759
    %v761 = vand.u32 %v760, 4294901760
    %762 = vmatpush.msra.mxu0 %v761
    %v763 = vand.u32 %v28, 4294901760
    %764 = vmatmul.f32.gmra.mxu0 %v763
    %v765 = vpop.f32.mrf.mxu0
    %v766 = vadd.f32 %v665, %v765
    %767 = vdwg.mxu0
    %v768 = vand.u32 %v277, 4294901760
    %v769 = vsub.f32 %v277, %v768
    %770 = vmatpush.msra.mxu0 %v769
    %v771 = vand.u32 %v269, 4294901760
    %v772 = vsub.f32 %v269, %v771
    %773 = vmatpush.msra.mxu0 %v772
    %v774 = vand.u32 %v261, 4294901760
    %v775 = vsub.f32 %v261, %v774
    %776 = vmatpush.msra.mxu0 %v775
    %v777 = vand.u32 %v253, 4294901760
    %v778 = vsub.f32 %v253, %v777
    %779 = vmatpush.msra.mxu0 %v778
    %v780 = vand.u32 %v245, 4294901760
    %v781 = vsub.f32 %v245, %v780
    %782 = vmatpush.msra.mxu0 %v781
    %v783 = vand.u32 %v237, 4294901760
    %v784 = vsub.f32 %v237, %v783
    %785 = vmatpush.msra.mxu0 %v784
    %v786 = vand.u32 %v229, 4294901760
    %v787 = vsub.f32 %v229, %v786
    %788 = vmatpush.msra.mxu0 %v787
    %v789 = vand.u32 %v221, 4294901760
    %v790 = vsub.f32 %v221, %v789
    %791 = vmatpush.msra.mxu0 %v790
    %v792 = vand.u32 %v213, 4294901760
    %v793 = vsub.f32 %v213, %v792
    %794 = vmatpush.msra.mxu0 %v793
    %v795 = vand.u32 %v205, 4294901760
    %v796 = vsub.f32 %v205, %v795
    %797 = vmatpush.msra.mxu0 %v796
    %v798 = vand.u32 %v197, 4294901760
    %v799 = vsub.f32 %v197, %v798
    %800 = vmatpush.msra.mxu0 %v799
    %v801 = vand.u32 %v189, 4294901760
    %v802 = vsub.f32 %v189, %v801
    %803 = vmatpush.msra.mxu0 %v802
    %v804 = vand.u32 %v181, 4294901760
    %v805 = vsub.f32 %v181, %v804
    %806 = vmatpush.msra.mxu0 %v805
    %v807 = vand.u32 %v173, 4294901760
    %v808 = vsub.f32 %v173, %v807
    %809 = vmatpush.msra.mxu0 %v808
    %v810 = vand.u32 %v165, 4294901760
    %v811 = vsub.f32 %v165, %v810
    %812 = vmatpush.msra.mxu0 %v811
    %v813 = vand.u32 %v157, 4294901760
    %v814 = vsub.f32 %v157, %v813
    %815 = vmatpush.msra.mxu0 %v814
    %v816 = vand.u32 %v28, 4294901760
    %v817 = vsub.f32 %v28, %v816
    %818 = vmatmul.f32.gmra.mxu0 %v817
    %v819 = vpop.f32.mrf.mxu0
    %v820 = vadd.f32 %v766, %v819
    %821 = vdwg.mxu0
    %v822 = vand.u32 %v277, 4294901760
    %823 = vmatpush.msra.mxu0 %v822
    %v824 = vand.u32 %v269, 4294901760
    %825 = vmatpush.msra.mxu0 %v824
    %v826 = vand.u32 %v261, 4294901760
    %827 = vmatpush.msra.mxu0 %v826
    %v828 = vand.u32 %v253, 4294901760
    %829 = vmatpush.msra.mxu0 %v828
    %v830 = vand.u32 %v245, 4294901760
    %831 = vmatpush.msra.mxu0 %v830
    %v832 = vand.u32 %v237, 4294901760
    %833 = vmatpush.msra.mxu0 %v832
    %v834 = vand.u32 %v229, 4294901760
    %835 = vmatpush.msra.mxu0 %v834
    %v836 = vand.u32 %v221, 4294901760
    %837 = vmatpush.msra.mxu0 %v836
    %v838 = vand.u32 %v213, 4294901760
    %839 = vmatpush.msra.mxu0 %v838
    %v840 = vand.u32 %v205, 4294901760
    %841 = vmatpush.msra.mxu0 %v840
    %v842 = vand.u32 %v197, 4294901760
    %843 = vmatpush.msra.mxu0 %v842
    %v844 = vand.u32 %v189, 4294901760
    %845 = vmatpush.msra.mxu0 %v844
    %v846 = vand.u32 %v181, 4294901760
    %847 = vmatpush.msra.mxu0 %v846
    %v848 = vand.u32 %v173, 4294901760
    %849 = vmatpush.msra.mxu0 %v848
    %v850 = vand.u32 %v165, 4294901760
    %851 = vmatpush.msra.mxu0 %v850
    %v852 = vand.u32 %v157, 4294901760
    %853 = vmatpush.msra.mxu0 %v852
    %v854 = vand.u32 %v28, 4294901760
    %v855 = vsub.f32 %v28, %v854
    %v856 = vand.u32 %v855, 4294901760
    %857 = vmatmul.f32.gmra.mxu0 %v856
    %v858 = vpop.f32.mrf.mxu0
    %v859 = vadd.f32 %v820, %v858
    %860 = vdwg.mxu0
    %v861 = vand.u32 %v277, 4294901760
    %v862 = vsub.f32 %v277, %v861
    %v863 = vand.u32 %v862, 4294901760
    %864 = vmatpush.msra.mxu0 %v863
    %v865 = vand.u32 %v269, 4294901760
    %v866 = vsub.f32 %v269, %v865
    %v867 = vand.u32 %v866, 4294901760
    %868 = vmatpush.msra.mxu0 %v867
    %v869 = vand.u32 %v261, 4294901760
    %v870 = vsub.f32 %v261, %v869
    %v871 = vand.u32 %v870, 4294901760
    %872 = vmatpush.msra.mxu0 %v871
    %v873 = vand.u32 %v253, 4294901760
    %v874 = vsub.f32 %v253, %v873
    %v875 = vand.u32 %v874, 4294901760
    %876 = vmatpush.msra.mxu0 %v875
    %v877 = vand.u32 %v245, 4294901760
    %v878 = vsub.f32 %v245, %v877
    %v879 = vand.u32 %v878, 4294901760
    %880 = vmatpush.msra.mxu0 %v879
    %v881 = vand.u32 %v237, 4294901760
    %v882 = vsub.f32 %v237, %v881
    %v883 = vand.u32 %v882, 4294901760
    %884 = vmatpush.msra.mxu0 %v883
    %v885 = vand.u32 %v229, 4294901760
    %v886 = vsub.f32 %v229, %v885
    %v887 = vand.u32 %v886, 4294901760
    %888 = vmatpush.msra.mxu0 %v887
    %v889 = vand.u32 %v221, 4294901760
    %v890 = vsub.f32 %v221, %v889
    %v891 = vand.u32 %v890, 4294901760
    %892 = vmatpush.msra.mxu0 %v891
    %v893 = vand.u32 %v213, 4294901760
    %v894 = vsub.f32 %v213, %v893
    %v895 = vand.u32 %v894, 4294901760
    %896 = vmatpush.msra.mxu0 %v895
    %v897 = vand.u32 %v205, 4294901760
    %v898 = vsub.f32 %v205, %v897
    %v899 = vand.u32 %v898, 4294901760
    %900 = vmatpush.msra.mxu0 %v899
    %v901 = vand.u32 %v197, 4294901760
    %v902 = vsub.f32 %v197, %v901
    %v903 = vand.u32 %v902, 4294901760
    %904 = vmatpush.msra.mxu0 %v903
    %v905 = vand.u32 %v189, 4294901760
    %v906 = vsub.f32 %v189, %v905
    %v907 = vand.u32 %v906, 4294901760
    %908 = vmatpush.msra.mxu0 %v907
    %v909 = vand.u32 %v181, 4294901760
    %v910 = vsub.f32 %v181, %v909
    %v911 = vand.u32 %v910, 4294901760
    %912 = vmatpush.msra.mxu0 %v911
    %v913 = vand.u32 %v173, 4294901760
    %v914 = vsub.f32 %v173, %v913
    %v915 = vand.u32 %v914, 4294901760
    %916 = vmatpush.msra.mxu0 %v915
    %v917 = vand.u32 %v165, 4294901760
    %v918 = vsub.f32 %v165, %v917
    %v919 = vand.u32 %v918, 4294901760
    %920 = vmatpush.msra.mxu0 %v919
    %v921 = vand.u32 %v157, 4294901760
    %v922 = vsub.f32 %v157, %v921
    %v923 = vand.u32 %v922, 4294901760
    %924 = vmatpush.msra.mxu0 %v923
    %v925 = vand.u32 %v28, 4294901760
    %926 = vmatmul.f32.gmra.mxu0 %v925
    %v927 = vpop.f32.mrf.mxu0
    %v928 = vadd.f32 %v859, %v927
    %929 = vdwg.mxu0
    %v930 = vand.u32 %v277, 4294901760
    %931 = vmatpush.msra.mxu0 %v930
    %v932 = vand.u32 %v269, 4294901760
    %933 = vmatpush.msra.mxu0 %v932
    %v934 = vand.u32 %v261, 4294901760
    %935 = vmatpush.msra.mxu0 %v934
    %v936 = vand.u32 %v253, 4294901760
    %937 = vmatpush.msra.mxu0 %v936
    %v938 = vand.u32 %v245, 4294901760
    %939 = vmatpush.msra.mxu0 %v938
    %v940 = vand.u32 %v237, 4294901760
    %941 = vmatpush.msra.mxu0 %v940
    %v942 = vand.u32 %v229, 4294901760
    %943 = vmatpush.msra.mxu0 %v942
    %v944 = vand.u32 %v221, 4294901760
    %945 = vmatpush.msra.mxu0 %v944
    %v946 = vand.u32 %v213, 4294901760
    %947 = vmatpush.msra.mxu0 %v946
    %v948 = vand.u32 %v205, 4294901760
    %949 = vmatpush.msra.mxu0 %v948
    %v950 = vand.u32 %v197, 4294901760
    %951 = vmatpush.msra.mxu0 %v950
    %v952 = vand.u32 %v189, 4294901760
    %953 = vmatpush.msra.mxu0 %v952
    %v954 = vand.u32 %v181, 4294901760
    %955 = vmatpush.msra.mxu0 %v954
    %v956 = vand.u32 %v173, 4294901760
    %957 = vmatpush.msra.mxu0 %v956
    %v958 = vand.u32 %v165, 4294901760
    %959 = vmatpush.msra.mxu0 %v958
    %v960 = vand.u32 %v157, 4294901760
    %961 = vmatpush.msra.mxu0 %v960
    %v962 = vand.u32 %v28, 4294901760
    %963 = vmatmul.f32.gmra.mxu0 %v962
    %v964 = vpop.f32.mrf.mxu0
    %v965 = vadd.f32 %v928, %v964
    %966 = vdwg.mxu0
    %v967 = vand.u32 %v150, 4294901760
    %968 = vmatpush.msra.mxu0 %v967
    %v969 = vand.u32 %v142, 4294901760
    %970 = vmatpush.msra.mxu0 %v969
    %v971 = vand.u32 %v134, 4294901760
    %972 = vmatpush.msra.mxu0 %v971
    %v973 = vand.u32 %v126, 4294901760
    %974 = vmatpush.msra.mxu0 %v973
    %v975 = vand.u32 %v118, 4294901760
    %976 = vmatpush.msra.mxu0 %v975
    %v977 = vand.u32 %v110, 4294901760
    %978 = vmatpush.msra.mxu0 %v977
    %v979 = vand.u32 %v102, 4294901760
    %980 = vmatpush.msra.mxu0 %v979
    %v981 = vand.u32 %v94, 4294901760
    %982 = vmatpush.msra.mxu0 %v981
    %v983 = vand.u32 %v86, 4294901760
    %984 = vmatpush.msra.mxu0 %v983
    %v985 = vand.u32 %v78, 4294901760
    %986 = vmatpush.msra.mxu0 %v985
    %v987 = vand.u32 %v70, 4294901760
    %988 = vmatpush.msra.mxu0 %v987
    %v989 = vand.u32 %v62, 4294901760
    %990 = vmatpush.msra.mxu0 %v989
    %v991 = vand.u32 %v54, 4294901760
    %992 = vmatpush.msra.mxu0 %v991
    %v993 = vand.u32 %v46, 4294901760
    %994 = vmatpush.msra.mxu0 %v993
    %v995 = vand.u32 %v38, 4294901760
    %996 = vmatpush.msra.mxu0 %v995
    %v997 = vand.u32 %v30, 4294901760
    %998 = vmatpush.msra.mxu0 %v997
    %v999 = vand.u32 %v27, 4294901760
    %v1000 = vsub.f32 %v27, %v999
    %v1001 = vand.u32 %v1000, 4294901760
    %v1002 = vsub.f32 %v1000, %v1001
    %v1003 = vand.u32 %v1002, 4294901760
    %1004 = vmatmul.f32.gmra.mxu0 %v1003
    %v1005 = vpop.f32.mrf.mxu0
    %v1006 = vadd.f32 0.0, %v1005
    %1007 = vdwg.mxu0
    %v1008 = vand.u32 %v150, 4294901760
    %v1009 = vsub.f32 %v150, %v1008
    %v1010 = vand.u32 %v1009, 4294901760
    %v1011 = vsub.f32 %v1009, %v1010
    %v1012 = vand.u32 %v1011, 4294901760
    %1013 = vmatpush.msra.mxu0 %v1012
    %v1014 = vand.u32 %v142, 4294901760
    %v1015 = vsub.f32 %v142, %v1014
    %v1016 = vand.u32 %v1015, 4294901760
    %v1017 = vsub.f32 %v1015, %v1016
    %v1018 = vand.u32 %v1017, 4294901760
    %1019 = vmatpush.msra.mxu0 %v1018
    %v1020 = vand.u32 %v134, 4294901760
    %v1021 = vsub.f32 %v134, %v1020
    %v1022 = vand.u32 %v1021, 4294901760
    %v1023 = vsub.f32 %v1021, %v1022
    %v1024 = vand.u32 %v1023, 4294901760
    %1025 = vmatpush.msra.mxu0 %v1024
    %v1026 = vand.u32 %v126, 4294901760
    %v1027 = vsub.f32 %v126, %v1026
    %v1028 = vand.u32 %v1027, 4294901760
    %v1029 = vsub.f32 %v1027, %v1028
    %v1030 = vand.u32 %v1029, 4294901760
    %1031 = vmatpush.msra.mxu0 %v1030
    %v1032 = vand.u32 %v118, 4294901760
    %v1033 = vsub.f32 %v118, %v1032
    %v1034 = vand.u32 %v1033, 4294901760
    %v1035 = vsub.f32 %v1033, %v1034
    %v1036 = vand.u32 %v1035, 4294901760
    %1037 = vmatpush.msra.mxu0 %v1036
    %v1038 = vand.u32 %v110, 4294901760
    %v1039 = vsub.f32 %v110, %v1038
    %v1040 = vand.u32 %v1039, 4294901760
    %v1041 = vsub.f32 %v1039, %v1040
    %v1042 = vand.u32 %v1041, 4294901760
    %1043 = vmatpush.msra.mxu0 %v1042
    %v1044 = vand.u32 %v102, 4294901760
    %v1045 = vsub.f32 %v102, %v1044
    %v1046 = vand.u32 %v1045, 4294901760
    %v1047 = vsub.f32 %v1045, %v1046
    %v1048 = vand.u32 %v1047, 4294901760
    %1049 = vmatpush.msra.mxu0 %v1048
    %v1050 = vand.u32 %v94, 4294901760
    %v1051 = vsub.f32 %v94, %v1050
    %v1052 = vand.u32 %v1051, 4294901760
    %v1053 = vsub.f32 %v1051, %v1052
    %v1054 = vand.u32 %v1053, 4294901760
    %1055 = vmatpush.msra.mxu0 %v1054
    %v1056 = vand.u32 %v86, 4294901760
    %v1057 = vsub.f32 %v86, %v1056
    %v1058 = vand.u32 %v1057, 4294901760
    %v1059 = vsub.f32 %v1057, %v1058
    %v1060 = vand.u32 %v1059, 4294901760
    %1061 = vmatpush.msra.mxu0 %v1060
    %v1062 = vand.u32 %v78, 4294901760
    %v1063 = vsub.f32 %v78, %v1062
    %v1064 = vand.u32 %v1063, 4294901760
    %v1065 = vsub.f32 %v1063, %v1064
    %v1066 = vand.u32 %v1065, 4294901760
    %1067 = vmatpush.msra.mxu0 %v1066
    %v1068 = vand.u32 %v70, 4294901760
    %v1069 = vsub.f32 %v70, %v1068
    %v1070 = vand.u32 %v1069, 4294901760
    %v1071 = vsub.f32 %v1069, %v1070
    %v1072 = vand.u32 %v1071, 4294901760
    %1073 = vmatpush.msra.mxu0 %v1072
    %v1074 = vand.u32 %v62, 4294901760
    %v1075 = vsub.f32 %v62, %v1074
    %v1076 = vand.u32 %v1075, 4294901760
    %v1077 = vsub.f32 %v1075, %v1076
    %v1078 = vand.u32 %v1077, 4294901760
    %1079 = vmatpush.msra.mxu0 %v1078
    %v1080 = vand.u32 %v54, 4294901760
    %v1081 = vsub.f32 %v54, %v1080
    %v1082 = vand.u32 %v1081, 4294901760
    %v1083 = vsub.f32 %v1081, %v1082
    %v1084 = vand.u32 %v1083, 4294901760
    %1085 = vmatpush.msra.mxu0 %v1084
    %v1086 = vand.u32 %v46, 4294901760
    %v1087 = vsub.f32 %v46, %v1086
    %v1088 = vand.u32 %v1087, 4294901760
    %v1089 = vsub.f32 %v1087, %v1088
    %v1090 = vand.u32 %v1089, 4294901760
    %1091 = vmatpush.msra.mxu0 %v1090
    %v1092 = vand.u32 %v38, 4294901760
    %v1093 = vsub.f32 %v38, %v1092
    %v1094 = vand.u32 %v1093, 4294901760
    %v1095 = vsub.f32 %v1093, %v1094
    %v1096 = vand.u32 %v1095, 4294901760
    %1097 = vmatpush.msra.mxu0 %v1096
    %v1098 = vand.u32 %v30, 4294901760
    %v1099 = vsub.f32 %v30, %v1098
    %v1100 = vand.u32 %v1099, 4294901760
    %v1101 = vsub.f32 %v1099, %v1100
    %v1102 = vand.u32 %v1101, 4294901760
    %1103 = vmatpush.msra.mxu0 %v1102
    %v1104 = vand.u32 %v27, 4294901760
    %1105 = vmatmul.f32.gmra.mxu0 %v1104
    %v1106 = vpop.f32.mrf.mxu0
    %v1107 = vadd.f32 %v1006, %v1106
    %1108 = vdwg.mxu0
    %v1109 = vand.u32 %v150, 4294901760
    %v1110 = vsub.f32 %v150, %v1109
    %1111 = vmatpush.msra.mxu0 %v1110
    %v1112 = vand.u32 %v142, 4294901760
    %v1113 = vsub.f32 %v142, %v1112
    %1114 = vmatpush.msra.mxu0 %v1113
    %v1115 = vand.u32 %v134, 4294901760
    %v1116 = vsub.f32 %v134, %v1115
    %1117 = vmatpush.msra.mxu0 %v1116
    %v1118 = vand.u32 %v126, 4294901760
    %v1119 = vsub.f32 %v126, %v1118
    %1120 = vmatpush.msra.mxu0 %v1119
    %v1121 = vand.u32 %v118, 4294901760
    %v1122 = vsub.f32 %v118, %v1121
    %1123 = vmatpush.msra.mxu0 %v1122
    %v1124 = vand.u32 %v110, 4294901760
    %v1125 = vsub.f32 %v110, %v1124
    %1126 = vmatpush.msra.mxu0 %v1125
    %v1127 = vand.u32 %v102, 4294901760
    %v1128 = vsub.f32 %v102, %v1127
    %1129 = vmatpush.msra.mxu0 %v1128
    %v1130 = vand.u32 %v94, 4294901760
    %v1131 = vsub.f32 %v94, %v1130
    %1132 = vmatpush.msra.mxu0 %v1131
    %v1133 = vand.u32 %v86, 4294901760
    %v1134 = vsub.f32 %v86, %v1133
    %1135 = vmatpush.msra.mxu0 %v1134
    %v1136 = vand.u32 %v78, 4294901760
    %v1137 = vsub.f32 %v78, %v1136
    %1138 = vmatpush.msra.mxu0 %v1137
    %v1139 = vand.u32 %v70, 4294901760
    %v1140 = vsub.f32 %v70, %v1139
    %1141 = vmatpush.msra.mxu0 %v1140
    %v1142 = vand.u32 %v62, 4294901760
    %v1143 = vsub.f32 %v62, %v1142
    %1144 = vmatpush.msra.mxu0 %v1143
    %v1145 = vand.u32 %v54, 4294901760
    %v1146 = vsub.f32 %v54, %v1145
    %1147 = vmatpush.msra.mxu0 %v1146
    %v1148 = vand.u32 %v46, 4294901760
    %v1149 = vsub.f32 %v46, %v1148
    %1150 = vmatpush.msra.mxu0 %v1149
    %v1151 = vand.u32 %v38, 4294901760
    %v1152 = vsub.f32 %v38, %v1151
    %1153 = vmatpush.msra.mxu0 %v1152
    %v1154 = vand.u32 %v30, 4294901760
    %v1155 = vsub.f32 %v30, %v1154
    %1156 = vmatpush.msra.mxu0 %v1155
    %v1157 = vand.u32 %v27, 4294901760
    %v1158 = vsub.f32 %v27, %v1157
    %1159 = vmatmul.f32.gmra.mxu0 %v1158
    %v1160 = vpop.f32.mrf.mxu0
    %v1161 = vadd.f32 %v1107, %v1160
    %1162 = vdwg.mxu0
    %v1163 = vand.u32 %v150, 4294901760
    %1164 = vmatpush.msra.mxu0 %v1163
    %v1165 = vand.u32 %v142, 4294901760
    %1166 = vmatpush.msra.mxu0 %v1165
    %v1167 = vand.u32 %v134, 4294901760
    %1168 = vmatpush.msra.mxu0 %v1167
    %v1169 = vand.u32 %v126, 4294901760
    %1170 = vmatpush.msra.mxu0 %v1169
    %v1171 = vand.u32 %v118, 4294901760
    %1172 = vmatpush.msra.mxu0 %v1171
    %v1173 = vand.u32 %v110, 4294901760
    %1174 = vmatpush.msra.mxu0 %v1173
    %v1175 = vand.u32 %v102, 4294901760
    %1176 = vmatpush.msra.mxu0 %v1175
    %v1177 = vand.u32 %v94, 4294901760
    %1178 = vmatpush.msra.mxu0 %v1177
    %v1179 = vand.u32 %v86, 4294901760
    %1180 = vmatpush.msra.mxu0 %v1179
    %v1181 = vand.u32 %v78, 4294901760
    %1182 = vmatpush.msra.mxu0 %v1181
    %v1183 = vand.u32 %v70, 4294901760
    %1184 = vmatpush.msra.mxu0 %v1183
    %v1185 = vand.u32 %v62, 4294901760
    %1186 = vmatpush.msra.mxu0 %v1185
    %v1187 = vand.u32 %v54, 4294901760
    %1188 = vmatpush.msra.mxu0 %v1187
    %v1189 = vand.u32 %v46, 4294901760
    %1190 = vmatpush.msra.mxu0 %v1189
    %v1191 = vand.u32 %v38, 4294901760
    %1192 = vmatpush.msra.mxu0 %v1191
    %v1193 = vand.u32 %v30, 4294901760
    %1194 = vmatpush.msra.mxu0 %v1193
    %v1195 = vand.u32 %v27, 4294901760
    %v1196 = vsub.f32 %v27, %v1195
    %v1197 = vand.u32 %v1196, 4294901760
    %1198 = vmatmul.f32.gmra.mxu0 %v1197
    %v1199 = vpop.f32.mrf.mxu0
    %v1200 = vadd.f32 %v1161, %v1199
    %1201 = vdwg.mxu0
    %v1202 = vand.u32 %v150, 4294901760
    %v1203 = vsub.f32 %v150, %v1202
    %v1204 = vand.u32 %v1203, 4294901760
    %1205 = vmatpush.msra.mxu0 %v1204
    %v1206 = vand.u32 %v142, 4294901760
    %v1207 = vsub.f32 %v142, %v1206
    %v1208 = vand.u32 %v1207, 4294901760
    %1209 = vmatpush.msra.mxu0 %v1208
    %v1210 = vand.u32 %v134, 4294901760
    %v1211 = vsub.f32 %v134, %v1210
    %v1212 = vand.u32 %v1211, 4294901760
    %1213 = vmatpush.msra.mxu0 %v1212
    %v1214 = vand.u32 %v126, 4294901760
    %v1215 = vsub.f32 %v126, %v1214
    %v1216 = vand.u32 %v1215, 4294901760
    %1217 = vmatpush.msra.mxu0 %v1216
    %v1218 = vand.u32 %v118, 4294901760
    %v1219 = vsub.f32 %v118, %v1218
    %v1220 = vand.u32 %v1219, 4294901760
    %1221 = vmatpush.msra.mxu0 %v1220
    %v1222 = vand.u32 %v110, 4294901760
    %v1223 = vsub.f32 %v110, %v1222
    %v1224 = vand.u32 %v1223, 4294901760
    %1225 = vmatpush.msra.mxu0 %v1224
    %v1226 = vand.u32 %v102, 4294901760
    %v1227 = vsub.f32 %v102, %v1226
    %v1228 = vand.u32 %v1227, 4294901760
    %1229 = vmatpush.msra.mxu0 %v1228
    %v1230 = vand.u32 %v94, 4294901760
    %v1231 = vsub.f32 %v94, %v1230
    %v1232 = vand.u32 %v1231, 4294901760
    %1233 = vmatpush.msra.mxu0 %v1232
    %v1234 = vand.u32 %v86, 4294901760
    %v1235 = vsub.f32 %v86, %v1234
    %v1236 = vand.u32 %v1235, 4294901760
    %1237 = vmatpush.msra.mxu0 %v1236
    %v1238 = vand.u32 %v78, 4294901760
    %v1239 = vsub.f32 %v78, %v1238
    %v1240 = vand.u32 %v1239, 4294901760
    %1241 = vmatpush.msra.mxu0 %v1240
    %v1242 = vand.u32 %v70, 4294901760
    %v1243 = vsub.f32 %v70, %v1242
    %v1244 = vand.u32 %v1243, 4294901760
    %1245 = vmatpush.msra.mxu0 %v1244
    %v1246 = vand.u32 %v62, 4294901760
    %v1247 = vsub.f32 %v62, %v1246
    %v1248 = vand.u32 %v1247, 4294901760
    %1249 = vmatpush.msra.mxu0 %v1248
    %v1250 = vand.u32 %v54, 4294901760
    %v1251 = vsub.f32 %v54, %v1250
    %v1252 = vand.u32 %v1251, 4294901760
    %1253 = vmatpush.msra.mxu0 %v1252
    %v1254 = vand.u32 %v46, 4294901760
    %v1255 = vsub.f32 %v46, %v1254
    %v1256 = vand.u32 %v1255, 4294901760
    %1257 = vmatpush.msra.mxu0 %v1256
    %v1258 = vand.u32 %v38, 4294901760
    %v1259 = vsub.f32 %v38, %v1258
    %v1260 = vand.u32 %v1259, 4294901760
    %1261 = vmatpush.msra.mxu0 %v1260
    %v1262 = vand.u32 %v30, 4294901760
    %v1263 = vsub.f32 %v30, %v1262
    %v1264 = vand.u32 %v1263, 4294901760
    %1265 = vmatpush.msra.mxu0 %v1264
    %v1266 = vand.u32 %v27, 4294901760
    %1267 = vmatmul.f32.gmra.mxu0 %v1266
    %v1268 = vpop.f32.mrf.mxu0
    %v1269 = vadd.f32 %v1200, %v1268
    %1270 = vdwg.mxu0
    %v1271 = vand.u32 %v150, 4294901760
    %1272 = vmatpush.msra.mxu0 %v1271
    %v1273 = vand.u32 %v142, 4294901760
    %1274 = vmatpush.msra.mxu0 %v1273
    %v1275 = vand.u32 %v134, 4294901760
    %1276 = vmatpush.msra.mxu0 %v1275
    %v1277 = vand.u32 %v126, 4294901760
    %1278 = vmatpush.msra.mxu0 %v1277
    %v1279 = vand.u32 %v118, 4294901760
    %1280 = vmatpush.msra.mxu0 %v1279
    %v1281 = vand.u32 %v110, 4294901760
    %1282 = vmatpush.msra.mxu0 %v1281
    %v1283 = vand.u32 %v102, 4294901760
    %1284 = vmatpush.msra.mxu0 %v1283
    %v1285 = vand.u32 %v94, 4294901760
    %1286 = vmatpush.msra.mxu0 %v1285
    %v1287 = vand.u32 %v86, 4294901760
    %1288 = vmatpush.msra.mxu0 %v1287
    %v1289 = vand.u32 %v78, 4294901760
    %1290 = vmatpush.msra.mxu0 %v1289
    %v1291 = vand.u32 %v70, 4294901760
    %1292 = vmatpush.msra.mxu0 %v1291
    %v1293 = vand.u32 %v62, 4294901760
    %1294 = vmatpush.msra.mxu0 %v1293
    %v1295 = vand.u32 %v54, 4294901760
    %1296 = vmatpush.msra.mxu0 %v1295
    %v1297 = vand.u32 %v46, 4294901760
    %1298 = vmatpush.msra.mxu0 %v1297
    %v1299 = vand.u32 %v38, 4294901760
    %1300 = vmatpush.msra.mxu0 %v1299
    %v1301 = vand.u32 %v30, 4294901760
    %1302 = vmatpush.msra.mxu0 %v1301
    %v1303 = vand.u32 %v27, 4294901760
    %1304 = vmatmul.f32.gmra.mxu0 %v1303
    %v1305 = vpop.f32.mrf.mxu0
    %v1306 = vadd.f32 %v1269, %v1305
    %1307 = vdwg.mxu0
    %v1308 = vand.u32 %v278, 4294901760
    %1309 = vmatpush.msra.mxu0 %v1308
    %v1310 = vand.u32 %v270, 4294901760
    %1311 = vmatpush.msra.mxu0 %v1310
    %v1312 = vand.u32 %v262, 4294901760
    %1313 = vmatpush.msra.mxu0 %v1312
    %v1314 = vand.u32 %v254, 4294901760
    %1315 = vmatpush.msra.mxu0 %v1314
    %v1316 = vand.u32 %v246, 4294901760
    %1317 = vmatpush.msra.mxu0 %v1316
    %v1318 = vand.u32 %v238, 4294901760
    %1319 = vmatpush.msra.mxu0 %v1318
    %v1320 = vand.u32 %v230, 4294901760
    %1321 = vmatpush.msra.mxu0 %v1320
    %v1322 = vand.u32 %v222, 4294901760
    %1323 = vmatpush.msra.mxu0 %v1322
    %v1324 = vand.u32 %v214, 4294901760
    %1325 = vmatpush.msra.mxu0 %v1324
    %v1326 = vand.u32 %v206, 4294901760
    %1327 = vmatpush.msra.mxu0 %v1326
    %v1328 = vand.u32 %v198, 4294901760
    %1329 = vmatpush.msra.mxu0 %v1328
    %v1330 = vand.u32 %v190, 4294901760
    %1331 = vmatpush.msra.mxu0 %v1330
    %v1332 = vand.u32 %v182, 4294901760
    %1333 = vmatpush.msra.mxu0 %v1332
    %v1334 = vand.u32 %v174, 4294901760
    %1335 = vmatpush.msra.mxu0 %v1334
    %v1336 = vand.u32 %v166, 4294901760
    %1337 = vmatpush.msra.mxu0 %v1336
    %v1338 = vand.u32 %v158, 4294901760
    %1339 = vmatpush.msra.mxu0 %v1338
    %v1340 = vand.u32 %v28, 4294901760
    %v1341 = vsub.f32 %v28, %v1340
    %v1342 = vand.u32 %v1341, 4294901760
    %v1343 = vsub.f32 %v1341, %v1342
    %v1344 = vand.u32 %v1343, 4294901760
    %1345 = vmatmul.f32.gmra.mxu0 %v1344
    %v1346 = vpop.f32.mrf.mxu0
    %v1347 = vadd.f32 %v1306, %v1346
    %1348 = vdwg.mxu0
    %v1349 = vand.u32 %v278, 4294901760
    %v1350 = vsub.f32 %v278, %v1349
    %v1351 = vand.u32 %v1350, 4294901760
    %v1352 = vsub.f32 %v1350, %v1351
    %v1353 = vand.u32 %v1352, 4294901760
    %1354 = vmatpush.msra.mxu0 %v1353
    %v1355 = vand.u32 %v270, 4294901760
    %v1356 = vsub.f32 %v270, %v1355
    %v1357 = vand.u32 %v1356, 4294901760
    %v1358 = vsub.f32 %v1356, %v1357
    %v1359 = vand.u32 %v1358, 4294901760
    %1360 = vmatpush.msra.mxu0 %v1359
    %v1361 = vand.u32 %v262, 4294901760
    %v1362 = vsub.f32 %v262, %v1361
    %v1363 = vand.u32 %v1362, 4294901760
    %v1364 = vsub.f32 %v1362, %v1363
    %v1365 = vand.u32 %v1364, 4294901760
    %1366 = vmatpush.msra.mxu0 %v1365
    %v1367 = vand.u32 %v254, 4294901760
    %v1368 = vsub.f32 %v254, %v1367
    %v1369 = vand.u32 %v1368, 4294901760
    %v1370 = vsub.f32 %v1368, %v1369
    %v1371 = vand.u32 %v1370, 4294901760
    %1372 = vmatpush.msra.mxu0 %v1371
    %v1373 = vand.u32 %v246, 4294901760
    %v1374 = vsub.f32 %v246, %v1373
    %v1375 = vand.u32 %v1374, 4294901760
    %v1376 = vsub.f32 %v1374, %v1375
    %v1377 = vand.u32 %v1376, 4294901760
    %1378 = vmatpush.msra.mxu0 %v1377
    %v1379 = vand.u32 %v238, 4294901760
    %v1380 = vsub.f32 %v238, %v1379
    %v1381 = vand.u32 %v1380, 4294901760
    %v1382 = vsub.f32 %v1380, %v1381
    %v1383 = vand.u32 %v1382, 4294901760
    %1384 = vmatpush.msra.mxu0 %v1383
    %v1385 = vand.u32 %v230, 4294901760
    %v1386 = vsub.f32 %v230, %v1385
    %v1387 = vand.u32 %v1386, 4294901760
    %v1388 = vsub.f32 %v1386, %v1387
    %v1389 = vand.u32 %v1388, 4294901760
    %1390 = vmatpush.msra.mxu0 %v1389
    %v1391 = vand.u32 %v222, 4294901760
    %v1392 = vsub.f32 %v222, %v1391
    %v1393 = vand.u32 %v1392, 4294901760
    %v1394 = vsub.f32 %v1392, %v1393
    %v1395 = vand.u32 %v1394, 4294901760
    %1396 = vmatpush.msra.mxu0 %v1395
    %v1397 = vand.u32 %v214, 4294901760
    %v1398 = vsub.f32 %v214, %v1397
    %v1399 = vand.u32 %v1398, 4294901760
    %v1400 = vsub.f32 %v1398, %v1399
    %v1401 = vand.u32 %v1400, 4294901760
    %1402 = vmatpush.msra.mxu0 %v1401
    %v1403 = vand.u32 %v206, 4294901760
    %v1404 = vsub.f32 %v206, %v1403
    %v1405 = vand.u32 %v1404, 4294901760
    %v1406 = vsub.f32 %v1404, %v1405
    %v1407 = vand.u32 %v1406, 4294901760
    %1408 = vmatpush.msra.mxu0 %v1407
    %v1409 = vand.u32 %v198, 4294901760
    %v1410 = vsub.f32 %v198, %v1409
    %v1411 = vand.u32 %v1410, 4294901760
    %v1412 = vsub.f32 %v1410, %v1411
    %v1413 = vand.u32 %v1412, 4294901760
    %1414 = vmatpush.msra.mxu0 %v1413
    %v1415 = vand.u32 %v190, 4294901760
    %v1416 = vsub.f32 %v190, %v1415
    %v1417 = vand.u32 %v1416, 4294901760
    %v1418 = vsub.f32 %v1416, %v1417
    %v1419 = vand.u32 %v1418, 4294901760
    %1420 = vmatpush.msra.mxu0 %v1419
    %v1421 = vand.u32 %v182, 4294901760
    %v1422 = vsub.f32 %v182, %v1421
    %v1423 = vand.u32 %v1422, 4294901760
    %v1424 = vsub.f32 %v1422, %v1423
    %v1425 = vand.u32 %v1424, 4294901760
    %1426 = vmatpush.msra.mxu0 %v1425
    %v1427 = vand.u32 %v174, 4294901760
    %v1428 = vsub.f32 %v174, %v1427
    %v1429 = vand.u32 %v1428, 4294901760
    %v1430 = vsub.f32 %v1428, %v1429
    %v1431 = vand.u32 %v1430, 4294901760
    %1432 = vmatpush.msra.mxu0 %v1431
    %v1433 = vand.u32 %v166, 4294901760
    %v1434 = vsub.f32 %v166, %v1433
    %v1435 = vand.u32 %v1434, 4294901760
    %v1436 = vsub.f32 %v1434, %v1435
    %v1437 = vand.u32 %v1436, 4294901760
    %1438 = vmatpush.msra.mxu0 %v1437
    %v1439 = vand.u32 %v158, 4294901760
    %v1440 = vsub.f32 %v158, %v1439
    %v1441 = vand.u32 %v1440, 4294901760
    %v1442 = vsub.f32 %v1440, %v1441
    %v1443 = vand.u32 %v1442, 4294901760
    %1444 = vmatpush.msra.mxu0 %v1443
    %v1445 = vand.u32 %v28, 4294901760
    %1446 = vmatmul.f32.gmra.mxu0 %v1445
    %v1447 = vpop.f32.mrf.mxu0
    %v1448 = vadd.f32 %v1347, %v1447
    %1449 = vdwg.mxu0
    %v1450 = vand.u32 %v278, 4294901760
    %v1451 = vsub.f32 %v278, %v1450
    %1452 = vmatpush.msra.mxu0 %v1451
    %v1453 = vand.u32 %v270, 4294901760
    %v1454 = vsub.f32 %v270, %v1453
    %1455 = vmatpush.msra.mxu0 %v1454
    %v1456 = vand.u32 %v262, 4294901760
    %v1457 = vsub.f32 %v262, %v1456
    %1458 = vmatpush.msra.mxu0 %v1457
    %v1459 = vand.u32 %v254, 4294901760
    %v1460 = vsub.f32 %v254, %v1459
    %1461 = vmatpush.msra.mxu0 %v1460
    %v1462 = vand.u32 %v246, 4294901760
    %v1463 = vsub.f32 %v246, %v1462
    %1464 = vmatpush.msra.mxu0 %v1463
    %v1465 = vand.u32 %v238, 4294901760
    %v1466 = vsub.f32 %v238, %v1465
    %1467 = vmatpush.msra.mxu0 %v1466
    %v1468 = vand.u32 %v230, 4294901760
    %v1469 = vsub.f32 %v230, %v1468
    %1470 = vmatpush.msra.mxu0 %v1469
    %v1471 = vand.u32 %v222, 4294901760
    %v1472 = vsub.f32 %v222, %v1471
    %1473 = vmatpush.msra.mxu0 %v1472
    %v1474 = vand.u32 %v214, 4294901760
    %v1475 = vsub.f32 %v214, %v1474
    %1476 = vmatpush.msra.mxu0 %v1475
    %v1477 = vand.u32 %v206, 4294901760
    %v1478 = vsub.f32 %v206, %v1477
    %1479 = vmatpush.msra.mxu0 %v1478
    %v1480 = vand.u32 %v198, 4294901760
    %v1481 = vsub.f32 %v198, %v1480
    %1482 = vmatpush.msra.mxu0 %v1481
    %v1483 = vand.u32 %v190, 4294901760
    %v1484 = vsub.f32 %v190, %v1483
    %1485 = vmatpush.msra.mxu0 %v1484
    %v1486 = vand.u32 %v182, 4294901760
    %v1487 = vsub.f32 %v182, %v1486
    %1488 = vmatpush.msra.mxu0 %v1487
    %v1489 = vand.u32 %v174, 4294901760
    %v1490 = vsub.f32 %v174, %v1489
    %1491 = vmatpush.msra.mxu0 %v1490
    %v1492 = vand.u32 %v166, 4294901760
    %v1493 = vsub.f32 %v166, %v1492
    %1494 = vmatpush.msra.mxu0 %v1493
    %v1495 = vand.u32 %v158, 4294901760
    %v1496 = vsub.f32 %v158, %v1495
    %1497 = vmatpush.msra.mxu0 %v1496
    %v1498 = vand.u32 %v28, 4294901760
    %v1499 = vsub.f32 %v28, %v1498
    %1500 = vmatmul.f32.gmra.mxu0 %v1499
    %v1501 = vpop.f32.mrf.mxu0
    %v1502 = vadd.f32 %v1448, %v1501
    %1503 = vdwg.mxu0
    %v1504 = vand.u32 %v278, 4294901760
    %1505 = vmatpush.msra.mxu0 %v1504
    %v1506 = vand.u32 %v270, 4294901760
    %1507 = vmatpush.msra.mxu0 %v1506
    %v1508 = vand.u32 %v262, 4294901760
    %1509 = vmatpush.msra.mxu0 %v1508
    %v1510 = vand.u32 %v254, 4294901760
    %1511 = vmatpush.msra.mxu0 %v1510
    %v1512 = vand.u32 %v246, 4294901760
    %1513 = vmatpush.msra.mxu0 %v1512
    %v1514 = vand.u32 %v238, 4294901760
    %1515 = vmatpush.msra.mxu0 %v1514
    %v1516 = vand.u32 %v230, 4294901760
    %1517 = vmatpush.msra.mxu0 %v1516
    %v1518 = vand.u32 %v222, 4294901760
    %1519 = vmatpush.msra.mxu0 %v1518
    %v1520 = vand.u32 %v214, 4294901760
    %1521 = vmatpush.msra.mxu0 %v1520
    %v1522 = vand.u32 %v206, 4294901760
    %1523 = vmatpush.msra.mxu0 %v1522
    %v1524 = vand.u32 %v198, 4294901760
    %1525 = vmatpush.msra.mxu0 %v1524
    %v1526 = vand.u32 %v190, 4294901760
    %1527 = vmatpush.msra.mxu0 %v1526
    %v1528 = vand.u32 %v182, 4294901760
    %1529 = vmatpush.msra.mxu0 %v1528
    %v1530 = vand.u32 %v174, 4294901760
    %1531 = vmatpush.msra.mxu0 %v1530
    %v1532 = vand.u32 %v166, 4294901760
    %1533 = vmatpush.msra.mxu0 %v1532
    %v1534 = vand.u32 %v158, 4294901760
    %1535 = vmatpush.msra.mxu0 %v1534
    %v1536 = vand.u32 %v28, 4294901760
    %v1537 = vsub.f32 %v28, %v1536
    %v1538 = vand.u32 %v1537, 4294901760
    %1539 = vmatmul.f32.gmra.mxu0 %v1538
    %v1540 = vpop.f32.mrf.mxu0
    %v1541 = vadd.f32 %v1502, %v1540
    %1542 = vdwg.mxu0
    %v1543 = vand.u32 %v278, 4294901760
    %v1544 = vsub.f32 %v278, %v1543
    %v1545 = vand.u32 %v1544, 4294901760
    %1546 = vmatpush.msra.mxu0 %v1545
    %v1547 = vand.u32 %v270, 4294901760
    %v1548 = vsub.f32 %v270, %v1547
    %v1549 = vand.u32 %v1548, 4294901760
    %1550 = vmatpush.msra.mxu0 %v1549
    %v1551 = vand.u32 %v262, 4294901760
    %v1552 = vsub.f32 %v262, %v1551
    %v1553 = vand.u32 %v1552, 4294901760
    %1554 = vmatpush.msra.mxu0 %v1553
    %v1555 = vand.u32 %v254, 4294901760
    %v1556 = vsub.f32 %v254, %v1555
    %v1557 = vand.u32 %v1556, 4294901760
    %1558 = vmatpush.msra.mxu0 %v1557
    %v1559 = vand.u32 %v246, 4294901760
    %v1560 = vsub.f32 %v246, %v1559
    %v1561 = vand.u32 %v1560, 4294901760
    %1562 = vmatpush.msra.mxu0 %v1561
    %v1563 = vand.u32 %v238, 4294901760
    %v1564 = vsub.f32 %v238, %v1563
    %v1565 = vand.u32 %v1564, 4294901760
    %1566 = vmatpush.msra.mxu0 %v1565
    %v1567 = vand.u32 %v230, 4294901760
    %v1568 = vsub.f32 %v230, %v1567
    %v1569 = vand.u32 %v1568, 4294901760
    %1570 = vmatpush.msra.mxu0 %v1569
    %v1571 = vand.u32 %v222, 4294901760
    %v1572 = vsub.f32 %v222, %v1571
    %v1573 = vand.u32 %v1572, 4294901760
    %1574 = vmatpush.msra.mxu0 %v1573
    %v1575 = vand.u32 %v214, 4294901760
    %v1576 = vsub.f32 %v214, %v1575
    %v1577 = vand.u32 %v1576, 4294901760
    %1578 = vmatpush.msra.mxu0 %v1577
    %v1579 = vand.u32 %v206, 4294901760
    %v1580 = vsub.f32 %v206, %v1579
    %v1581 = vand.u32 %v1580, 4294901760
    %1582 = vmatpush.msra.mxu0 %v1581
    %v1583 = vand.u32 %v198, 4294901760
    %v1584 = vsub.f32 %v198, %v1583
    %v1585 = vand.u32 %v1584, 4294901760
    %1586 = vmatpush.msra.mxu0 %v1585
    %v1587 = vand.u32 %v190, 4294901760
    %v1588 = vsub.f32 %v190, %v1587
    %v1589 = vand.u32 %v1588, 4294901760
    %1590 = vmatpush.msra.mxu0 %v1589
    %v1591 = vand.u32 %v182, 4294901760
    %v1592 = vsub.f32 %v182, %v1591
    %v1593 = vand.u32 %v1592, 4294901760
    %1594 = vmatpush.msra.mxu0 %v1593
    %v1595 = vand.u32 %v174, 4294901760
    %v1596 = vsub.f32 %v174, %v1595
    %v1597 = vand.u32 %v1596, 4294901760
    %1598 = vmatpush.msra.mxu0 %v1597
    %v1599 = vand.u32 %v166, 4294901760
    %v1600 = vsub.f32 %v166, %v1599
    %v1601 = vand.u32 %v1600, 4294901760
    %1602 = vmatpush.msra.mxu0 %v1601
    %v1603 = vand.u32 %v158, 4294901760
    %v1604 = vsub.f32 %v158, %v1603
    %v1605 = vand.u32 %v1604, 4294901760
    %1606 = vmatpush.msra.mxu0 %v1605
    %v1607 = vand.u32 %v28, 4294901760
    %1608 = vmatmul.f32.gmra.mxu0 %v1607
    %v1609 = vpop.f32.mrf.mxu0
    %v1610 = vadd.f32 %v1541, %v1609
    %1611 = vdwg.mxu0
    %v1612 = vand.u32 %v278, 4294901760
    %1613 = vmatpush.msra.mxu0 %v1612
    %v1614 = vand.u32 %v270, 4294901760
    %1615 = vmatpush.msra.mxu0 %v1614
    %v1616 = vand.u32 %v262, 4294901760
    %1617 = vmatpush.msra.mxu0 %v1616
    %v1618 = vand.u32 %v254, 4294901760
    %1619 = vmatpush.msra.mxu0 %v1618
    %v1620 = vand.u32 %v246, 4294901760
    %1621 = vmatpush.msra.mxu0 %v1620
    %v1622 = vand.u32 %v238, 4294901760
    %1623 = vmatpush.msra.mxu0 %v1622
    %v1624 = vand.u32 %v230, 4294901760
    %1625 = vmatpush.msra.mxu0 %v1624
    %v1626 = vand.u32 %v222, 4294901760
    %1627 = vmatpush.msra.mxu0 %v1626
    %v1628 = vand.u32 %v214, 4294901760
    %1629 = vmatpush.msra.mxu0 %v1628
    %v1630 = vand.u32 %v206, 4294901760
    %1631 = vmatpush.msra.mxu0 %v1630
    %v1632 = vand.u32 %v198, 4294901760
    %1633 = vmatpush.msra.mxu0 %v1632
    %v1634 = vand.u32 %v190, 4294901760
    %1635 = vmatpush.msra.mxu0 %v1634
    %v1636 = vand.u32 %v182, 4294901760
    %1637 = vmatpush.msra.mxu0 %v1636
    %v1638 = vand.u32 %v174, 4294901760
    %1639 = vmatpush.msra.mxu0 %v1638
    %v1640 = vand.u32 %v166, 4294901760
    %1641 = vmatpush.msra.mxu0 %v1640
    %v1642 = vand.u32 %v158, 4294901760
    %1643 = vmatpush.msra.mxu0 %v1642
    %v1644 = vand.u32 %v28, 4294901760
    %1645 = vmatmul.f32.gmra.mxu0 %v1644
    %v1646 = vpop.f32.mrf.mxu0
    %v1647 = vadd.f32 %v1610, %v1646
    %1648 = vdwg.mxu0
    %v1649 = vand.u32 %v151, 4294901760
    %1650 = vmatpush.msra.mxu0 %v1649
    %v1651 = vand.u32 %v143, 4294901760
    %1652 = vmatpush.msra.mxu0 %v1651
    %v1653 = vand.u32 %v135, 4294901760
    %1654 = vmatpush.msra.mxu0 %v1653
    %v1655 = vand.u32 %v127, 4294901760
    %1656 = vmatpush.msra.mxu0 %v1655
    %v1657 = vand.u32 %v119, 4294901760
    %1658 = vmatpush.msra.mxu0 %v1657
    %v1659 = vand.u32 %v111, 4294901760
    %1660 = vmatpush.msra.mxu0 %v1659
    %v1661 = vand.u32 %v103, 4294901760
    %1662 = vmatpush.msra.mxu0 %v1661
    %v1663 = vand.u32 %v95, 4294901760
    %1664 = vmatpush.msra.mxu0 %v1663
    %v1665 = vand.u32 %v87, 4294901760
    %1666 = vmatpush.msra.mxu0 %v1665
    %v1667 = vand.u32 %v79, 4294901760
    %1668 = vmatpush.msra.mxu0 %v1667
    %v1669 = vand.u32 %v71, 4294901760
    %1670 = vmatpush.msra.mxu0 %v1669
    %v1671 = vand.u32 %v63, 4294901760
    %1672 = vmatpush.msra.mxu0 %v1671
    %v1673 = vand.u32 %v55, 4294901760
    %1674 = vmatpush.msra.mxu0 %v1673
    %v1675 = vand.u32 %v47, 4294901760
    %1676 = vmatpush.msra.mxu0 %v1675
    %v1677 = vand.u32 %v39, 4294901760
    %1678 = vmatpush.msra.mxu0 %v1677
    %v1679 = vand.u32 %v31, 4294901760
    %1680 = vmatpush.msra.mxu0 %v1679
    %v1681 = vand.u32 %v27, 4294901760
    %v1682 = vsub.f32 %v27, %v1681
    %v1683 = vand.u32 %v1682, 4294901760
    %v1684 = vsub.f32 %v1682, %v1683
    %v1685 = vand.u32 %v1684, 4294901760
    %1686 = vmatmul.f32.gmra.mxu0 %v1685
    %v1687 = vpop.f32.mrf.mxu0
    %v1688 = vadd.f32 0.0, %v1687
    %1689 = vdwg.mxu0
    %v1690 = vand.u32 %v151, 4294901760
    %v1691 = vsub.f32 %v151, %v1690
    %v1692 = vand.u32 %v1691, 4294901760
    %v1693 = vsub.f32 %v1691, %v1692
    %v1694 = vand.u32 %v1693, 4294901760
    %1695 = vmatpush.msra.mxu0 %v1694
    %v1696 = vand.u32 %v143, 4294901760
    %v1697 = vsub.f32 %v143, %v1696
    %v1698 = vand.u32 %v1697, 4294901760
    %v1699 = vsub.f32 %v1697, %v1698
    %v1700 = vand.u32 %v1699, 4294901760
    %1701 = vmatpush.msra.mxu0 %v1700
    %v1702 = vand.u32 %v135, 4294901760
    %v1703 = vsub.f32 %v135, %v1702
    %v1704 = vand.u32 %v1703, 4294901760
    %v1705 = vsub.f32 %v1703, %v1704
    %v1706 = vand.u32 %v1705, 4294901760
    %1707 = vmatpush.msra.mxu0 %v1706
    %v1708 = vand.u32 %v127, 4294901760
    %v1709 = vsub.f32 %v127, %v1708
    %v1710 = vand.u32 %v1709, 4294901760
    %v1711 = vsub.f32 %v1709, %v1710
    %v1712 = vand.u32 %v1711, 4294901760
    %1713 = vmatpush.msra.mxu0 %v1712
    %v1714 = vand.u32 %v119, 4294901760
    %v1715 = vsub.f32 %v119, %v1714
    %v1716 = vand.u32 %v1715, 4294901760
    %v1717 = vsub.f32 %v1715, %v1716
    %v1718 = vand.u32 %v1717, 4294901760
    %1719 = vmatpush.msra.mxu0 %v1718
    %v1720 = vand.u32 %v111, 4294901760
    %v1721 = vsub.f32 %v111, %v1720
    %v1722 = vand.u32 %v1721, 4294901760
    %v1723 = vsub.f32 %v1721, %v1722
    %v1724 = vand.u32 %v1723, 4294901760
    %1725 = vmatpush.msra.mxu0 %v1724
    %v1726 = vand.u32 %v103, 4294901760
    %v1727 = vsub.f32 %v103, %v1726
    %v1728 = vand.u32 %v1727, 4294901760
    %v1729 = vsub.f32 %v1727, %v1728
    %v1730 = vand.u32 %v1729, 4294901760
    %1731 = vmatpush.msra.mxu0 %v1730
    %v1732 = vand.u32 %v95, 4294901760
    %v1733 = vsub.f32 %v95, %v1732
    %v1734 = vand.u32 %v1733, 4294901760
    %v1735 = vsub.f32 %v1733, %v1734
    %v1736 = vand.u32 %v1735, 4294901760
    %1737 = vmatpush.msra.mxu0 %v1736
    %v1738 = vand.u32 %v87, 4294901760
    %v1739 = vsub.f32 %v87, %v1738
    %v1740 = vand.u32 %v1739, 4294901760
    %v1741 = vsub.f32 %v1739, %v1740
    %v1742 = vand.u32 %v1741, 4294901760
    %1743 = vmatpush.msra.mxu0 %v1742
    %v1744 = vand.u32 %v79, 4294901760
    %v1745 = vsub.f32 %v79, %v1744
    %v1746 = vand.u32 %v1745, 4294901760
    %v1747 = vsub.f32 %v1745, %v1746
    %v1748 = vand.u32 %v1747, 4294901760
    %1749 = vmatpush.msra.mxu0 %v1748
    %v1750 = vand.u32 %v71, 4294901760
    %v1751 = vsub.f32 %v71, %v1750
    %v1752 = vand.u32 %v1751, 4294901760
    %v1753 = vsub.f32 %v1751, %v1752
    %v1754 = vand.u32 %v1753, 4294901760
    %1755 = vmatpush.msra.mxu0 %v1754
    %v1756 = vand.u32 %v63, 4294901760
    %v1757 = vsub.f32 %v63, %v1756
    %v1758 = vand.u32 %v1757, 4294901760
    %v1759 = vsub.f32 %v1757, %v1758
    %v1760 = vand.u32 %v1759, 4294901760
    %1761 = vmatpush.msra.mxu0 %v1760
    %v1762 = vand.u32 %v55, 4294901760
    %v1763 = vsub.f32 %v55, %v1762
    %v1764 = vand.u32 %v1763, 4294901760
    %v1765 = vsub.f32 %v1763, %v1764
    %v1766 = vand.u32 %v1765, 4294901760
    %1767 = vmatpush.msra.mxu0 %v1766
    %v1768 = vand.u32 %v47, 4294901760
    %v1769 = vsub.f32 %v47, %v1768
    %v1770 = vand.u32 %v1769, 4294901760
    %v1771 = vsub.f32 %v1769, %v1770
    %v1772 = vand.u32 %v1771, 4294901760
    %1773 = vmatpush.msra.mxu0 %v1772
    %v1774 = vand.u32 %v39, 4294901760
    %v1775 = vsub.f32 %v39, %v1774
    %v1776 = vand.u32 %v1775, 4294901760
    %v1777 = vsub.f32 %v1775, %v1776
    %v1778 = vand.u32 %v1777, 4294901760
    %1779 = vmatpush.msra.mxu0 %v1778
    %v1780 = vand.u32 %v31, 4294901760
    %v1781 = vsub.f32 %v31, %v1780
    %v1782 = vand.u32 %v1781, 4294901760
    %v1783 = vsub.f32 %v1781, %v1782
    %v1784 = vand.u32 %v1783, 4294901760
    %1785 = vmatpush.msra.mxu0 %v1784
    %v1786 = vand.u32 %v27, 4294901760
    %1787 = vmatmul.f32.gmra.mxu0 %v1786
    %v1788 = vpop.f32.mrf.mxu0
    %v1789 = vadd.f32 %v1688, %v1788
    %1790 = vdwg.mxu0
    %v1791 = vand.u32 %v151, 4294901760
    %v1792 = vsub.f32 %v151, %v1791
    %1793 = vmatpush.msra.mxu0 %v1792
    %v1794 = vand.u32 %v143, 4294901760
    %v1795 = vsub.f32 %v143, %v1794
    %1796 = vmatpush.msra.mxu0 %v1795
    %v1797 = vand.u32 %v135, 4294901760
    %v1798 = vsub.f32 %v135, %v1797
    %1799 = vmatpush.msra.mxu0 %v1798
    %v1800 = vand.u32 %v127, 4294901760
    %v1801 = vsub.f32 %v127, %v1800
    %1802 = vmatpush.msra.mxu0 %v1801
    %v1803 = vand.u32 %v119, 4294901760
    %v1804 = vsub.f32 %v119, %v1803
    %1805 = vmatpush.msra.mxu0 %v1804
    %v1806 = vand.u32 %v111, 4294901760
    %v1807 = vsub.f32 %v111, %v1806
    %1808 = vmatpush.msra.mxu0 %v1807
    %v1809 = vand.u32 %v103, 4294901760
    %v1810 = vsub.f32 %v103, %v1809
    %1811 = vmatpush.msra.mxu0 %v1810
    %v1812 = vand.u32 %v95, 4294901760
    %v1813 = vsub.f32 %v95, %v1812
    %1814 = vmatpush.msra.mxu0 %v1813
    %v1815 = vand.u32 %v87, 4294901760
    %v1816 = vsub.f32 %v87, %v1815
    %1817 = vmatpush.msra.mxu0 %v1816
    %v1818 = vand.u32 %v79, 4294901760
    %v1819 = vsub.f32 %v79, %v1818
    %1820 = vmatpush.msra.mxu0 %v1819
    %v1821 = vand.u32 %v71, 4294901760
    %v1822 = vsub.f32 %v71, %v1821
    %1823 = vmatpush.msra.mxu0 %v1822
    %v1824 = vand.u32 %v63, 4294901760
    %v1825 = vsub.f32 %v63, %v1824
    %1826 = vmatpush.msra.mxu0 %v1825
    %v1827 = vand.u32 %v55, 4294901760
    %v1828 = vsub.f32 %v55, %v1827
    %1829 = vmatpush.msra.mxu0 %v1828
    %v1830 = vand.u32 %v47, 4294901760
    %v1831 = vsub.f32 %v47, %v1830
    %1832 = vmatpush.msra.mxu0 %v1831
    %v1833 = vand.u32 %v39, 4294901760
    %v1834 = vsub.f32 %v39, %v1833
    %1835 = vmatpush.msra.mxu0 %v1834
    %v1836 = vand.u32 %v31, 4294901760
    %v1837 = vsub.f32 %v31, %v1836
    %1838 = vmatpush.msra.mxu0 %v1837
    %v1839 = vand.u32 %v27, 4294901760
    %v1840 = vsub.f32 %v27, %v1839
    %1841 = vmatmul.f32.gmra.mxu0 %v1840
    %v1842 = vpop.f32.mrf.mxu0
    %v1843 = vadd.f32 %v1789, %v1842
    %1844 = vdwg.mxu0
    %v1845 = vand.u32 %v151, 4294901760
    %1846 = vmatpush.msra.mxu0 %v1845
    %v1847 = vand.u32 %v143, 4294901760
    %1848 = vmatpush.msra.mxu0 %v1847
    %v1849 = vand.u32 %v135, 4294901760
    %1850 = vmatpush.msra.mxu0 %v1849
    %v1851 = vand.u32 %v127, 4294901760
    %1852 = vmatpush.msra.mxu0 %v1851
    %v1853 = vand.u32 %v119, 4294901760
    %1854 = vmatpush.msra.mxu0 %v1853
    %v1855 = vand.u32 %v111, 4294901760
    %1856 = vmatpush.msra.mxu0 %v1855
    %v1857 = vand.u32 %v103, 4294901760
    %1858 = vmatpush.msra.mxu0 %v1857
    %v1859 = vand.u32 %v95, 4294901760
    %1860 = vmatpush.msra.mxu0 %v1859
    %v1861 = vand.u32 %v87, 4294901760
    %1862 = vmatpush.msra.mxu0 %v1861
    %v1863 = vand.u32 %v79, 4294901760
    %1864 = vmatpush.msra.mxu0 %v1863
    %v1865 = vand.u32 %v71, 4294901760
    %1866 = vmatpush.msra.mxu0 %v1865
    %v1867 = vand.u32 %v63, 4294901760
    %1868 = vmatpush.msra.mxu0 %v1867
    %v1869 = vand.u32 %v55, 4294901760
    %1870 = vmatpush.msra.mxu0 %v1869
    %v1871 = vand.u32 %v47, 4294901760
    %1872 = vmatpush.msra.mxu0 %v1871
    %v1873 = vand.u32 %v39, 4294901760
    %1874 = vmatpush.msra.mxu0 %v1873
    %v1875 = vand.u32 %v31, 4294901760
    %1876 = vmatpush.msra.mxu0 %v1875
    %v1877 = vand.u32 %v27, 4294901760
    %v1878 = vsub.f32 %v27, %v1877
    %v1879 = vand.u32 %v1878, 4294901760
    %1880 = vmatmul.f32.gmra.mxu0 %v1879
    %v1881 = vpop.f32.mrf.mxu0
    %v1882 = vadd.f32 %v1843, %v1881
    %1883 = vdwg.mxu0
    %v1884 = vand.u32 %v151, 4294901760
    %v1885 = vsub.f32 %v151, %v1884
    %v1886 = vand.u32 %v1885, 4294901760
    %1887 = vmatpush.msra.mxu0 %v1886
    %v1888 = vand.u32 %v143, 4294901760
    %v1889 = vsub.f32 %v143, %v1888
    %v1890 = vand.u32 %v1889, 4294901760
    %1891 = vmatpush.msra.mxu0 %v1890
    %v1892 = vand.u32 %v135, 4294901760
    %v1893 = vsub.f32 %v135, %v1892
    %v1894 = vand.u32 %v1893, 4294901760
    %1895 = vmatpush.msra.mxu0 %v1894
    %v1896 = vand.u32 %v127, 4294901760
    %v1897 = vsub.f32 %v127, %v1896
    %v1898 = vand.u32 %v1897, 4294901760
    %1899 = vmatpush.msra.mxu0 %v1898
    %v1900 = vand.u32 %v119, 4294901760
    %v1901 = vsub.f32 %v119, %v1900
    %v1902 = vand.u32 %v1901, 4294901760
    %1903 = vmatpush.msra.mxu0 %v1902
    %v1904 = vand.u32 %v111, 4294901760
    %v1905 = vsub.f32 %v111, %v1904
    %v1906 = vand.u32 %v1905, 4294901760
    %1907 = vmatpush.msra.mxu0 %v1906
    %v1908 = vand.u32 %v103, 4294901760
    %v1909 = vsub.f32 %v103, %v1908
    %v1910 = vand.u32 %v1909, 4294901760
    %1911 = vmatpush.msra.mxu0 %v1910
    %v1912 = vand.u32 %v95, 4294901760
    %v1913 = vsub.f32 %v95, %v1912
    %v1914 = vand.u32 %v1913, 4294901760
    %1915 = vmatpush.msra.mxu0 %v1914
    %v1916 = vand.u32 %v87, 4294901760
    %v1917 = vsub.f32 %v87, %v1916
    %v1918 = vand.u32 %v1917, 4294901760
    %1919 = vmatpush.msra.mxu0 %v1918
    %v1920 = vand.u32 %v79, 4294901760
    %v1921 = vsub.f32 %v79, %v1920
    %v1922 = vand.u32 %v1921, 4294901760
    %1923 = vmatpush.msra.mxu0 %v1922
    %v1924 = vand.u32 %v71, 4294901760
    %v1925 = vsub.f32 %v71, %v1924
    %v1926 = vand.u32 %v1925, 4294901760
    %1927 = vmatpush.msra.mxu0 %v1926
    %v1928 = vand.u32 %v63, 4294901760
    %v1929 = vsub.f32 %v63, %v1928
    %v1930 = vand.u32 %v1929, 4294901760
    %1931 = vmatpush.msra.mxu0 %v1930
    %v1932 = vand.u32 %v55, 4294901760
    %v1933 = vsub.f32 %v55, %v1932
    %v1934 = vand.u32 %v1933, 4294901760
    %1935 = vmatpush.msra.mxu0 %v1934
    %v1936 = vand.u32 %v47, 4294901760
    %v1937 = vsub.f32 %v47, %v1936
    %v1938 = vand.u32 %v1937, 4294901760
    %1939 = vmatpush.msra.mxu0 %v1938
    %v1940 = vand.u32 %v39, 4294901760
    %v1941 = vsub.f32 %v39, %v1940
    %v1942 = vand.u32 %v1941, 4294901760
    %1943 = vmatpush.msra.mxu0 %v1942
    %v1944 = vand.u32 %v31, 4294901760
    %v1945 = vsub.f32 %v31, %v1944
    %v1946 = vand.u32 %v1945, 4294901760
    %1947 = vmatpush.msra.mxu0 %v1946
    %v1948 = vand.u32 %v27, 4294901760
    %1949 = vmatmul.f32.gmra.mxu0 %v1948
    %v1950 = vpop.f32.mrf.mxu0
    %v1951 = vadd.f32 %v1882, %v1950
    %1952 = vdwg.mxu0
    %v1953 = vand.u32 %v151, 4294901760
    %1954 = vmatpush.msra.mxu0 %v1953
    %v1955 = vand.u32 %v143, 4294901760
    %1956 = vmatpush.msra.mxu0 %v1955
    %v1957 = vand.u32 %v135, 4294901760
    %1958 = vmatpush.msra.mxu0 %v1957
    %v1959 = vand.u32 %v127, 4294901760
    %1960 = vmatpush.msra.mxu0 %v1959
    %v1961 = vand.u32 %v119, 4294901760
    %1962 = vmatpush.msra.mxu0 %v1961
    %v1963 = vand.u32 %v111, 4294901760
    %1964 = vmatpush.msra.mxu0 %v1963
    %v1965 = vand.u32 %v103, 4294901760
    %1966 = vmatpush.msra.mxu0 %v1965
    %v1967 = vand.u32 %v95, 4294901760
    %1968 = vmatpush.msra.mxu0 %v1967
    %v1969 = vand.u32 %v87, 4294901760
    %1970 = vmatpush.msra.mxu0 %v1969
    %v1971 = vand.u32 %v79, 4294901760
    %1972 = vmatpush.msra.mxu0 %v1971
    %v1973 = vand.u32 %v71, 4294901760
    %1974 = vmatpush.msra.mxu0 %v1973
    %v1975 = vand.u32 %v63, 4294901760
    %1976 = vmatpush.msra.mxu0 %v1975
    %v1977 = vand.u32 %v55, 4294901760
    %1978 = vmatpush.msra.mxu0 %v1977
    %v1979 = vand.u32 %v47, 4294901760
    %1980 = vmatpush.msra.mxu0 %v1979
    %v1981 = vand.u32 %v39, 4294901760
    %1982 = vmatpush.msra.mxu0 %v1981
    %v1983 = vand.u32 %v31, 4294901760
    %1984 = vmatpush.msra.mxu0 %v1983
    %v1985 = vand.u32 %v27, 4294901760
    %1986 = vmatmul.f32.gmra.mxu0 %v1985
    %v1987 = vpop.f32.mrf.mxu0
    %v1988 = vadd.f32 %v1951, %v1987
    %1989 = vdwg.mxu0
    %v1990 = vand.u32 %v279, 4294901760
    %1991 = vmatpush.msra.mxu0 %v1990
    %v1992 = vand.u32 %v271, 4294901760
    %1993 = vmatpush.msra.mxu0 %v1992
    %v1994 = vand.u32 %v263, 4294901760
    %1995 = vmatpush.msra.mxu0 %v1994
    %v1996 = vand.u32 %v255, 4294901760
    %1997 = vmatpush.msra.mxu0 %v1996
    %v1998 = vand.u32 %v247, 4294901760
    %1999 = vmatpush.msra.mxu0 %v1998
    %v2000 = vand.u32 %v239, 4294901760
    %2001 = vmatpush.msra.mxu0 %v2000
    %v2002 = vand.u32 %v231, 4294901760
    %2003 = vmatpush.msra.mxu0 %v2002
    %v2004 = vand.u32 %v223, 4294901760
    %2005 = vmatpush.msra.mxu0 %v2004
    %v2006 = vand.u32 %v215, 4294901760
    %2007 = vmatpush.msra.mxu0 %v2006
    %v2008 = vand.u32 %v207, 4294901760
    %2009 = vmatpush.msra.mxu0 %v2008
    %v2010 = vand.u32 %v199, 4294901760
    %2011 = vmatpush.msra.mxu0 %v2010
    %v2012 = vand.u32 %v191, 4294901760
    %2013 = vmatpush.msra.mxu0 %v2012
    %v2014 = vand.u32 %v183, 4294901760
    %2015 = vmatpush.msra.mxu0 %v2014
    %v2016 = vand.u32 %v175, 4294901760
    %2017 = vmatpush.msra.mxu0 %v2016
    %v2018 = vand.u32 %v167, 4294901760
    %2019 = vmatpush.msra.mxu0 %v2018
    %v2020 = vand.u32 %v159, 4294901760
    %2021 = vmatpush.msra.mxu0 %v2020
    %v2022 = vand.u32 %v28, 4294901760
    %v2023 = vsub.f32 %v28, %v2022
    %v2024 = vand.u32 %v2023, 4294901760
    %v2025 = vsub.f32 %v2023, %v2024
    %v2026 = vand.u32 %v2025, 4294901760
    %2027 = vmatmul.f32.gmra.mxu0 %v2026
    %v2028 = vpop.f32.mrf.mxu0
    %v2029 = vadd.f32 %v1988, %v2028
    %2030 = vdwg.mxu0
    %v2031 = vand.u32 %v279, 4294901760
    %v2032 = vsub.f32 %v279, %v2031
    %v2033 = vand.u32 %v2032, 4294901760
    %v2034 = vsub.f32 %v2032, %v2033
    %v2035 = vand.u32 %v2034, 4294901760
    %2036 = vmatpush.msra.mxu0 %v2035
    %v2037 = vand.u32 %v271, 4294901760
    %v2038 = vsub.f32 %v271, %v2037
    %v2039 = vand.u32 %v2038, 4294901760
    %v2040 = vsub.f32 %v2038, %v2039
    %v2041 = vand.u32 %v2040, 4294901760
    %2042 = vmatpush.msra.mxu0 %v2041
    %v2043 = vand.u32 %v263, 4294901760
    %v2044 = vsub.f32 %v263, %v2043
    %v2045 = vand.u32 %v2044, 4294901760
    %v2046 = vsub.f32 %v2044, %v2045
    %v2047 = vand.u32 %v2046, 4294901760
    %2048 = vmatpush.msra.mxu0 %v2047
    %v2049 = vand.u32 %v255, 4294901760
    %v2050 = vsub.f32 %v255, %v2049
    %v2051 = vand.u32 %v2050, 4294901760
    %v2052 = vsub.f32 %v2050, %v2051
    %v2053 = vand.u32 %v2052, 4294901760
    %2054 = vmatpush.msra.mxu0 %v2053
    %v2055 = vand.u32 %v247, 4294901760
    %v2056 = vsub.f32 %v247, %v2055
    %v2057 = vand.u32 %v2056, 4294901760
    %v2058 = vsub.f32 %v2056, %v2057
    %v2059 = vand.u32 %v2058, 4294901760
    %2060 = vmatpush.msra.mxu0 %v2059
    %v2061 = vand.u32 %v239, 4294901760
    %v2062 = vsub.f32 %v239, %v2061
    %v2063 = vand.u32 %v2062, 4294901760
    %v2064 = vsub.f32 %v2062, %v2063
    %v2065 = vand.u32 %v2064, 4294901760
    %2066 = vmatpush.msra.mxu0 %v2065
    %v2067 = vand.u32 %v231, 4294901760
    %v2068 = vsub.f32 %v231, %v2067
    %v2069 = vand.u32 %v2068, 4294901760
    %v2070 = vsub.f32 %v2068, %v2069
    %v2071 = vand.u32 %v2070, 4294901760
    %2072 = vmatpush.msra.mxu0 %v2071
    %v2073 = vand.u32 %v223, 4294901760
    %v2074 = vsub.f32 %v223, %v2073
    %v2075 = vand.u32 %v2074, 4294901760
    %v2076 = vsub.f32 %v2074, %v2075
    %v2077 = vand.u32 %v2076, 4294901760
    %2078 = vmatpush.msra.mxu0 %v2077
    %v2079 = vand.u32 %v215, 4294901760
    %v2080 = vsub.f32 %v215, %v2079
    %v2081 = vand.u32 %v2080, 4294901760
    %v2082 = vsub.f32 %v2080, %v2081
    %v2083 = vand.u32 %v2082, 4294901760
    %2084 = vmatpush.msra.mxu0 %v2083
    %v2085 = vand.u32 %v207, 4294901760
    %v2086 = vsub.f32 %v207, %v2085
    %v2087 = vand.u32 %v2086, 4294901760
    %v2088 = vsub.f32 %v2086, %v2087
    %v2089 = vand.u32 %v2088, 4294901760
    %2090 = vmatpush.msra.mxu0 %v2089
    %v2091 = vand.u32 %v199, 4294901760
    %v2092 = vsub.f32 %v199, %v2091
    %v2093 = vand.u32 %v2092, 4294901760
    %v2094 = vsub.f32 %v2092, %v2093
    %v2095 = vand.u32 %v2094, 4294901760
    %2096 = vmatpush.msra.mxu0 %v2095
    %v2097 = vand.u32 %v191, 4294901760
    %v2098 = vsub.f32 %v191, %v2097
    %v2099 = vand.u32 %v2098, 4294901760
    %v2100 = vsub.f32 %v2098, %v2099
    %v2101 = vand.u32 %v2100, 4294901760
    %2102 = vmatpush.msra.mxu0 %v2101
    %v2103 = vand.u32 %v183, 4294901760
    %v2104 = vsub.f32 %v183, %v2103
    %v2105 = vand.u32 %v2104, 4294901760
    %v2106 = vsub.f32 %v2104, %v2105
    %v2107 = vand.u32 %v2106, 4294901760
    %2108 = vmatpush.msra.mxu0 %v2107
    %v2109 = vand.u32 %v175, 4294901760
    %v2110 = vsub.f32 %v175, %v2109
    %v2111 = vand.u32 %v2110, 4294901760
    %v2112 = vsub.f32 %v2110, %v2111
    %v2113 = vand.u32 %v2112, 4294901760
    %2114 = vmatpush.msra.mxu0 %v2113
    %v2115 = vand.u32 %v167, 4294901760
    %v2116 = vsub.f32 %v167, %v2115
    %v2117 = vand.u32 %v2116, 4294901760
    %v2118 = vsub.f32 %v2116, %v2117
    %v2119 = vand.u32 %v2118, 4294901760
    %2120 = vmatpush.msra.mxu0 %v2119
    %v2121 = vand.u32 %v159, 4294901760
    %v2122 = vsub.f32 %v159, %v2121
    %v2123 = vand.u32 %v2122, 4294901760
    %v2124 = vsub.f32 %v2122, %v2123
    %v2125 = vand.u32 %v2124, 4294901760
    %2126 = vmatpush.msra.mxu0 %v2125
    %v2127 = vand.u32 %v28, 4294901760
    %2128 = vmatmul.f32.gmra.mxu0 %v2127
    %v2129 = vpop.f32.mrf.mxu0
    %v2130 = vadd.f32 %v2029, %v2129
    %2131 = vdwg.mxu0
    %v2132 = vand.u32 %v279, 4294901760
    %v2133 = vsub.f32 %v279, %v2132
    %2134 = vmatpush.msra.mxu0 %v2133
    %v2135 = vand.u32 %v271, 4294901760
    %v2136 = vsub.f32 %v271, %v2135
    %2137 = vmatpush.msra.mxu0 %v2136
    %v2138 = vand.u32 %v263, 4294901760
    %v2139 = vsub.f32 %v263, %v2138
    %2140 = vmatpush.msra.mxu0 %v2139
    %v2141 = vand.u32 %v255, 4294901760
    %v2142 = vsub.f32 %v255, %v2141
    %2143 = vmatpush.msra.mxu0 %v2142
    %v2144 = vand.u32 %v247, 4294901760
    %v2145 = vsub.f32 %v247, %v2144
    %2146 = vmatpush.msra.mxu0 %v2145
    %v2147 = vand.u32 %v239, 4294901760
    %v2148 = vsub.f32 %v239, %v2147
    %2149 = vmatpush.msra.mxu0 %v2148
    %v2150 = vand.u32 %v231, 4294901760
    %v2151 = vsub.f32 %v231, %v2150
    %2152 = vmatpush.msra.mxu0 %v2151
    %v2153 = vand.u32 %v223, 4294901760
    %v2154 = vsub.f32 %v223, %v2153
    %2155 = vmatpush.msra.mxu0 %v2154
    %v2156 = vand.u32 %v215, 4294901760
    %v2157 = vsub.f32 %v215, %v2156
    %2158 = vmatpush.msra.mxu0 %v2157
    %v2159 = vand.u32 %v207, 4294901760
    %v2160 = vsub.f32 %v207, %v2159
    %2161 = vmatpush.msra.mxu0 %v2160
    %v2162 = vand.u32 %v199, 4294901760
    %v2163 = vsub.f32 %v199, %v2162
    %2164 = vmatpush.msra.mxu0 %v2163
    %v2165 = vand.u32 %v191, 4294901760
    %v2166 = vsub.f32 %v191, %v2165
    %2167 = vmatpush.msra.mxu0 %v2166
    %v2168 = vand.u32 %v183, 4294901760
    %v2169 = vsub.f32 %v183, %v2168
    %2170 = vmatpush.msra.mxu0 %v2169
    %v2171 = vand.u32 %v175, 4294901760
    %v2172 = vsub.f32 %v175, %v2171
    %2173 = vmatpush.msra.mxu0 %v2172
    %v2174 = vand.u32 %v167, 4294901760
    %v2175 = vsub.f32 %v167, %v2174
    %2176 = vmatpush.msra.mxu0 %v2175
    %v2177 = vand.u32 %v159, 4294901760
    %v2178 = vsub.f32 %v159, %v2177
    %2179 = vmatpush.msra.mxu0 %v2178
    %v2180 = vand.u32 %v28, 4294901760
    %v2181 = vsub.f32 %v28, %v2180
    %2182 = vmatmul.f32.gmra.mxu0 %v2181
    %v2183 = vpop.f32.mrf.mxu0
    %v2184 = vadd.f32 %v2130, %v2183
    %2185 = vdwg.mxu0
    %v2186 = vand.u32 %v279, 4294901760
    %2187 = vmatpush.msra.mxu0 %v2186
    %v2188 = vand.u32 %v271, 4294901760
    %2189 = vmatpush.msra.mxu0 %v2188
    %v2190 = vand.u32 %v263, 4294901760
    %2191 = vmatpush.msra.mxu0 %v2190
    %v2192 = vand.u32 %v255, 4294901760
    %2193 = vmatpush.msra.mxu0 %v2192
    %v2194 = vand.u32 %v247, 4294901760
    %2195 = vmatpush.msra.mxu0 %v2194
    %v2196 = vand.u32 %v239, 4294901760
    %2197 = vmatpush.msra.mxu0 %v2196
    %v2198 = vand.u32 %v231, 4294901760
    %2199 = vmatpush.msra.mxu0 %v2198
    %v2200 = vand.u32 %v223, 4294901760
    %2201 = vmatpush.msra.mxu0 %v2200
    %v2202 = vand.u32 %v215, 4294901760
    %2203 = vmatpush.msra.mxu0 %v2202
    %v2204 = vand.u32 %v207, 4294901760
    %2205 = vmatpush.msra.mxu0 %v2204
    %v2206 = vand.u32 %v199, 4294901760
    %2207 = vmatpush.msra.mxu0 %v2206
    %v2208 = vand.u32 %v191, 4294901760
    %2209 = vmatpush.msra.mxu0 %v2208
    %v2210 = vand.u32 %v183, 4294901760
    %2211 = vmatpush.msra.mxu0 %v2210
    %v2212 = vand.u32 %v175, 4294901760
    %2213 = vmatpush.msra.mxu0 %v2212
    %v2214 = vand.u32 %v167, 4294901760
    %2215 = vmatpush.msra.mxu0 %v2214
    %v2216 = vand.u32 %v159, 4294901760
    %2217 = vmatpush.msra.mxu0 %v2216
    %v2218 = vand.u32 %v28, 4294901760
    %v2219 = vsub.f32 %v28, %v2218
    %v2220 = vand.u32 %v2219, 4294901760
    %2221 = vmatmul.f32.gmra.mxu0 %v2220
    %v2222 = vpop.f32.mrf.mxu0
    %v2223 = vadd.f32 %v2184, %v2222
    %2224 = vdwg.mxu0
    %v2225 = vand.u32 %v279, 4294901760
    %v2226 = vsub.f32 %v279, %v2225
    %v2227 = vand.u32 %v2226, 4294901760
    %2228 = vmatpush.msra.mxu0 %v2227
    %v2229 = vand.u32 %v271, 4294901760
    %v2230 = vsub.f32 %v271, %v2229
    %v2231 = vand.u32 %v2230, 4294901760
    %2232 = vmatpush.msra.mxu0 %v2231
    %v2233 = vand.u32 %v263, 4294901760
    %v2234 = vsub.f32 %v263, %v2233
    %v2235 = vand.u32 %v2234, 4294901760
    %2236 = vmatpush.msra.mxu0 %v2235
    %v2237 = vand.u32 %v255, 4294901760
    %v2238 = vsub.f32 %v255, %v2237
    %v2239 = vand.u32 %v2238, 4294901760
    %2240 = vmatpush.msra.mxu0 %v2239
    %v2241 = vand.u32 %v247, 4294901760
    %v2242 = vsub.f32 %v247, %v2241
    %v2243 = vand.u32 %v2242, 4294901760
    %2244 = vmatpush.msra.mxu0 %v2243
    %v2245 = vand.u32 %v239, 4294901760
    %v2246 = vsub.f32 %v239, %v2245
    %v2247 = vand.u32 %v2246, 4294901760
    %2248 = vmatpush.msra.mxu0 %v2247
    %v2249 = vand.u32 %v231, 4294901760
    %v2250 = vsub.f32 %v231, %v2249
    %v2251 = vand.u32 %v2250, 4294901760
    %2252 = vmatpush.msra.mxu0 %v2251
    %v2253 = vand.u32 %v223, 4294901760
    %v2254 = vsub.f32 %v223, %v2253
    %v2255 = vand.u32 %v2254, 4294901760
    %2256 = vmatpush.msra.mxu0 %v2255
    %v2257 = vand.u32 %v215, 4294901760
    %v2258 = vsub.f32 %v215, %v2257
    %v2259 = vand.u32 %v2258, 4294901760
    %2260 = vmatpush.msra.mxu0 %v2259
    %v2261 = vand.u32 %v207, 4294901760
    %v2262 = vsub.f32 %v207, %v2261
    %v2263 = vand.u32 %v2262, 4294901760
    %2264 = vmatpush.msra.mxu0 %v2263
    %v2265 = vand.u32 %v199, 4294901760
    %v2266 = vsub.f32 %v199, %v2265
    %v2267 = vand.u32 %v2266, 4294901760
    %2268 = vmatpush.msra.mxu0 %v2267
    %v2269 = vand.u32 %v191, 4294901760
    %v2270 = vsub.f32 %v191, %v2269
    %v2271 = vand.u32 %v2270, 4294901760
    %2272 = vmatpush.msra.mxu0 %v2271
    %v2273 = vand.u32 %v183, 4294901760
    %v2274 = vsub.f32 %v183, %v2273
    %v2275 = vand.u32 %v2274, 4294901760
    %2276 = vmatpush.msra.mxu0 %v2275
    %v2277 = vand.u32 %v175, 4294901760
    %v2278 = vsub.f32 %v175, %v2277
    %v2279 = vand.u32 %v2278, 4294901760
    %2280 = vmatpush.msra.mxu0 %v2279
    %v2281 = vand.u32 %v167, 4294901760
    %v2282 = vsub.f32 %v167, %v2281
    %v2283 = vand.u32 %v2282, 4294901760
    %2284 = vmatpush.msra.mxu0 %v2283
    %v2285 = vand.u32 %v159, 4294901760
    %v2286 = vsub.f32 %v159, %v2285
    %v2287 = vand.u32 %v2286, 4294901760
    %2288 = vmatpush.msra.mxu0 %v2287
    %v2289 = vand.u32 %v28, 4294901760
    %2290 = vmatmul.f32.gmra.mxu0 %v2289
    %v2291 = vpop.f32.mrf.mxu0
    %v2292 = vadd.f32 %v2223, %v2291
    %2293 = vdwg.mxu0
    %v2294 = vand.u32 %v279, 4294901760
    %2295 = vmatpush.msra.mxu0 %v2294
    %v2296 = vand.u32 %v271, 4294901760
    %2297 = vmatpush.msra.mxu0 %v2296
    %v2298 = vand.u32 %v263, 4294901760
    %2299 = vmatpush.msra.mxu0 %v2298
    %v2300 = vand.u32 %v255, 4294901760
    %2301 = vmatpush.msra.mxu0 %v2300
    %v2302 = vand.u32 %v247, 4294901760
    %2303 = vmatpush.msra.mxu0 %v2302
    %v2304 = vand.u32 %v239, 4294901760
    %2305 = vmatpush.msra.mxu0 %v2304
    %v2306 = vand.u32 %v231, 4294901760
    %2307 = vmatpush.msra.mxu0 %v2306
    %v2308 = vand.u32 %v223, 4294901760
    %2309 = vmatpush.msra.mxu0 %v2308
    %v2310 = vand.u32 %v215, 4294901760
    %2311 = vmatpush.msra.mxu0 %v2310
    %v2312 = vand.u32 %v207, 4294901760
    %2313 = vmatpush.msra.mxu0 %v2312
    %v2314 = vand.u32 %v199, 4294901760
    %2315 = vmatpush.msra.mxu0 %v2314
    %v2316 = vand.u32 %v191, 4294901760
    %2317 = vmatpush.msra.mxu0 %v2316
    %v2318 = vand.u32 %v183, 4294901760
    %2319 = vmatpush.msra.mxu0 %v2318
    %v2320 = vand.u32 %v175, 4294901760
    %2321 = vmatpush.msra.mxu0 %v2320
    %v2322 = vand.u32 %v167, 4294901760
    %2323 = vmatpush.msra.mxu0 %v2322
    %v2324 = vand.u32 %v159, 4294901760
    %2325 = vmatpush.msra.mxu0 %v2324
    %v2326 = vand.u32 %v28, 4294901760
    %2327 = vmatmul.f32.gmra.mxu0 %v2326
    %v2328 = vpop.f32.mrf.mxu0
    %v2329 = vadd.f32 %v2292, %v2328
    %2330 = vdwg.mxu0
    %v2331 = vand.u32 %v152, 4294901760
    %2332 = vmatpush.msra.mxu0 %v2331
    %v2333 = vand.u32 %v144, 4294901760
    %2334 = vmatpush.msra.mxu0 %v2333
    %v2335 = vand.u32 %v136, 4294901760
    %2336 = vmatpush.msra.mxu0 %v2335
    %v2337 = vand.u32 %v128, 4294901760
    %2338 = vmatpush.msra.mxu0 %v2337
    %v2339 = vand.u32 %v120, 4294901760
    %2340 = vmatpush.msra.mxu0 %v2339
    %v2341 = vand.u32 %v112, 4294901760
    %2342 = vmatpush.msra.mxu0 %v2341
    %v2343 = vand.u32 %v104, 4294901760
    %2344 = vmatpush.msra.mxu0 %v2343
    %v2345 = vand.u32 %v96, 4294901760
    %2346 = vmatpush.msra.mxu0 %v2345
    %v2347 = vand.u32 %v88, 4294901760
    %2348 = vmatpush.msra.mxu0 %v2347
    %v2349 = vand.u32 %v80, 4294901760
    %2350 = vmatpush.msra.mxu0 %v2349
    %v2351 = vand.u32 %v72, 4294901760
    %2352 = vmatpush.msra.mxu0 %v2351
    %v2353 = vand.u32 %v64, 4294901760
    %2354 = vmatpush.msra.mxu0 %v2353
    %v2355 = vand.u32 %v56, 4294901760
    %2356 = vmatpush.msra.mxu0 %v2355
    %v2357 = vand.u32 %v48, 4294901760
    %2358 = vmatpush.msra.mxu0 %v2357
    %v2359 = vand.u32 %v40, 4294901760
    %2360 = vmatpush.msra.mxu0 %v2359
    %v2361 = vand.u32 %v32, 4294901760
    %2362 = vmatpush.msra.mxu0 %v2361
    %v2363 = vand.u32 %v27, 4294901760
    %v2364 = vsub.f32 %v27, %v2363
    %v2365 = vand.u32 %v2364, 4294901760
    %v2366 = vsub.f32 %v2364, %v2365
    %v2367 = vand.u32 %v2366, 4294901760
    %2368 = vmatmul.f32.gmra.mxu0 %v2367
    %v2369 = vpop.f32.mrf.mxu0
    %v2370 = vadd.f32 0.0, %v2369
    %2371 = vdwg.mxu0
    %v2372 = vand.u32 %v152, 4294901760
    %v2373 = vsub.f32 %v152, %v2372
    %v2374 = vand.u32 %v2373, 4294901760
    %v2375 = vsub.f32 %v2373, %v2374
    %v2376 = vand.u32 %v2375, 4294901760
    %2377 = vmatpush.msra.mxu0 %v2376
    %v2378 = vand.u32 %v144, 4294901760
    %v2379 = vsub.f32 %v144, %v2378
    %v2380 = vand.u32 %v2379, 4294901760
    %v2381 = vsub.f32 %v2379, %v2380
    %v2382 = vand.u32 %v2381, 4294901760
    %2383 = vmatpush.msra.mxu0 %v2382
    %v2384 = vand.u32 %v136, 4294901760
    %v2385 = vsub.f32 %v136, %v2384
    %v2386 = vand.u32 %v2385, 4294901760
    %v2387 = vsub.f32 %v2385, %v2386
    %v2388 = vand.u32 %v2387, 4294901760
    %2389 = vmatpush.msra.mxu0 %v2388
    %v2390 = vand.u32 %v128, 4294901760
    %v2391 = vsub.f32 %v128, %v2390
    %v2392 = vand.u32 %v2391, 4294901760
    %v2393 = vsub.f32 %v2391, %v2392
    %v2394 = vand.u32 %v2393, 4294901760
    %2395 = vmatpush.msra.mxu0 %v2394
    %v2396 = vand.u32 %v120, 4294901760
    %v2397 = vsub.f32 %v120, %v2396
    %v2398 = vand.u32 %v2397, 4294901760
    %v2399 = vsub.f32 %v2397, %v2398
    %v2400 = vand.u32 %v2399, 4294901760
    %2401 = vmatpush.msra.mxu0 %v2400
    %v2402 = vand.u32 %v112, 4294901760
    %v2403 = vsub.f32 %v112, %v2402
    %v2404 = vand.u32 %v2403, 4294901760
    %v2405 = vsub.f32 %v2403, %v2404
    %v2406 = vand.u32 %v2405, 4294901760
    %2407 = vmatpush.msra.mxu0 %v2406
    %v2408 = vand.u32 %v104, 4294901760
    %v2409 = vsub.f32 %v104, %v2408
    %v2410 = vand.u32 %v2409, 4294901760
    %v2411 = vsub.f32 %v2409, %v2410
    %v2412 = vand.u32 %v2411, 4294901760
    %2413 = vmatpush.msra.mxu0 %v2412
    %v2414 = vand.u32 %v96, 4294901760
    %v2415 = vsub.f32 %v96, %v2414
    %v2416 = vand.u32 %v2415, 4294901760
    %v2417 = vsub.f32 %v2415, %v2416
    %v2418 = vand.u32 %v2417, 4294901760
    %2419 = vmatpush.msra.mxu0 %v2418
    %v2420 = vand.u32 %v88, 4294901760
    %v2421 = vsub.f32 %v88, %v2420
    %v2422 = vand.u32 %v2421, 4294901760
    %v2423 = vsub.f32 %v2421, %v2422
    %v2424 = vand.u32 %v2423, 4294901760
    %2425 = vmatpush.msra.mxu0 %v2424
    %v2426 = vand.u32 %v80, 4294901760
    %v2427 = vsub.f32 %v80, %v2426
    %v2428 = vand.u32 %v2427, 4294901760
    %v2429 = vsub.f32 %v2427, %v2428
    %v2430 = vand.u32 %v2429, 4294901760
    %2431 = vmatpush.msra.mxu0 %v2430
    %v2432 = vand.u32 %v72, 4294901760
    %v2433 = vsub.f32 %v72, %v2432
    %v2434 = vand.u32 %v2433, 4294901760
    %v2435 = vsub.f32 %v2433, %v2434
    %v2436 = vand.u32 %v2435, 4294901760
    %2437 = vmatpush.msra.mxu0 %v2436
    %v2438 = vand.u32 %v64, 4294901760
    %v2439 = vsub.f32 %v64, %v2438
    %v2440 = vand.u32 %v2439, 4294901760
    %v2441 = vsub.f32 %v2439, %v2440
    %v2442 = vand.u32 %v2441, 4294901760
    %2443 = vmatpush.msra.mxu0 %v2442
    %v2444 = vand.u32 %v56, 4294901760
    %v2445 = vsub.f32 %v56, %v2444
    %v2446 = vand.u32 %v2445, 4294901760
    %v2447 = vsub.f32 %v2445, %v2446
    %v2448 = vand.u32 %v2447, 4294901760
    %2449 = vmatpush.msra.mxu0 %v2448
    %v2450 = vand.u32 %v48, 4294901760
    %v2451 = vsub.f32 %v48, %v2450
    %v2452 = vand.u32 %v2451, 4294901760
    %v2453 = vsub.f32 %v2451, %v2452
    %v2454 = vand.u32 %v2453, 4294901760
    %2455 = vmatpush.msra.mxu0 %v2454
    %v2456 = vand.u32 %v40, 4294901760
    %v2457 = vsub.f32 %v40, %v2456
    %v2458 = vand.u32 %v2457, 4294901760
    %v2459 = vsub.f32 %v2457, %v2458
    %v2460 = vand.u32 %v2459, 4294901760
    %2461 = vmatpush.msra.mxu0 %v2460
    %v2462 = vand.u32 %v32, 4294901760
    %v2463 = vsub.f32 %v32, %v2462
    %v2464 = vand.u32 %v2463, 4294901760
    %v2465 = vsub.f32 %v2463, %v2464
    %v2466 = vand.u32 %v2465, 4294901760
    %2467 = vmatpush.msra.mxu0 %v2466
    %v2468 = vand.u32 %v27, 4294901760
    %2469 = vmatmul.f32.gmra.mxu0 %v2468
    %v2470 = vpop.f32.mrf.mxu0
    %v2471 = vadd.f32 %v2370, %v2470
    %2472 = vdwg.mxu0
    %v2473 = vand.u32 %v152, 4294901760
    %v2474 = vsub.f32 %v152, %v2473
    %2475 = vmatpush.msra.mxu0 %v2474
    %v2476 = vand.u32 %v144, 4294901760
    %v2477 = vsub.f32 %v144, %v2476
    %2478 = vmatpush.msra.mxu0 %v2477
    %v2479 = vand.u32 %v136, 4294901760
    %v2480 = vsub.f32 %v136, %v2479
    %2481 = vmatpush.msra.mxu0 %v2480
    %v2482 = vand.u32 %v128, 4294901760
    %v2483 = vsub.f32 %v128, %v2482
    %2484 = vmatpush.msra.mxu0 %v2483
    %v2485 = vand.u32 %v120, 4294901760
    %v2486 = vsub.f32 %v120, %v2485
    %2487 = vmatpush.msra.mxu0 %v2486
    %v2488 = vand.u32 %v112, 4294901760
    %v2489 = vsub.f32 %v112, %v2488
    %2490 = vmatpush.msra.mxu0 %v2489
    %v2491 = vand.u32 %v104, 4294901760
    %v2492 = vsub.f32 %v104, %v2491
    %2493 = vmatpush.msra.mxu0 %v2492
    %v2494 = vand.u32 %v96, 4294901760
    %v2495 = vsub.f32 %v96, %v2494
    %2496 = vmatpush.msra.mxu0 %v2495
    %v2497 = vand.u32 %v88, 4294901760
    %v2498 = vsub.f32 %v88, %v2497
    %2499 = vmatpush.msra.mxu0 %v2498
    %v2500 = vand.u32 %v80, 4294901760
    %v2501 = vsub.f32 %v80, %v2500
    %2502 = vmatpush.msra.mxu0 %v2501
    %v2503 = vand.u32 %v72, 4294901760
    %v2504 = vsub.f32 %v72, %v2503
    %2505 = vmatpush.msra.mxu0 %v2504
    %v2506 = vand.u32 %v64, 4294901760
    %v2507 = vsub.f32 %v64, %v2506
    %2508 = vmatpush.msra.mxu0 %v2507
    %v2509 = vand.u32 %v56, 4294901760
    %v2510 = vsub.f32 %v56, %v2509
    %2511 = vmatpush.msra.mxu0 %v2510
    %v2512 = vand.u32 %v48, 4294901760
    %v2513 = vsub.f32 %v48, %v2512
    %2514 = vmatpush.msra.mxu0 %v2513
    %v2515 = vand.u32 %v40, 4294901760
    %v2516 = vsub.f32 %v40, %v2515
    %2517 = vmatpush.msra.mxu0 %v2516
    %v2518 = vand.u32 %v32, 4294901760
    %v2519 = vsub.f32 %v32, %v2518
    %2520 = vmatpush.msra.mxu0 %v2519
    %v2521 = vand.u32 %v27, 4294901760
    %v2522 = vsub.f32 %v27, %v2521
    %2523 = vmatmul.f32.gmra.mxu0 %v2522
    %v2524 = vpop.f32.mrf.mxu0
    %v2525 = vadd.f32 %v2471, %v2524
    %2526 = vdwg.mxu0
    %v2527 = vand.u32 %v152, 4294901760
    %2528 = vmatpush.msra.mxu0 %v2527
    %v2529 = vand.u32 %v144, 4294901760
    %2530 = vmatpush.msra.mxu0 %v2529
    %v2531 = vand.u32 %v136, 4294901760
    %2532 = vmatpush.msra.mxu0 %v2531
    %v2533 = vand.u32 %v128, 4294901760
    %2534 = vmatpush.msra.mxu0 %v2533
    %v2535 = vand.u32 %v120, 4294901760
    %2536 = vmatpush.msra.mxu0 %v2535
    %v2537 = vand.u32 %v112, 4294901760
    %2538 = vmatpush.msra.mxu0 %v2537
    %v2539 = vand.u32 %v104, 4294901760
    %2540 = vmatpush.msra.mxu0 %v2539
    %v2541 = vand.u32 %v96, 4294901760
    %2542 = vmatpush.msra.mxu0 %v2541
    %v2543 = vand.u32 %v88, 4294901760
    %2544 = vmatpush.msra.mxu0 %v2543
    %v2545 = vand.u32 %v80, 4294901760
    %2546 = vmatpush.msra.mxu0 %v2545
    %v2547 = vand.u32 %v72, 4294901760
    %2548 = vmatpush.msra.mxu0 %v2547
    %v2549 = vand.u32 %v64, 4294901760
    %2550 = vmatpush.msra.mxu0 %v2549
    %v2551 = vand.u32 %v56, 4294901760
    %2552 = vmatpush.msra.mxu0 %v2551
    %v2553 = vand.u32 %v48, 4294901760
    %2554 = vmatpush.msra.mxu0 %v2553
    %v2555 = vand.u32 %v40, 4294901760
    %2556 = vmatpush.msra.mxu0 %v2555
    %v2557 = vand.u32 %v32, 4294901760
    %2558 = vmatpush.msra.mxu0 %v2557
    %v2559 = vand.u32 %v27, 4294901760
    %v2560 = vsub.f32 %v27, %v2559
    %v2561 = vand.u32 %v2560, 4294901760
    %2562 = vmatmul.f32.gmra.mxu0 %v2561
    %v2563 = vpop.f32.mrf.mxu0
    %v2564 = vadd.f32 %v2525, %v2563
    %2565 = vdwg.mxu0
    %v2566 = vand.u32 %v152, 4294901760
    %v2567 = vsub.f32 %v152, %v2566
    %v2568 = vand.u32 %v2567, 4294901760
    %2569 = vmatpush.msra.mxu0 %v2568
    %v2570 = vand.u32 %v144, 4294901760
    %v2571 = vsub.f32 %v144, %v2570
    %v2572 = vand.u32 %v2571, 4294901760
    %2573 = vmatpush.msra.mxu0 %v2572
    %v2574 = vand.u32 %v136, 4294901760
    %v2575 = vsub.f32 %v136, %v2574
    %v2576 = vand.u32 %v2575, 4294901760
    %2577 = vmatpush.msra.mxu0 %v2576
    %v2578 = vand.u32 %v128, 4294901760
    %v2579 = vsub.f32 %v128, %v2578
    %v2580 = vand.u32 %v2579, 4294901760
    %2581 = vmatpush.msra.mxu0 %v2580
    %v2582 = vand.u32 %v120, 4294901760
    %v2583 = vsub.f32 %v120, %v2582
    %v2584 = vand.u32 %v2583, 4294901760
    %2585 = vmatpush.msra.mxu0 %v2584
    %v2586 = vand.u32 %v112, 4294901760
    %v2587 = vsub.f32 %v112, %v2586
    %v2588 = vand.u32 %v2587, 4294901760
    %2589 = vmatpush.msra.mxu0 %v2588
    %v2590 = vand.u32 %v104, 4294901760
    %v2591 = vsub.f32 %v104, %v2590
    %v2592 = vand.u32 %v2591, 4294901760
    %2593 = vmatpush.msra.mxu0 %v2592
    %v2594 = vand.u32 %v96, 4294901760
    %v2595 = vsub.f32 %v96, %v2594
    %v2596 = vand.u32 %v2595, 4294901760
    %2597 = vmatpush.msra.mxu0 %v2596
    %v2598 = vand.u32 %v88, 4294901760
    %v2599 = vsub.f32 %v88, %v2598
    %v2600 = vand.u32 %v2599, 4294901760
    %2601 = vmatpush.msra.mxu0 %v2600
    %v2602 = vand.u32 %v80, 4294901760
    %v2603 = vsub.f32 %v80, %v2602
    %v2604 = vand.u32 %v2603, 4294901760
    %2605 = vmatpush.msra.mxu0 %v2604
    %v2606 = vand.u32 %v72, 4294901760
    %v2607 = vsub.f32 %v72, %v2606
    %v2608 = vand.u32 %v2607, 4294901760
    %2609 = vmatpush.msra.mxu0 %v2608
    %v2610 = vand.u32 %v64, 4294901760
    %v2611 = vsub.f32 %v64, %v2610
    %v2612 = vand.u32 %v2611, 4294901760
    %2613 = vmatpush.msra.mxu0 %v2612
    %v2614 = vand.u32 %v56, 4294901760
    %v2615 = vsub.f32 %v56, %v2614
    %v2616 = vand.u32 %v2615, 4294901760
    %2617 = vmatpush.msra.mxu0 %v2616
    %v2618 = vand.u32 %v48, 4294901760
    %v2619 = vsub.f32 %v48, %v2618
    %v2620 = vand.u32 %v2619, 4294901760
    %2621 = vmatpush.msra.mxu0 %v2620
    %v2622 = vand.u32 %v40, 4294901760
    %v2623 = vsub.f32 %v40, %v2622
    %v2624 = vand.u32 %v2623, 4294901760
    %2625 = vmatpush.msra.mxu0 %v2624
    %v2626 = vand.u32 %v32, 4294901760
    %v2627 = vsub.f32 %v32, %v2626
    %v2628 = vand.u32 %v2627, 4294901760
    %2629 = vmatpush.msra.mxu0 %v2628
    %v2630 = vand.u32 %v27, 4294901760
    %2631 = vmatmul.f32.gmra.mxu0 %v2630
    %v2632 = vpop.f32.mrf.mxu0
    %v2633 = vadd.f32 %v2564, %v2632
    %2634 = vdwg.mxu0
    %v2635 = vand.u32 %v152, 4294901760
    %2636 = vmatpush.msra.mxu0 %v2635
    %v2637 = vand.u32 %v144, 4294901760
    %2638 = vmatpush.msra.mxu0 %v2637
    %v2639 = vand.u32 %v136, 4294901760
    %2640 = vmatpush.msra.mxu0 %v2639
    %v2641 = vand.u32 %v128, 4294901760
    %2642 = vmatpush.msra.mxu0 %v2641
    %v2643 = vand.u32 %v120, 4294901760
    %2644 = vmatpush.msra.mxu0 %v2643
    %v2645 = vand.u32 %v112, 4294901760
    %2646 = vmatpush.msra.mxu0 %v2645
    %v2647 = vand.u32 %v104, 4294901760
    %2648 = vmatpush.msra.mxu0 %v2647
    %v2649 = vand.u32 %v96, 4294901760
    %2650 = vmatpush.msra.mxu0 %v2649
    %v2651 = vand.u32 %v88, 4294901760
    %2652 = vmatpush.msra.mxu0 %v2651
    %v2653 = vand.u32 %v80, 4294901760
    %2654 = vmatpush.msra.mxu0 %v2653
    %v2655 = vand.u32 %v72, 4294901760
    %2656 = vmatpush.msra.mxu0 %v2655
    %v2657 = vand.u32 %v64, 4294901760
    %2658 = vmatpush.msra.mxu0 %v2657
    %v2659 = vand.u32 %v56, 4294901760
    %2660 = vmatpush.msra.mxu0 %v2659
    %v2661 = vand.u32 %v48, 4294901760
    %2662 = vmatpush.msra.mxu0 %v2661
    %v2663 = vand.u32 %v40, 4294901760
    %2664 = vmatpush.msra.mxu0 %v2663
    %v2665 = vand.u32 %v32, 4294901760
    %2666 = vmatpush.msra.mxu0 %v2665
    %v2667 = vand.u32 %v27, 4294901760
    %2668 = vmatmul.f32.gmra.mxu0 %v2667
    %v2669 = vpop.f32.mrf.mxu0
    %v2670 = vadd.f32 %v2633, %v2669
    %2671 = vdwg.mxu0
    %v2672 = vand.u32 %v280, 4294901760
    %2673 = vmatpush.msra.mxu0 %v2672
    %v2674 = vand.u32 %v272, 4294901760
    %2675 = vmatpush.msra.mxu0 %v2674
    %v2676 = vand.u32 %v264, 4294901760
    %2677 = vmatpush.msra.mxu0 %v2676
    %v2678 = vand.u32 %v256, 4294901760
    %2679 = vmatpush.msra.mxu0 %v2678
    %v2680 = vand.u32 %v248, 4294901760
    %2681 = vmatpush.msra.mxu0 %v2680
    %v2682 = vand.u32 %v240, 4294901760
    %2683 = vmatpush.msra.mxu0 %v2682
    %v2684 = vand.u32 %v232, 4294901760
    %2685 = vmatpush.msra.mxu0 %v2684
    %v2686 = vand.u32 %v224, 4294901760
    %2687 = vmatpush.msra.mxu0 %v2686
    %v2688 = vand.u32 %v216, 4294901760
    %2689 = vmatpush.msra.mxu0 %v2688
    %v2690 = vand.u32 %v208, 4294901760
    %2691 = vmatpush.msra.mxu0 %v2690
    %v2692 = vand.u32 %v200, 4294901760
    %2693 = vmatpush.msra.mxu0 %v2692
    %v2694 = vand.u32 %v192, 4294901760
    %2695 = vmatpush.msra.mxu0 %v2694
    %v2696 = vand.u32 %v184, 4294901760
    %2697 = vmatpush.msra.mxu0 %v2696
    %v2698 = vand.u32 %v176, 4294901760
    %2699 = vmatpush.msra.mxu0 %v2698
    %v2700 = vand.u32 %v168, 4294901760
    %2701 = vmatpush.msra.mxu0 %v2700
    %v2702 = vand.u32 %v160, 4294901760
    %2703 = vmatpush.msra.mxu0 %v2702
    %v2704 = vand.u32 %v28, 4294901760
    %v2705 = vsub.f32 %v28, %v2704
    %v2706 = vand.u32 %v2705, 4294901760
    %v2707 = vsub.f32 %v2705, %v2706
    %v2708 = vand.u32 %v2707, 4294901760
    %2709 = vmatmul.f32.gmra.mxu0 %v2708
    %v2710 = vpop.f32.mrf.mxu0
    %v2711 = vadd.f32 %v2670, %v2710
    %2712 = vdwg.mxu0
    %v2713 = vand.u32 %v280, 4294901760
    %v2714 = vsub.f32 %v280, %v2713
    %v2715 = vand.u32 %v2714, 4294901760
    %v2716 = vsub.f32 %v2714, %v2715
    %v2717 = vand.u32 %v2716, 4294901760
    %2718 = vmatpush.msra.mxu0 %v2717
    %v2719 = vand.u32 %v272, 4294901760
    %v2720 = vsub.f32 %v272, %v2719
    %v2721 = vand.u32 %v2720, 4294901760
    %v2722 = vsub.f32 %v2720, %v2721
    %v2723 = vand.u32 %v2722, 4294901760
    %2724 = vmatpush.msra.mxu0 %v2723
    %v2725 = vand.u32 %v264, 4294901760
    %v2726 = vsub.f32 %v264, %v2725
    %v2727 = vand.u32 %v2726, 4294901760
    %v2728 = vsub.f32 %v2726, %v2727
    %v2729 = vand.u32 %v2728, 4294901760
    %2730 = vmatpush.msra.mxu0 %v2729
    %v2731 = vand.u32 %v256, 4294901760
    %v2732 = vsub.f32 %v256, %v2731
    %v2733 = vand.u32 %v2732, 4294901760
    %v2734 = vsub.f32 %v2732, %v2733
    %v2735 = vand.u32 %v2734, 4294901760
    %2736 = vmatpush.msra.mxu0 %v2735
    %v2737 = vand.u32 %v248, 4294901760
    %v2738 = vsub.f32 %v248, %v2737
    %v2739 = vand.u32 %v2738, 4294901760
    %v2740 = vsub.f32 %v2738, %v2739
    %v2741 = vand.u32 %v2740, 4294901760
    %2742 = vmatpush.msra.mxu0 %v2741
    %v2743 = vand.u32 %v240, 4294901760
    %v2744 = vsub.f32 %v240, %v2743
    %v2745 = vand.u32 %v2744, 4294901760
    %v2746 = vsub.f32 %v2744, %v2745
    %v2747 = vand.u32 %v2746, 4294901760
    %2748 = vmatpush.msra.mxu0 %v2747
    %v2749 = vand.u32 %v232, 4294901760
    %v2750 = vsub.f32 %v232, %v2749
    %v2751 = vand.u32 %v2750, 4294901760
    %v2752 = vsub.f32 %v2750, %v2751
    %v2753 = vand.u32 %v2752, 4294901760
    %2754 = vmatpush.msra.mxu0 %v2753
    %v2755 = vand.u32 %v224, 4294901760
    %v2756 = vsub.f32 %v224, %v2755
    %v2757 = vand.u32 %v2756, 4294901760
    %v2758 = vsub.f32 %v2756, %v2757
    %v2759 = vand.u32 %v2758, 4294901760
    %2760 = vmatpush.msra.mxu0 %v2759
    %v2761 = vand.u32 %v216, 4294901760
    %v2762 = vsub.f32 %v216, %v2761
    %v2763 = vand.u32 %v2762, 4294901760
    %v2764 = vsub.f32 %v2762, %v2763
    %v2765 = vand.u32 %v2764, 4294901760
    %2766 = vmatpush.msra.mxu0 %v2765
    %v2767 = vand.u32 %v208, 4294901760
    %v2768 = vsub.f32 %v208, %v2767
    %v2769 = vand.u32 %v2768, 4294901760
    %v2770 = vsub.f32 %v2768, %v2769
    %v2771 = vand.u32 %v2770, 4294901760
    %2772 = vmatpush.msra.mxu0 %v2771
    %v2773 = vand.u32 %v200, 4294901760
    %v2774 = vsub.f32 %v200, %v2773
    %v2775 = vand.u32 %v2774, 4294901760
    %v2776 = vsub.f32 %v2774, %v2775
    %v2777 = vand.u32 %v2776, 4294901760
    %2778 = vmatpush.msra.mxu0 %v2777
    %v2779 = vand.u32 %v192, 4294901760
    %v2780 = vsub.f32 %v192, %v2779
    %v2781 = vand.u32 %v2780, 4294901760
    %v2782 = vsub.f32 %v2780, %v2781
    %v2783 = vand.u32 %v2782, 4294901760
    %2784 = vmatpush.msra.mxu0 %v2783
    %v2785 = vand.u32 %v184, 4294901760
    %v2786 = vsub.f32 %v184, %v2785
    %v2787 = vand.u32 %v2786, 4294901760
    %v2788 = vsub.f32 %v2786, %v2787
    %v2789 = vand.u32 %v2788, 4294901760
    %2790 = vmatpush.msra.mxu0 %v2789
    %v2791 = vand.u32 %v176, 4294901760
    %v2792 = vsub.f32 %v176, %v2791
    %v2793 = vand.u32 %v2792, 4294901760
    %v2794 = vsub.f32 %v2792, %v2793
    %v2795 = vand.u32 %v2794, 4294901760
    %2796 = vmatpush.msra.mxu0 %v2795
    %v2797 = vand.u32 %v168, 4294901760
    %v2798 = vsub.f32 %v168, %v2797
    %v2799 = vand.u32 %v2798, 4294901760
    %v2800 = vsub.f32 %v2798, %v2799
    %v2801 = vand.u32 %v2800, 4294901760
    %2802 = vmatpush.msra.mxu0 %v2801
    %v2803 = vand.u32 %v160, 4294901760
    %v2804 = vsub.f32 %v160, %v2803
    %v2805 = vand.u32 %v2804, 4294901760
    %v2806 = vsub.f32 %v2804, %v2805
    %v2807 = vand.u32 %v2806, 4294901760
    %2808 = vmatpush.msra.mxu0 %v2807
    %v2809 = vand.u32 %v28, 4294901760
    %2810 = vmatmul.f32.gmra.mxu0 %v2809
    %v2811 = vpop.f32.mrf.mxu0
    %v2812 = vadd.f32 %v2711, %v2811
    %2813 = vdwg.mxu0
    %v2814 = vand.u32 %v280, 4294901760
    %v2815 = vsub.f32 %v280, %v2814
    %2816 = vmatpush.msra.mxu0 %v2815
    %v2817 = vand.u32 %v272, 4294901760
    %v2818 = vsub.f32 %v272, %v2817
    %2819 = vmatpush.msra.mxu0 %v2818
    %v2820 = vand.u32 %v264, 4294901760
    %v2821 = vsub.f32 %v264, %v2820
    %2822 = vmatpush.msra.mxu0 %v2821
    %v2823 = vand.u32 %v256, 4294901760
    %v2824 = vsub.f32 %v256, %v2823
    %2825 = vmatpush.msra.mxu0 %v2824
    %v2826 = vand.u32 %v248, 4294901760
    %v2827 = vsub.f32 %v248, %v2826
    %2828 = vmatpush.msra.mxu0 %v2827
    %v2829 = vand.u32 %v240, 4294901760
    %v2830 = vsub.f32 %v240, %v2829
    %2831 = vmatpush.msra.mxu0 %v2830
    %v2832 = vand.u32 %v232, 4294901760
    %v2833 = vsub.f32 %v232, %v2832
    %2834 = vmatpush.msra.mxu0 %v2833
    %v2835 = vand.u32 %v224, 4294901760
    %v2836 = vsub.f32 %v224, %v2835
    %2837 = vmatpush.msra.mxu0 %v2836
    %v2838 = vand.u32 %v216, 4294901760
    %v2839 = vsub.f32 %v216, %v2838
    %2840 = vmatpush.msra.mxu0 %v2839
    %v2841 = vand.u32 %v208, 4294901760
    %v2842 = vsub.f32 %v208, %v2841
    %2843 = vmatpush.msra.mxu0 %v2842
    %v2844 = vand.u32 %v200, 4294901760
    %v2845 = vsub.f32 %v200, %v2844
    %2846 = vmatpush.msra.mxu0 %v2845
    %v2847 = vand.u32 %v192, 4294901760
    %v2848 = vsub.f32 %v192, %v2847
    %2849 = vmatpush.msra.mxu0 %v2848
    %v2850 = vand.u32 %v184, 4294901760
    %v2851 = vsub.f32 %v184, %v2850
    %2852 = vmatpush.msra.mxu0 %v2851
    %v2853 = vand.u32 %v176, 4294901760
    %v2854 = vsub.f32 %v176, %v2853
    %2855 = vmatpush.msra.mxu0 %v2854
    %v2856 = vand.u32 %v168, 4294901760
    %v2857 = vsub.f32 %v168, %v2856
    %2858 = vmatpush.msra.mxu0 %v2857
    %v2859 = vand.u32 %v160, 4294901760
    %v2860 = vsub.f32 %v160, %v2859
    %2861 = vmatpush.msra.mxu0 %v2860
    %v2862 = vand.u32 %v28, 4294901760
    %v2863 = vsub.f32 %v28, %v2862
    %2864 = vmatmul.f32.gmra.mxu0 %v2863
    %v2865 = vpop.f32.mrf.mxu0
    %v2866 = vadd.f32 %v2812, %v2865
    %2867 = vdwg.mxu0
    %v2868 = vand.u32 %v280, 4294901760
    %2869 = vmatpush.msra.mxu0 %v2868
    %v2870 = vand.u32 %v272, 4294901760
    %2871 = vmatpush.msra.mxu0 %v2870
    %v2872 = vand.u32 %v264, 4294901760
    %2873 = vmatpush.msra.mxu0 %v2872
    %v2874 = vand.u32 %v256, 4294901760
    %2875 = vmatpush.msra.mxu0 %v2874
    %v2876 = vand.u32 %v248, 4294901760
    %2877 = vmatpush.msra.mxu0 %v2876
    %v2878 = vand.u32 %v240, 4294901760
    %2879 = vmatpush.msra.mxu0 %v2878
    %v2880 = vand.u32 %v232, 4294901760
    %2881 = vmatpush.msra.mxu0 %v2880
    %v2882 = vand.u32 %v224, 4294901760
    %2883 = vmatpush.msra.mxu0 %v2882
    %v2884 = vand.u32 %v216, 4294901760
    %2885 = vmatpush.msra.mxu0 %v2884
    %v2886 = vand.u32 %v208, 4294901760
    %2887 = vmatpush.msra.mxu0 %v2886
    %v2888 = vand.u32 %v200, 4294901760
    %2889 = vmatpush.msra.mxu0 %v2888
    %v2890 = vand.u32 %v192, 4294901760
    %2891 = vmatpush.msra.mxu0 %v2890
    %v2892 = vand.u32 %v184, 4294901760
    %2893 = vmatpush.msra.mxu0 %v2892
    %v2894 = vand.u32 %v176, 4294901760
    %2895 = vmatpush.msra.mxu0 %v2894
    %v2896 = vand.u32 %v168, 4294901760
    %2897 = vmatpush.msra.mxu0 %v2896
    %v2898 = vand.u32 %v160, 4294901760
    %2899 = vmatpush.msra.mxu0 %v2898
    %v2900 = vand.u32 %v28, 4294901760
    %v2901 = vsub.f32 %v28, %v2900
    %v2902 = vand.u32 %v2901, 4294901760
    %2903 = vmatmul.f32.gmra.mxu0 %v2902
    %v2904 = vpop.f32.mrf.mxu0
    %v2905 = vadd.f32 %v2866, %v2904
    %2906 = vdwg.mxu0
    %v2907 = vand.u32 %v280, 4294901760
    %v2908 = vsub.f32 %v280, %v2907
    %v2909 = vand.u32 %v2908, 4294901760
    %2910 = vmatpush.msra.mxu0 %v2909
    %v2911 = vand.u32 %v272, 4294901760
    %v2912 = vsub.f32 %v272, %v2911
    %v2913 = vand.u32 %v2912, 4294901760
    %2914 = vmatpush.msra.mxu0 %v2913
    %v2915 = vand.u32 %v264, 4294901760
    %v2916 = vsub.f32 %v264, %v2915
    %v2917 = vand.u32 %v2916, 4294901760
    %2918 = vmatpush.msra.mxu0 %v2917
    %v2919 = vand.u32 %v256, 4294901760
    %v2920 = vsub.f32 %v256, %v2919
    %v2921 = vand.u32 %v2920, 4294901760
    %2922 = vmatpush.msra.mxu0 %v2921
    %v2923 = vand.u32 %v248, 4294901760
    %v2924 = vsub.f32 %v248, %v2923
    %v2925 = vand.u32 %v2924, 4294901760
    %2926 = vmatpush.msra.mxu0 %v2925
    %v2927 = vand.u32 %v240, 4294901760
    %v2928 = vsub.f32 %v240, %v2927
    %v2929 = vand.u32 %v2928, 4294901760
    %2930 = vmatpush.msra.mxu0 %v2929
    %v2931 = vand.u32 %v232, 4294901760
    %v2932 = vsub.f32 %v232, %v2931
    %v2933 = vand.u32 %v2932, 4294901760
    %2934 = vmatpush.msra.mxu0 %v2933
    %v2935 = vand.u32 %v224, 4294901760
    %v2936 = vsub.f32 %v224, %v2935
    %v2937 = vand.u32 %v2936, 4294901760
    %2938 = vmatpush.msra.mxu0 %v2937
    %v2939 = vand.u32 %v216, 4294901760
    %v2940 = vsub.f32 %v216, %v2939
    %v2941 = vand.u32 %v2940, 4294901760
    %2942 = vmatpush.msra.mxu0 %v2941
    %v2943 = vand.u32 %v208, 4294901760
    %v2944 = vsub.f32 %v208, %v2943
    %v2945 = vand.u32 %v2944, 4294901760
    %2946 = vmatpush.msra.mxu0 %v2945
    %v2947 = vand.u32 %v200, 4294901760
    %v2948 = vsub.f32 %v200, %v2947
    %v2949 = vand.u32 %v2948, 4294901760
    %2950 = vmatpush.msra.mxu0 %v2949
    %v2951 = vand.u32 %v192, 4294901760
    %v2952 = vsub.f32 %v192, %v2951
    %v2953 = vand.u32 %v2952, 4294901760
    %2954 = vmatpush.msra.mxu0 %v2953
    %v2955 = vand.u32 %v184, 4294901760
    %v2956 = vsub.f32 %v184, %v2955
    %v2957 = vand.u32 %v2956, 4294901760
    %2958 = vmatpush.msra.mxu0 %v2957
    %v2959 = vand.u32 %v176, 4294901760
    %v2960 = vsub.f32 %v176, %v2959
    %v2961 = vand.u32 %v2960, 4294901760
    %2962 = vmatpush.msra.mxu0 %v2961
    %v2963 = vand.u32 %v168, 4294901760
    %v2964 = vsub.f32 %v168, %v2963
    %v2965 = vand.u32 %v2964, 4294901760
    %2966 = vmatpush.msra.mxu0 %v2965
    %v2967 = vand.u32 %v160, 4294901760
    %v2968 = vsub.f32 %v160, %v2967
    %v2969 = vand.u32 %v2968, 4294901760
    %2970 = vmatpush.msra.mxu0 %v2969
    %v2971 = vand.u32 %v28, 4294901760
    %2972 = vmatmul.f32.gmra.mxu0 %v2971
    %v2973 = vpop.f32.mrf.mxu0
    %v2974 = vadd.f32 %v2905, %v2973
    %2975 = vdwg.mxu0
    %v2976 = vand.u32 %v280, 4294901760
    %2977 = vmatpush.msra.mxu0 %v2976
    %v2978 = vand.u32 %v272, 4294901760
    %2979 = vmatpush.msra.mxu0 %v2978
    %v2980 = vand.u32 %v264, 4294901760
    %2981 = vmatpush.msra.mxu0 %v2980
    %v2982 = vand.u32 %v256, 4294901760
    %2983 = vmatpush.msra.mxu0 %v2982
    %v2984 = vand.u32 %v248, 4294901760
    %2985 = vmatpush.msra.mxu0 %v2984
    %v2986 = vand.u32 %v240, 4294901760
    %2987 = vmatpush.msra.mxu0 %v2986
    %v2988 = vand.u32 %v232, 4294901760
    %2989 = vmatpush.msra.mxu0 %v2988
    %v2990 = vand.u32 %v224, 4294901760
    %2991 = vmatpush.msra.mxu0 %v2990
    %v2992 = vand.u32 %v216, 4294901760
    %2993 = vmatpush.msra.mxu0 %v2992
    %v2994 = vand.u32 %v208, 4294901760
    %2995 = vmatpush.msra.mxu0 %v2994
    %v2996 = vand.u32 %v200, 4294901760
    %2997 = vmatpush.msra.mxu0 %v2996
    %v2998 = vand.u32 %v192, 4294901760
    %2999 = vmatpush.msra.mxu0 %v2998
    %v3000 = vand.u32 %v184, 4294901760
    %3001 = vmatpush.msra.mxu0 %v3000
    %v3002 = vand.u32 %v176, 4294901760
    %3003 = vmatpush.msra.mxu0 %v3002
    %v3004 = vand.u32 %v168, 4294901760
    %3005 = vmatpush.msra.mxu0 %v3004
    %v3006 = vand.u32 %v160, 4294901760
    %3007 = vmatpush.msra.mxu0 %v3006
    %v3008 = vand.u32 %v28, 4294901760
    %3009 = vmatmul.f32.gmra.mxu0 %v3008
    %v3010 = vpop.f32.mrf.mxu0
    %v3011 = vadd.f32 %v2974, %v3010
    %3012 = vdwg.mxu0
    %v3013 = vand.u32 %v153, 4294901760
    %3014 = vmatpush.msra.mxu0 %v3013
    %v3015 = vand.u32 %v145, 4294901760
    %3016 = vmatpush.msra.mxu0 %v3015
    %v3017 = vand.u32 %v137, 4294901760
    %3018 = vmatpush.msra.mxu0 %v3017
    %v3019 = vand.u32 %v129, 4294901760
    %3020 = vmatpush.msra.mxu0 %v3019
    %v3021 = vand.u32 %v121, 4294901760
    %3022 = vmatpush.msra.mxu0 %v3021
    %v3023 = vand.u32 %v113, 4294901760
    %3024 = vmatpush.msra.mxu0 %v3023
    %v3025 = vand.u32 %v105, 4294901760
    %3026 = vmatpush.msra.mxu0 %v3025
    %v3027 = vand.u32 %v97, 4294901760
    %3028 = vmatpush.msra.mxu0 %v3027
    %v3029 = vand.u32 %v89, 4294901760
    %3030 = vmatpush.msra.mxu0 %v3029
    %v3031 = vand.u32 %v81, 4294901760
    %3032 = vmatpush.msra.mxu0 %v3031
    %v3033 = vand.u32 %v73, 4294901760
    %3034 = vmatpush.msra.mxu0 %v3033
    %v3035 = vand.u32 %v65, 4294901760
    %3036 = vmatpush.msra.mxu0 %v3035
    %v3037 = vand.u32 %v57, 4294901760
    %3038 = vmatpush.msra.mxu0 %v3037
    %v3039 = vand.u32 %v49, 4294901760
    %3040 = vmatpush.msra.mxu0 %v3039
    %v3041 = vand.u32 %v41, 4294901760
    %3042 = vmatpush.msra.mxu0 %v3041
    %v3043 = vand.u32 %v33, 4294901760
    %3044 = vmatpush.msra.mxu0 %v3043
    %v3045 = vand.u32 %v27, 4294901760
    %v3046 = vsub.f32 %v27, %v3045
    %v3047 = vand.u32 %v3046, 4294901760
    %v3048 = vsub.f32 %v3046, %v3047
    %v3049 = vand.u32 %v3048, 4294901760
    %3050 = vmatmul.f32.gmra.mxu0 %v3049
    %v3051 = vpop.f32.mrf.mxu0
    %v3052 = vadd.f32 0.0, %v3051
    %3053 = vdwg.mxu0
    %v3054 = vand.u32 %v153, 4294901760
    %v3055 = vsub.f32 %v153, %v3054
    %v3056 = vand.u32 %v3055, 4294901760
    %v3057 = vsub.f32 %v3055, %v3056
    %v3058 = vand.u32 %v3057, 4294901760
    %3059 = vmatpush.msra.mxu0 %v3058
    %v3060 = vand.u32 %v145, 4294901760
    %v3061 = vsub.f32 %v145, %v3060
    %v3062 = vand.u32 %v3061, 4294901760
    %v3063 = vsub.f32 %v3061, %v3062
    %v3064 = vand.u32 %v3063, 4294901760
    %3065 = vmatpush.msra.mxu0 %v3064
    %v3066 = vand.u32 %v137, 4294901760
    %v3067 = vsub.f32 %v137, %v3066
    %v3068 = vand.u32 %v3067, 4294901760
    %v3069 = vsub.f32 %v3067, %v3068
    %v3070 = vand.u32 %v3069, 4294901760
    %3071 = vmatpush.msra.mxu0 %v3070
    %v3072 = vand.u32 %v129, 4294901760
    %v3073 = vsub.f32 %v129, %v3072
    %v3074 = vand.u32 %v3073, 4294901760
    %v3075 = vsub.f32 %v3073, %v3074
    %v3076 = vand.u32 %v3075, 4294901760
    %3077 = vmatpush.msra.mxu0 %v3076
    %v3078 = vand.u32 %v121, 4294901760
    %v3079 = vsub.f32 %v121, %v3078
    %v3080 = vand.u32 %v3079, 4294901760
    %v3081 = vsub.f32 %v3079, %v3080
    %v3082 = vand.u32 %v3081, 4294901760
    %3083 = vmatpush.msra.mxu0 %v3082
    %v3084 = vand.u32 %v113, 4294901760
    %v3085 = vsub.f32 %v113, %v3084
    %v3086 = vand.u32 %v3085, 4294901760
    %v3087 = vsub.f32 %v3085, %v3086
    %v3088 = vand.u32 %v3087, 4294901760
    %3089 = vmatpush.msra.mxu0 %v3088
    %v3090 = vand.u32 %v105, 4294901760
    %v3091 = vsub.f32 %v105, %v3090
    %v3092 = vand.u32 %v3091, 4294901760
    %v3093 = vsub.f32 %v3091, %v3092
    %v3094 = vand.u32 %v3093, 4294901760
    %3095 = vmatpush.msra.mxu0 %v3094
    %v3096 = vand.u32 %v97, 4294901760
    %v3097 = vsub.f32 %v97, %v3096
    %v3098 = vand.u32 %v3097, 4294901760
    %v3099 = vsub.f32 %v3097, %v3098
    %v3100 = vand.u32 %v3099, 4294901760
    %3101 = vmatpush.msra.mxu0 %v3100
    %v3102 = vand.u32 %v89, 4294901760
    %v3103 = vsub.f32 %v89, %v3102
    %v3104 = vand.u32 %v3103, 4294901760
    %v3105 = vsub.f32 %v3103, %v3104
    %v3106 = vand.u32 %v3105, 4294901760
    %3107 = vmatpush.msra.mxu0 %v3106
    %v3108 = vand.u32 %v81, 4294901760
    %v3109 = vsub.f32 %v81, %v3108
    %v3110 = vand.u32 %v3109, 4294901760
    %v3111 = vsub.f32 %v3109, %v3110
    %v3112 = vand.u32 %v3111, 4294901760
    %3113 = vmatpush.msra.mxu0 %v3112
    %v3114 = vand.u32 %v73, 4294901760
    %v3115 = vsub.f32 %v73, %v3114
    %v3116 = vand.u32 %v3115, 4294901760
    %v3117 = vsub.f32 %v3115, %v3116
    %v3118 = vand.u32 %v3117, 4294901760
    %3119 = vmatpush.msra.mxu0 %v3118
    %v3120 = vand.u32 %v65, 4294901760
    %v3121 = vsub.f32 %v65, %v3120
    %v3122 = vand.u32 %v3121, 4294901760
    %v3123 = vsub.f32 %v3121, %v3122
    %v3124 = vand.u32 %v3123, 4294901760
    %3125 = vmatpush.msra.mxu0 %v3124
    %v3126 = vand.u32 %v57, 4294901760
    %v3127 = vsub.f32 %v57, %v3126
    %v3128 = vand.u32 %v3127, 4294901760
    %v3129 = vsub.f32 %v3127, %v3128
    %v3130 = vand.u32 %v3129, 4294901760
    %3131 = vmatpush.msra.mxu0 %v3130
    %v3132 = vand.u32 %v49, 4294901760
    %v3133 = vsub.f32 %v49, %v3132
    %v3134 = vand.u32 %v3133, 4294901760
    %v3135 = vsub.f32 %v3133, %v3134
    %v3136 = vand.u32 %v3135, 4294901760
    %3137 = vmatpush.msra.mxu0 %v3136
    %v3138 = vand.u32 %v41, 4294901760
    %v3139 = vsub.f32 %v41, %v3138
    %v3140 = vand.u32 %v3139, 4294901760
    %v3141 = vsub.f32 %v3139, %v3140
    %v3142 = vand.u32 %v3141, 4294901760
    %3143 = vmatpush.msra.mxu0 %v3142
    %v3144 = vand.u32 %v33, 4294901760
    %v3145 = vsub.f32 %v33, %v3144
    %v3146 = vand.u32 %v3145, 4294901760
    %v3147 = vsub.f32 %v3145, %v3146
    %v3148 = vand.u32 %v3147, 4294901760
    %3149 = vmatpush.msra.mxu0 %v3148
    %v3150 = vand.u32 %v27, 4294901760
    %3151 = vmatmul.f32.gmra.mxu0 %v3150
    %v3152 = vpop.f32.mrf.mxu0
    %v3153 = vadd.f32 %v3052, %v3152
    %3154 = vdwg.mxu0
    %v3155 = vand.u32 %v153, 4294901760
    %v3156 = vsub.f32 %v153, %v3155
    %3157 = vmatpush.msra.mxu0 %v3156
    %v3158 = vand.u32 %v145, 4294901760
    %v3159 = vsub.f32 %v145, %v3158
    %3160 = vmatpush.msra.mxu0 %v3159
    %v3161 = vand.u32 %v137, 4294901760
    %v3162 = vsub.f32 %v137, %v3161
    %3163 = vmatpush.msra.mxu0 %v3162
    %v3164 = vand.u32 %v129, 4294901760
    %v3165 = vsub.f32 %v129, %v3164
    %3166 = vmatpush.msra.mxu0 %v3165
    %v3167 = vand.u32 %v121, 4294901760
    %v3168 = vsub.f32 %v121, %v3167
    %3169 = vmatpush.msra.mxu0 %v3168
    %v3170 = vand.u32 %v113, 4294901760
    %v3171 = vsub.f32 %v113, %v3170
    %3172 = vmatpush.msra.mxu0 %v3171
    %v3173 = vand.u32 %v105, 4294901760
    %v3174 = vsub.f32 %v105, %v3173
    %3175 = vmatpush.msra.mxu0 %v3174
    %v3176 = vand.u32 %v97, 4294901760
    %v3177 = vsub.f32 %v97, %v3176
    %3178 = vmatpush.msra.mxu0 %v3177
    %v3179 = vand.u32 %v89, 4294901760
    %v3180 = vsub.f32 %v89, %v3179
    %3181 = vmatpush.msra.mxu0 %v3180
    %v3182 = vand.u32 %v81, 4294901760
    %v3183 = vsub.f32 %v81, %v3182
    %3184 = vmatpush.msra.mxu0 %v3183
    %v3185 = vand.u32 %v73, 4294901760
    %v3186 = vsub.f32 %v73, %v3185
    %3187 = vmatpush.msra.mxu0 %v3186
    %v3188 = vand.u32 %v65, 4294901760
    %v3189 = vsub.f32 %v65, %v3188
    %3190 = vmatpush.msra.mxu0 %v3189
    %v3191 = vand.u32 %v57, 4294901760
    %v3192 = vsub.f32 %v57, %v3191
    %3193 = vmatpush.msra.mxu0 %v3192
    %v3194 = vand.u32 %v49, 4294901760
    %v3195 = vsub.f32 %v49, %v3194
    %3196 = vmatpush.msra.mxu0 %v3195
    %v3197 = vand.u32 %v41, 4294901760
    %v3198 = vsub.f32 %v41, %v3197
    %3199 = vmatpush.msra.mxu0 %v3198
    %v3200 = vand.u32 %v33, 4294901760
    %v3201 = vsub.f32 %v33, %v3200
    %3202 = vmatpush.msra.mxu0 %v3201
    %v3203 = vand.u32 %v27, 4294901760
    %v3204 = vsub.f32 %v27, %v3203
    %3205 = vmatmul.f32.gmra.mxu0 %v3204
    %v3206 = vpop.f32.mrf.mxu0
    %v3207 = vadd.f32 %v3153, %v3206
    %3208 = vdwg.mxu0
    %v3209 = vand.u32 %v153, 4294901760
    %3210 = vmatpush.msra.mxu0 %v3209
    %v3211 = vand.u32 %v145, 4294901760
    %3212 = vmatpush.msra.mxu0 %v3211
    %v3213 = vand.u32 %v137, 4294901760
    %3214 = vmatpush.msra.mxu0 %v3213
    %v3215 = vand.u32 %v129, 4294901760
    %3216 = vmatpush.msra.mxu0 %v3215
    %v3217 = vand.u32 %v121, 4294901760
    %3218 = vmatpush.msra.mxu0 %v3217
    %v3219 = vand.u32 %v113, 4294901760
    %3220 = vmatpush.msra.mxu0 %v3219
    %v3221 = vand.u32 %v105, 4294901760
    %3222 = vmatpush.msra.mxu0 %v3221
    %v3223 = vand.u32 %v97, 4294901760
    %3224 = vmatpush.msra.mxu0 %v3223
    %v3225 = vand.u32 %v89, 4294901760
    %3226 = vmatpush.msra.mxu0 %v3225
    %v3227 = vand.u32 %v81, 4294901760
    %3228 = vmatpush.msra.mxu0 %v3227
    %v3229 = vand.u32 %v73, 4294901760
    %3230 = vmatpush.msra.mxu0 %v3229
    %v3231 = vand.u32 %v65, 4294901760
    %3232 = vmatpush.msra.mxu0 %v3231
    %v3233 = vand.u32 %v57, 4294901760
    %3234 = vmatpush.msra.mxu0 %v3233
    %v3235 = vand.u32 %v49, 4294901760
    %3236 = vmatpush.msra.mxu0 %v3235
    %v3237 = vand.u32 %v41, 4294901760
    %3238 = vmatpush.msra.mxu0 %v3237
    %v3239 = vand.u32 %v33, 4294901760
    %3240 = vmatpush.msra.mxu0 %v3239
    %v3241 = vand.u32 %v27, 4294901760
    %v3242 = vsub.f32 %v27, %v3241
    %v3243 = vand.u32 %v3242, 4294901760
    %3244 = vmatmul.f32.gmra.mxu0 %v3243
    %v3245 = vpop.f32.mrf.mxu0
    %v3246 = vadd.f32 %v3207, %v3245
    %3247 = vdwg.mxu0
    %v3248 = vand.u32 %v153, 4294901760
    %v3249 = vsub.f32 %v153, %v3248
    %v3250 = vand.u32 %v3249, 4294901760
    %3251 = vmatpush.msra.mxu0 %v3250
    %v3252 = vand.u32 %v145, 4294901760
    %v3253 = vsub.f32 %v145, %v3252
    %v3254 = vand.u32 %v3253, 4294901760
    %3255 = vmatpush.msra.mxu0 %v3254
    %v3256 = vand.u32 %v137, 4294901760
    %v3257 = vsub.f32 %v137, %v3256
    %v3258 = vand.u32 %v3257, 4294901760
    %3259 = vmatpush.msra.mxu0 %v3258
    %v3260 = vand.u32 %v129, 4294901760
    %v3261 = vsub.f32 %v129, %v3260
    %v3262 = vand.u32 %v3261, 4294901760
    %3263 = vmatpush.msra.mxu0 %v3262
    %v3264 = vand.u32 %v121, 4294901760
    %v3265 = vsub.f32 %v121, %v3264
    %v3266 = vand.u32 %v3265, 4294901760
    %3267 = vmatpush.msra.mxu0 %v3266
    %v3268 = vand.u32 %v113, 4294901760
    %v3269 = vsub.f32 %v113, %v3268
    %v3270 = vand.u32 %v3269, 4294901760
    %3271 = vmatpush.msra.mxu0 %v3270
    %v3272 = vand.u32 %v105, 4294901760
    %v3273 = vsub.f32 %v105, %v3272
    %v3274 = vand.u32 %v3273, 4294901760
    %3275 = vmatpush.msra.mxu0 %v3274
    %v3276 = vand.u32 %v97, 4294901760
    %v3277 = vsub.f32 %v97, %v3276
    %v3278 = vand.u32 %v3277, 4294901760
    %3279 = vmatpush.msra.mxu0 %v3278
    %v3280 = vand.u32 %v89, 4294901760
    %v3281 = vsub.f32 %v89, %v3280
    %v3282 = vand.u32 %v3281, 4294901760
    %3283 = vmatpush.msra.mxu0 %v3282
    %v3284 = vand.u32 %v81, 4294901760
    %v3285 = vsub.f32 %v81, %v3284
    %v3286 = vand.u32 %v3285, 4294901760
    %3287 = vmatpush.msra.mxu0 %v3286
    %v3288 = vand.u32 %v73, 4294901760
    %v3289 = vsub.f32 %v73, %v3288
    %v3290 = vand.u32 %v3289, 4294901760
    %3291 = vmatpush.msra.mxu0 %v3290
    %v3292 = vand.u32 %v65, 4294901760
    %v3293 = vsub.f32 %v65, %v3292
    %v3294 = vand.u32 %v3293, 4294901760
    %3295 = vmatpush.msra.mxu0 %v3294
    %v3296 = vand.u32 %v57, 4294901760
    %v3297 = vsub.f32 %v57, %v3296
    %v3298 = vand.u32 %v3297, 4294901760
    %3299 = vmatpush.msra.mxu0 %v3298
    %v3300 = vand.u32 %v49, 4294901760
    %v3301 = vsub.f32 %v49, %v3300
    %v3302 = vand.u32 %v3301, 4294901760
    %3303 = vmatpush.msra.mxu0 %v3302
    %v3304 = vand.u32 %v41, 4294901760
    %v3305 = vsub.f32 %v41, %v3304
    %v3306 = vand.u32 %v3305, 4294901760
    %3307 = vmatpush.msra.mxu0 %v3306
    %v3308 = vand.u32 %v33, 4294901760
    %v3309 = vsub.f32 %v33, %v3308
    %v3310 = vand.u32 %v3309, 4294901760
    %3311 = vmatpush.msra.mxu0 %v3310
    %v3312 = vand.u32 %v27, 4294901760
    %3313 = vmatmul.f32.gmra.mxu0 %v3312
    %v3314 = vpop.f32.mrf.mxu0
    %v3315 = vadd.f32 %v3246, %v3314
    %3316 = vdwg.mxu0
    %v3317 = vand.u32 %v153, 4294901760
    %3318 = vmatpush.msra.mxu0 %v3317
    %v3319 = vand.u32 %v145, 4294901760
    %3320 = vmatpush.msra.mxu0 %v3319
    %v3321 = vand.u32 %v137, 4294901760
    %3322 = vmatpush.msra.mxu0 %v3321
    %v3323 = vand.u32 %v129, 4294901760
    %3324 = vmatpush.msra.mxu0 %v3323
    %v3325 = vand.u32 %v121, 4294901760
    %3326 = vmatpush.msra.mxu0 %v3325
    %v3327 = vand.u32 %v113, 4294901760
    %3328 = vmatpush.msra.mxu0 %v3327
    %v3329 = vand.u32 %v105, 4294901760
    %3330 = vmatpush.msra.mxu0 %v3329
    %v3331 = vand.u32 %v97, 4294901760
    %3332 = vmatpush.msra.mxu0 %v3331
    %v3333 = vand.u32 %v89, 4294901760
    %3334 = vmatpush.msra.mxu0 %v3333
    %v3335 = vand.u32 %v81, 4294901760
    %3336 = vmatpush.msra.mxu0 %v3335
    %v3337 = vand.u32 %v73, 4294901760
    %3338 = vmatpush.msra.mxu0 %v3337
    %v3339 = vand.u32 %v65, 4294901760
    %3340 = vmatpush.msra.mxu0 %v3339
    %v3341 = vand.u32 %v57, 4294901760
    %3342 = vmatpush.msra.mxu0 %v3341
    %v3343 = vand.u32 %v49, 4294901760
    %3344 = vmatpush.msra.mxu0 %v3343
    %v3345 = vand.u32 %v41, 4294901760
    %3346 = vmatpush.msra.mxu0 %v3345
    %v3347 = vand.u32 %v33, 4294901760
    %3348 = vmatpush.msra.mxu0 %v3347
    %v3349 = vand.u32 %v27, 4294901760
    %3350 = vmatmul.f32.gmra.mxu0 %v3349
    %v3351 = vpop.f32.mrf.mxu0
    %v3352 = vadd.f32 %v3315, %v3351
    %3353 = vdwg.mxu0
    %v3354 = vand.u32 %v281, 4294901760
    %3355 = vmatpush.msra.mxu0 %v3354
    %v3356 = vand.u32 %v273, 4294901760
    %3357 = vmatpush.msra.mxu0 %v3356
    %v3358 = vand.u32 %v265, 4294901760
    %3359 = vmatpush.msra.mxu0 %v3358
    %v3360 = vand.u32 %v257, 4294901760
    %3361 = vmatpush.msra.mxu0 %v3360
    %v3362 = vand.u32 %v249, 4294901760
    %3363 = vmatpush.msra.mxu0 %v3362
    %v3364 = vand.u32 %v241, 4294901760
    %3365 = vmatpush.msra.mxu0 %v3364
    %v3366 = vand.u32 %v233, 4294901760
    %3367 = vmatpush.msra.mxu0 %v3366
    %v3368 = vand.u32 %v225, 4294901760
    %3369 = vmatpush.msra.mxu0 %v3368
    %v3370 = vand.u32 %v217, 4294901760
    %3371 = vmatpush.msra.mxu0 %v3370
    %v3372 = vand.u32 %v209, 4294901760
    %3373 = vmatpush.msra.mxu0 %v3372
    %v3374 = vand.u32 %v201, 4294901760
    %3375 = vmatpush.msra.mxu0 %v3374
    %v3376 = vand.u32 %v193, 4294901760
    %3377 = vmatpush.msra.mxu0 %v3376
    %v3378 = vand.u32 %v185, 4294901760
    %3379 = vmatpush.msra.mxu0 %v3378
    %v3380 = vand.u32 %v177, 4294901760
    %3381 = vmatpush.msra.mxu0 %v3380
    %v3382 = vand.u32 %v169, 4294901760
    %3383 = vmatpush.msra.mxu0 %v3382
    %v3384 = vand.u32 %v161, 4294901760
    %3385 = vmatpush.msra.mxu0 %v3384
    %v3386 = vand.u32 %v28, 4294901760
    %v3387 = vsub.f32 %v28, %v3386
    %v3388 = vand.u32 %v3387, 4294901760
    %v3389 = vsub.f32 %v3387, %v3388
    %v3390 = vand.u32 %v3389, 4294901760
    %3391 = vmatmul.f32.gmra.mxu0 %v3390
    %v3392 = vpop.f32.mrf.mxu0
    %v3393 = vadd.f32 %v3352, %v3392
    %3394 = vdwg.mxu0
    %v3395 = vand.u32 %v281, 4294901760
    %v3396 = vsub.f32 %v281, %v3395
    %v3397 = vand.u32 %v3396, 4294901760
    %v3398 = vsub.f32 %v3396, %v3397
    %v3399 = vand.u32 %v3398, 4294901760
    %3400 = vmatpush.msra.mxu0 %v3399
    %v3401 = vand.u32 %v273, 4294901760
    %v3402 = vsub.f32 %v273, %v3401
    %v3403 = vand.u32 %v3402, 4294901760
    %v3404 = vsub.f32 %v3402, %v3403
    %v3405 = vand.u32 %v3404, 4294901760
    %3406 = vmatpush.msra.mxu0 %v3405
    %v3407 = vand.u32 %v265, 4294901760
    %v3408 = vsub.f32 %v265, %v3407
    %v3409 = vand.u32 %v3408, 4294901760
    %v3410 = vsub.f32 %v3408, %v3409
    %v3411 = vand.u32 %v3410, 4294901760
    %3412 = vmatpush.msra.mxu0 %v3411
    %v3413 = vand.u32 %v257, 4294901760
    %v3414 = vsub.f32 %v257, %v3413
    %v3415 = vand.u32 %v3414, 4294901760
    %v3416 = vsub.f32 %v3414, %v3415
    %v3417 = vand.u32 %v3416, 4294901760
    %3418 = vmatpush.msra.mxu0 %v3417
    %v3419 = vand.u32 %v249, 4294901760
    %v3420 = vsub.f32 %v249, %v3419
    %v3421 = vand.u32 %v3420, 4294901760
    %v3422 = vsub.f32 %v3420, %v3421
    %v3423 = vand.u32 %v3422, 4294901760
    %3424 = vmatpush.msra.mxu0 %v3423
    %v3425 = vand.u32 %v241, 4294901760
    %v3426 = vsub.f32 %v241, %v3425
    %v3427 = vand.u32 %v3426, 4294901760
    %v3428 = vsub.f32 %v3426, %v3427
    %v3429 = vand.u32 %v3428, 4294901760
    %3430 = vmatpush.msra.mxu0 %v3429
    %v3431 = vand.u32 %v233, 4294901760
    %v3432 = vsub.f32 %v233, %v3431
    %v3433 = vand.u32 %v3432, 4294901760
    %v3434 = vsub.f32 %v3432, %v3433
    %v3435 = vand.u32 %v3434, 4294901760
    %3436 = vmatpush.msra.mxu0 %v3435
    %v3437 = vand.u32 %v225, 4294901760
    %v3438 = vsub.f32 %v225, %v3437
    %v3439 = vand.u32 %v3438, 4294901760
    %v3440 = vsub.f32 %v3438, %v3439
    %v3441 = vand.u32 %v3440, 4294901760
    %3442 = vmatpush.msra.mxu0 %v3441
    %v3443 = vand.u32 %v217, 4294901760
    %v3444 = vsub.f32 %v217, %v3443
    %v3445 = vand.u32 %v3444, 4294901760
    %v3446 = vsub.f32 %v3444, %v3445
    %v3447 = vand.u32 %v3446, 4294901760
    %3448 = vmatpush.msra.mxu0 %v3447
    %v3449 = vand.u32 %v209, 4294901760
    %v3450 = vsub.f32 %v209, %v3449
    %v3451 = vand.u32 %v3450, 4294901760
    %v3452 = vsub.f32 %v3450, %v3451
    %v3453 = vand.u32 %v3452, 4294901760
    %3454 = vmatpush.msra.mxu0 %v3453
    %v3455 = vand.u32 %v201, 4294901760
    %v3456 = vsub.f32 %v201, %v3455
    %v3457 = vand.u32 %v3456, 4294901760
    %v3458 = vsub.f32 %v3456, %v3457
    %v3459 = vand.u32 %v3458, 4294901760
    %3460 = vmatpush.msra.mxu0 %v3459
    %v3461 = vand.u32 %v193, 4294901760
    %v3462 = vsub.f32 %v193, %v3461
    %v3463 = vand.u32 %v3462, 4294901760
    %v3464 = vsub.f32 %v3462, %v3463
    %v3465 = vand.u32 %v3464, 4294901760
    %3466 = vmatpush.msra.mxu0 %v3465
    %v3467 = vand.u32 %v185, 4294901760
    %v3468 = vsub.f32 %v185, %v3467
    %v3469 = vand.u32 %v3468, 4294901760
    %v3470 = vsub.f32 %v3468, %v3469
    %v3471 = vand.u32 %v3470, 4294901760
    %3472 = vmatpush.msra.mxu0 %v3471
    %v3473 = vand.u32 %v177, 4294901760
    %v3474 = vsub.f32 %v177, %v3473
    %v3475 = vand.u32 %v3474, 4294901760
    %v3476 = vsub.f32 %v3474, %v3475
    %v3477 = vand.u32 %v3476, 4294901760
    %3478 = vmatpush.msra.mxu0 %v3477
    %v3479 = vand.u32 %v169, 4294901760
    %v3480 = vsub.f32 %v169, %v3479
    %v3481 = vand.u32 %v3480, 4294901760
    %v3482 = vsub.f32 %v3480, %v3481
    %v3483 = vand.u32 %v3482, 4294901760
    %3484 = vmatpush.msra.mxu0 %v3483
    %v3485 = vand.u32 %v161, 4294901760
    %v3486 = vsub.f32 %v161, %v3485
    %v3487 = vand.u32 %v3486, 4294901760
    %v3488 = vsub.f32 %v3486, %v3487
    %v3489 = vand.u32 %v3488, 4294901760
    %3490 = vmatpush.msra.mxu0 %v3489
    %v3491 = vand.u32 %v28, 4294901760
    %3492 = vmatmul.f32.gmra.mxu0 %v3491
    %v3493 = vpop.f32.mrf.mxu0
    %v3494 = vadd.f32 %v3393, %v3493
    %3495 = vdwg.mxu0
    %v3496 = vand.u32 %v281, 4294901760
    %v3497 = vsub.f32 %v281, %v3496
    %3498 = vmatpush.msra.mxu0 %v3497
    %v3499 = vand.u32 %v273, 4294901760
    %v3500 = vsub.f32 %v273, %v3499
    %3501 = vmatpush.msra.mxu0 %v3500
    %v3502 = vand.u32 %v265, 4294901760
    %v3503 = vsub.f32 %v265, %v3502
    %3504 = vmatpush.msra.mxu0 %v3503
    %v3505 = vand.u32 %v257, 4294901760
    %v3506 = vsub.f32 %v257, %v3505
    %3507 = vmatpush.msra.mxu0 %v3506
    %v3508 = vand.u32 %v249, 4294901760
    %v3509 = vsub.f32 %v249, %v3508
    %3510 = vmatpush.msra.mxu0 %v3509
    %v3511 = vand.u32 %v241, 4294901760
    %v3512 = vsub.f32 %v241, %v3511
    %3513 = vmatpush.msra.mxu0 %v3512
    %v3514 = vand.u32 %v233, 4294901760
    %v3515 = vsub.f32 %v233, %v3514
    %3516 = vmatpush.msra.mxu0 %v3515
    %v3517 = vand.u32 %v225, 4294901760
    %v3518 = vsub.f32 %v225, %v3517
    %3519 = vmatpush.msra.mxu0 %v3518
    %v3520 = vand.u32 %v217, 4294901760
    %v3521 = vsub.f32 %v217, %v3520
    %3522 = vmatpush.msra.mxu0 %v3521
    %v3523 = vand.u32 %v209, 4294901760
    %v3524 = vsub.f32 %v209, %v3523
    %3525 = vmatpush.msra.mxu0 %v3524
    %v3526 = vand.u32 %v201, 4294901760
    %v3527 = vsub.f32 %v201, %v3526
    %3528 = vmatpush.msra.mxu0 %v3527
    %v3529 = vand.u32 %v193, 4294901760
    %v3530 = vsub.f32 %v193, %v3529
    %3531 = vmatpush.msra.mxu0 %v3530
    %v3532 = vand.u32 %v185, 4294901760
    %v3533 = vsub.f32 %v185, %v3532
    %3534 = vmatpush.msra.mxu0 %v3533
    %v3535 = vand.u32 %v177, 4294901760
    %v3536 = vsub.f32 %v177, %v3535
    %3537 = vmatpush.msra.mxu0 %v3536
    %v3538 = vand.u32 %v169, 4294901760
    %v3539 = vsub.f32 %v169, %v3538
    %3540 = vmatpush.msra.mxu0 %v3539
    %v3541 = vand.u32 %v161, 4294901760
    %v3542 = vsub.f32 %v161, %v3541
    %3543 = vmatpush.msra.mxu0 %v3542
    %v3544 = vand.u32 %v28, 4294901760
    %v3545 = vsub.f32 %v28, %v3544
    %3546 = vmatmul.f32.gmra.mxu0 %v3545
    %v3547 = vpop.f32.mrf.mxu0
    %v3548 = vadd.f32 %v3494, %v3547
    %3549 = vdwg.mxu0
    %v3550 = vand.u32 %v281, 4294901760
    %3551 = vmatpush.msra.mxu0 %v3550
    %v3552 = vand.u32 %v273, 4294901760
    %3553 = vmatpush.msra.mxu0 %v3552
    %v3554 = vand.u32 %v265, 4294901760
    %3555 = vmatpush.msra.mxu0 %v3554
    %v3556 = vand.u32 %v257, 4294901760
    %3557 = vmatpush.msra.mxu0 %v3556
    %v3558 = vand.u32 %v249, 4294901760
    %3559 = vmatpush.msra.mxu0 %v3558
    %v3560 = vand.u32 %v241, 4294901760
    %3561 = vmatpush.msra.mxu0 %v3560
    %v3562 = vand.u32 %v233, 4294901760
    %3563 = vmatpush.msra.mxu0 %v3562
    %v3564 = vand.u32 %v225, 4294901760
    %3565 = vmatpush.msra.mxu0 %v3564
    %v3566 = vand.u32 %v217, 4294901760
    %3567 = vmatpush.msra.mxu0 %v3566
    %v3568 = vand.u32 %v209, 4294901760
    %3569 = vmatpush.msra.mxu0 %v3568
    %v3570 = vand.u32 %v201, 4294901760
    %3571 = vmatpush.msra.mxu0 %v3570
    %v3572 = vand.u32 %v193, 4294901760
    %3573 = vmatpush.msra.mxu0 %v3572
    %v3574 = vand.u32 %v185, 4294901760
    %3575 = vmatpush.msra.mxu0 %v3574
    %v3576 = vand.u32 %v177, 4294901760
    %3577 = vmatpush.msra.mxu0 %v3576
    %v3578 = vand.u32 %v169, 4294901760
    %3579 = vmatpush.msra.mxu0 %v3578
    %v3580 = vand.u32 %v161, 4294901760
    %3581 = vmatpush.msra.mxu0 %v3580
    %v3582 = vand.u32 %v28, 4294901760
    %v3583 = vsub.f32 %v28, %v3582
    %v3584 = vand.u32 %v3583, 4294901760
    %3585 = vmatmul.f32.gmra.mxu0 %v3584
    %v3586 = vpop.f32.mrf.mxu0
    %v3587 = vadd.f32 %v3548, %v3586
    %3588 = vdwg.mxu0
    %v3589 = vand.u32 %v281, 4294901760
    %v3590 = vsub.f32 %v281, %v3589
    %v3591 = vand.u32 %v3590, 4294901760
    %3592 = vmatpush.msra.mxu0 %v3591
    %v3593 = vand.u32 %v273, 4294901760
    %v3594 = vsub.f32 %v273, %v3593
    %v3595 = vand.u32 %v3594, 4294901760
    %3596 = vmatpush.msra.mxu0 %v3595
    %v3597 = vand.u32 %v265, 4294901760
    %v3598 = vsub.f32 %v265, %v3597
    %v3599 = vand.u32 %v3598, 4294901760
    %3600 = vmatpush.msra.mxu0 %v3599
    %v3601 = vand.u32 %v257, 4294901760
    %v3602 = vsub.f32 %v257, %v3601
    %v3603 = vand.u32 %v3602, 4294901760
    %3604 = vmatpush.msra.mxu0 %v3603
    %v3605 = vand.u32 %v249, 4294901760
    %v3606 = vsub.f32 %v249, %v3605
    %v3607 = vand.u32 %v3606, 4294901760
    %3608 = vmatpush.msra.mxu0 %v3607
    %v3609 = vand.u32 %v241, 4294901760
    %v3610 = vsub.f32 %v241, %v3609
    %v3611 = vand.u32 %v3610, 4294901760
    %3612 = vmatpush.msra.mxu0 %v3611
    %v3613 = vand.u32 %v233, 4294901760
    %v3614 = vsub.f32 %v233, %v3613
    %v3615 = vand.u32 %v3614, 4294901760
    %3616 = vmatpush.msra.mxu0 %v3615
    %v3617 = vand.u32 %v225, 4294901760
    %v3618 = vsub.f32 %v225, %v3617
    %v3619 = vand.u32 %v3618, 4294901760
    %3620 = vmatpush.msra.mxu0 %v3619
    %v3621 = vand.u32 %v217, 4294901760
    %v3622 = vsub.f32 %v217, %v3621
    %v3623 = vand.u32 %v3622, 4294901760
    %3624 = vmatpush.msra.mxu0 %v3623
    %v3625 = vand.u32 %v209, 4294901760
    %v3626 = vsub.f32 %v209, %v3625
    %v3627 = vand.u32 %v3626, 4294901760
    %3628 = vmatpush.msra.mxu0 %v3627
    %v3629 = vand.u32 %v201, 4294901760
    %v3630 = vsub.f32 %v201, %v3629
    %v3631 = vand.u32 %v3630, 4294901760
    %3632 = vmatpush.msra.mxu0 %v3631
    %v3633 = vand.u32 %v193, 4294901760
    %v3634 = vsub.f32 %v193, %v3633
    %v3635 = vand.u32 %v3634, 4294901760
    %3636 = vmatpush.msra.mxu0 %v3635
    %v3637 = vand.u32 %v185, 4294901760
    %v3638 = vsub.f32 %v185, %v3637
    %v3639 = vand.u32 %v3638, 4294901760
    %3640 = vmatpush.msra.mxu0 %v3639
    %v3641 = vand.u32 %v177, 4294901760
    %v3642 = vsub.f32 %v177, %v3641
    %v3643 = vand.u32 %v3642, 4294901760
    %3644 = vmatpush.msra.mxu0 %v3643
    %v3645 = vand.u32 %v169, 4294901760
    %v3646 = vsub.f32 %v169, %v3645
    %v3647 = vand.u32 %v3646, 4294901760
    %3648 = vmatpush.msra.mxu0 %v3647
    %v3649 = vand.u32 %v161, 4294901760
    %v3650 = vsub.f32 %v161, %v3649
    %v3651 = vand.u32 %v3650, 4294901760
    %3652 = vmatpush.msra.mxu0 %v3651
    %v3653 = vand.u32 %v28, 4294901760
    %3654 = vmatmul.f32.gmra.mxu0 %v3653
    %v3655 = vpop.f32.mrf.mxu0
    %v3656 = vadd.f32 %v3587, %v3655
    %3657 = vdwg.mxu0
    %v3658 = vand.u32 %v281, 4294901760
    %3659 = vmatpush.msra.mxu0 %v3658
    %v3660 = vand.u32 %v273, 4294901760
    %3661 = vmatpush.msra.mxu0 %v3660
    %v3662 = vand.u32 %v265, 4294901760
    %3663 = vmatpush.msra.mxu0 %v3662
    %v3664 = vand.u32 %v257, 4294901760
    %3665 = vmatpush.msra.mxu0 %v3664
    %v3666 = vand.u32 %v249, 4294901760
    %3667 = vmatpush.msra.mxu0 %v3666
    %v3668 = vand.u32 %v241, 4294901760
    %3669 = vmatpush.msra.mxu0 %v3668
    %v3670 = vand.u32 %v233, 4294901760
    %3671 = vmatpush.msra.mxu0 %v3670
    %v3672 = vand.u32 %v225, 4294901760
    %3673 = vmatpush.msra.mxu0 %v3672
    %v3674 = vand.u32 %v217, 4294901760
    %3675 = vmatpush.msra.mxu0 %v3674
    %v3676 = vand.u32 %v209, 4294901760
    %3677 = vmatpush.msra.mxu0 %v3676
    %v3678 = vand.u32 %v201, 4294901760
    %3679 = vmatpush.msra.mxu0 %v3678
    %v3680 = vand.u32 %v193, 4294901760
    %3681 = vmatpush.msra.mxu0 %v3680
    %v3682 = vand.u32 %v185, 4294901760
    %3683 = vmatpush.msra.mxu0 %v3682
    %v3684 = vand.u32 %v177, 4294901760
    %3685 = vmatpush.msra.mxu0 %v3684
    %v3686 = vand.u32 %v169, 4294901760
    %3687 = vmatpush.msra.mxu0 %v3686
    %v3688 = vand.u32 %v161, 4294901760
    %3689 = vmatpush.msra.mxu0 %v3688
    %v3690 = vand.u32 %v28, 4294901760
    %3691 = vmatmul.f32.gmra.mxu0 %v3690
    %v3692 = vpop.f32.mrf.mxu0
    %v3693 = vadd.f32 %v3656, %v3692
    %3694 = vdwg.mxu0
    %v3695 = vand.u32 %v154, 4294901760
    %3696 = vmatpush.msra.mxu0 %v3695
    %v3697 = vand.u32 %v146, 4294901760
    %3698 = vmatpush.msra.mxu0 %v3697
    %v3699 = vand.u32 %v138, 4294901760
    %3700 = vmatpush.msra.mxu0 %v3699
    %v3701 = vand.u32 %v130, 4294901760
    %3702 = vmatpush.msra.mxu0 %v3701
    %v3703 = vand.u32 %v122, 4294901760
    %3704 = vmatpush.msra.mxu0 %v3703
    %v3705 = vand.u32 %v114, 4294901760
    %3706 = vmatpush.msra.mxu0 %v3705
    %v3707 = vand.u32 %v106, 4294901760
    %3708 = vmatpush.msra.mxu0 %v3707
    %v3709 = vand.u32 %v98, 4294901760
    %3710 = vmatpush.msra.mxu0 %v3709
    %v3711 = vand.u32 %v90, 4294901760
    %3712 = vmatpush.msra.mxu0 %v3711
    %v3713 = vand.u32 %v82, 4294901760
    %3714 = vmatpush.msra.mxu0 %v3713
    %v3715 = vand.u32 %v74, 4294901760
    %3716 = vmatpush.msra.mxu0 %v3715
    %v3717 = vand.u32 %v66, 4294901760
    %3718 = vmatpush.msra.mxu0 %v3717
    %v3719 = vand.u32 %v58, 4294901760
    %3720 = vmatpush.msra.mxu0 %v3719
    %v3721 = vand.u32 %v50, 4294901760
    %3722 = vmatpush.msra.mxu0 %v3721
    %v3723 = vand.u32 %v42, 4294901760
    %3724 = vmatpush.msra.mxu0 %v3723
    %v3725 = vand.u32 %v34, 4294901760
    %3726 = vmatpush.msra.mxu0 %v3725
    %v3727 = vand.u32 %v27, 4294901760
    %v3728 = vsub.f32 %v27, %v3727
    %v3729 = vand.u32 %v3728, 4294901760
    %v3730 = vsub.f32 %v3728, %v3729
    %v3731 = vand.u32 %v3730, 4294901760
    %3732 = vmatmul.f32.gmra.mxu0 %v3731
    %v3733 = vpop.f32.mrf.mxu0
    %v3734 = vadd.f32 0.0, %v3733
    %3735 = vdwg.mxu0
    %v3736 = vand.u32 %v154, 4294901760
    %v3737 = vsub.f32 %v154, %v3736
    %v3738 = vand.u32 %v3737, 4294901760
    %v3739 = vsub.f32 %v3737, %v3738
    %v3740 = vand.u32 %v3739, 4294901760
    %3741 = vmatpush.msra.mxu0 %v3740
    %v3742 = vand.u32 %v146, 4294901760
    %v3743 = vsub.f32 %v146, %v3742
    %v3744 = vand.u32 %v3743, 4294901760
    %v3745 = vsub.f32 %v3743, %v3744
    %v3746 = vand.u32 %v3745, 4294901760
    %3747 = vmatpush.msra.mxu0 %v3746
    %v3748 = vand.u32 %v138, 4294901760
    %v3749 = vsub.f32 %v138, %v3748
    %v3750 = vand.u32 %v3749, 4294901760
    %v3751 = vsub.f32 %v3749, %v3750
    %v3752 = vand.u32 %v3751, 4294901760
    %3753 = vmatpush.msra.mxu0 %v3752
    %v3754 = vand.u32 %v130, 4294901760
    %v3755 = vsub.f32 %v130, %v3754
    %v3756 = vand.u32 %v3755, 4294901760
    %v3757 = vsub.f32 %v3755, %v3756
    %v3758 = vand.u32 %v3757, 4294901760
    %3759 = vmatpush.msra.mxu0 %v3758
    %v3760 = vand.u32 %v122, 4294901760
    %v3761 = vsub.f32 %v122, %v3760
    %v3762 = vand.u32 %v3761, 4294901760
    %v3763 = vsub.f32 %v3761, %v3762
    %v3764 = vand.u32 %v3763, 4294901760
    %3765 = vmatpush.msra.mxu0 %v3764
    %v3766 = vand.u32 %v114, 4294901760
    %v3767 = vsub.f32 %v114, %v3766
    %v3768 = vand.u32 %v3767, 4294901760
    %v3769 = vsub.f32 %v3767, %v3768
    %v3770 = vand.u32 %v3769, 4294901760
    %3771 = vmatpush.msra.mxu0 %v3770
    %v3772 = vand.u32 %v106, 4294901760
    %v3773 = vsub.f32 %v106, %v3772
    %v3774 = vand.u32 %v3773, 4294901760
    %v3775 = vsub.f32 %v3773, %v3774
    %v3776 = vand.u32 %v3775, 4294901760
    %3777 = vmatpush.msra.mxu0 %v3776
    %v3778 = vand.u32 %v98, 4294901760
    %v3779 = vsub.f32 %v98, %v3778
    %v3780 = vand.u32 %v3779, 4294901760
    %v3781 = vsub.f32 %v3779, %v3780
    %v3782 = vand.u32 %v3781, 4294901760
    %3783 = vmatpush.msra.mxu0 %v3782
    %v3784 = vand.u32 %v90, 4294901760
    %v3785 = vsub.f32 %v90, %v3784
    %v3786 = vand.u32 %v3785, 4294901760
    %v3787 = vsub.f32 %v3785, %v3786
    %v3788 = vand.u32 %v3787, 4294901760
    %3789 = vmatpush.msra.mxu0 %v3788
    %v3790 = vand.u32 %v82, 4294901760
    %v3791 = vsub.f32 %v82, %v3790
    %v3792 = vand.u32 %v3791, 4294901760
    %v3793 = vsub.f32 %v3791, %v3792
    %v3794 = vand.u32 %v3793, 4294901760
    %3795 = vmatpush.msra.mxu0 %v3794
    %v3796 = vand.u32 %v74, 4294901760
    %v3797 = vsub.f32 %v74, %v3796
    %v3798 = vand.u32 %v3797, 4294901760
    %v3799 = vsub.f32 %v3797, %v3798
    %v3800 = vand.u32 %v3799, 4294901760
    %3801 = vmatpush.msra.mxu0 %v3800
    %v3802 = vand.u32 %v66, 4294901760
    %v3803 = vsub.f32 %v66, %v3802
    %v3804 = vand.u32 %v3803, 4294901760
    %v3805 = vsub.f32 %v3803, %v3804
    %v3806 = vand.u32 %v3805, 4294901760
    %3807 = vmatpush.msra.mxu0 %v3806
    %v3808 = vand.u32 %v58, 4294901760
    %v3809 = vsub.f32 %v58, %v3808
    %v3810 = vand.u32 %v3809, 4294901760
    %v3811 = vsub.f32 %v3809, %v3810
    %v3812 = vand.u32 %v3811, 4294901760
    %3813 = vmatpush.msra.mxu0 %v3812
    %v3814 = vand.u32 %v50, 4294901760
    %v3815 = vsub.f32 %v50, %v3814
    %v3816 = vand.u32 %v3815, 4294901760
    %v3817 = vsub.f32 %v3815, %v3816
    %v3818 = vand.u32 %v3817, 4294901760
    %3819 = vmatpush.msra.mxu0 %v3818
    %v3820 = vand.u32 %v42, 4294901760
    %v3821 = vsub.f32 %v42, %v3820
    %v3822 = vand.u32 %v3821, 4294901760
    %v3823 = vsub.f32 %v3821, %v3822
    %v3824 = vand.u32 %v3823, 4294901760
    %3825 = vmatpush.msra.mxu0 %v3824
    %v3826 = vand.u32 %v34, 4294901760
    %v3827 = vsub.f32 %v34, %v3826
    %v3828 = vand.u32 %v3827, 4294901760
    %v3829 = vsub.f32 %v3827, %v3828
    %v3830 = vand.u32 %v3829, 4294901760
    %3831 = vmatpush.msra.mxu0 %v3830
    %v3832 = vand.u32 %v27, 4294901760
    %3833 = vmatmul.f32.gmra.mxu0 %v3832
    %v3834 = vpop.f32.mrf.mxu0
    %v3835 = vadd.f32 %v3734, %v3834
    %3836 = vdwg.mxu0
    %v3837 = vand.u32 %v154, 4294901760
    %v3838 = vsub.f32 %v154, %v3837
    %3839 = vmatpush.msra.mxu0 %v3838
    %v3840 = vand.u32 %v146, 4294901760
    %v3841 = vsub.f32 %v146, %v3840
    %3842 = vmatpush.msra.mxu0 %v3841
    %v3843 = vand.u32 %v138, 4294901760
    %v3844 = vsub.f32 %v138, %v3843
    %3845 = vmatpush.msra.mxu0 %v3844
    %v3846 = vand.u32 %v130, 4294901760
    %v3847 = vsub.f32 %v130, %v3846
    %3848 = vmatpush.msra.mxu0 %v3847
    %v3849 = vand.u32 %v122, 4294901760
    %v3850 = vsub.f32 %v122, %v3849
    %3851 = vmatpush.msra.mxu0 %v3850
    %v3852 = vand.u32 %v114, 4294901760
    %v3853 = vsub.f32 %v114, %v3852
    %3854 = vmatpush.msra.mxu0 %v3853
    %v3855 = vand.u32 %v106, 4294901760
    %v3856 = vsub.f32 %v106, %v3855
    %3857 = vmatpush.msra.mxu0 %v3856
    %v3858 = vand.u32 %v98, 4294901760
    %v3859 = vsub.f32 %v98, %v3858
    %3860 = vmatpush.msra.mxu0 %v3859
    %v3861 = vand.u32 %v90, 4294901760
    %v3862 = vsub.f32 %v90, %v3861
    %3863 = vmatpush.msra.mxu0 %v3862
    %v3864 = vand.u32 %v82, 4294901760
    %v3865 = vsub.f32 %v82, %v3864
    %3866 = vmatpush.msra.mxu0 %v3865
    %v3867 = vand.u32 %v74, 4294901760
    %v3868 = vsub.f32 %v74, %v3867
    %3869 = vmatpush.msra.mxu0 %v3868
    %v3870 = vand.u32 %v66, 4294901760
    %v3871 = vsub.f32 %v66, %v3870
    %3872 = vmatpush.msra.mxu0 %v3871
    %v3873 = vand.u32 %v58, 4294901760
    %v3874 = vsub.f32 %v58, %v3873
    %3875 = vmatpush.msra.mxu0 %v3874
    %v3876 = vand.u32 %v50, 4294901760
    %v3877 = vsub.f32 %v50, %v3876
    %3878 = vmatpush.msra.mxu0 %v3877
    %v3879 = vand.u32 %v42, 4294901760
    %v3880 = vsub.f32 %v42, %v3879
    %3881 = vmatpush.msra.mxu0 %v3880
    %v3882 = vand.u32 %v34, 4294901760
    %v3883 = vsub.f32 %v34, %v3882
    %3884 = vmatpush.msra.mxu0 %v3883
    %v3885 = vand.u32 %v27, 4294901760
    %v3886 = vsub.f32 %v27, %v3885
    %3887 = vmatmul.f32.gmra.mxu0 %v3886
    %v3888 = vpop.f32.mrf.mxu0
    %v3889 = vadd.f32 %v3835, %v3888
    %3890 = vdwg.mxu0
    %v3891 = vand.u32 %v154, 4294901760
    %3892 = vmatpush.msra.mxu0 %v3891
    %v3893 = vand.u32 %v146, 4294901760
    %3894 = vmatpush.msra.mxu0 %v3893
    %v3895 = vand.u32 %v138, 4294901760
    %3896 = vmatpush.msra.mxu0 %v3895
    %v3897 = vand.u32 %v130, 4294901760
    %3898 = vmatpush.msra.mxu0 %v3897
    %v3899 = vand.u32 %v122, 4294901760
    %3900 = vmatpush.msra.mxu0 %v3899
    %v3901 = vand.u32 %v114, 4294901760
    %3902 = vmatpush.msra.mxu0 %v3901
    %v3903 = vand.u32 %v106, 4294901760
    %3904 = vmatpush.msra.mxu0 %v3903
    %v3905 = vand.u32 %v98, 4294901760
    %3906 = vmatpush.msra.mxu0 %v3905
    %v3907 = vand.u32 %v90, 4294901760
    %3908 = vmatpush.msra.mxu0 %v3907
    %v3909 = vand.u32 %v82, 4294901760
    %3910 = vmatpush.msra.mxu0 %v3909
    %v3911 = vand.u32 %v74, 4294901760
    %3912 = vmatpush.msra.mxu0 %v3911
    %v3913 = vand.u32 %v66, 4294901760
    %3914 = vmatpush.msra.mxu0 %v3913
    %v3915 = vand.u32 %v58, 4294901760
    %3916 = vmatpush.msra.mxu0 %v3915
    %v3917 = vand.u32 %v50, 4294901760
    %3918 = vmatpush.msra.mxu0 %v3917
    %v3919 = vand.u32 %v42, 4294901760
    %3920 = vmatpush.msra.mxu0 %v3919
    %v3921 = vand.u32 %v34, 4294901760
    %3922 = vmatpush.msra.mxu0 %v3921
    %v3923 = vand.u32 %v27, 4294901760
    %v3924 = vsub.f32 %v27, %v3923
    %v3925 = vand.u32 %v3924, 4294901760
    %3926 = vmatmul.f32.gmra.mxu0 %v3925
    %v3927 = vpop.f32.mrf.mxu0
    %v3928 = vadd.f32 %v3889, %v3927
    %3929 = vdwg.mxu0
    %v3930 = vand.u32 %v154, 4294901760
    %v3931 = vsub.f32 %v154, %v3930
    %v3932 = vand.u32 %v3931, 4294901760
    %3933 = vmatpush.msra.mxu0 %v3932
    %v3934 = vand.u32 %v146, 4294901760
    %v3935 = vsub.f32 %v146, %v3934
    %v3936 = vand.u32 %v3935, 4294901760
    %3937 = vmatpush.msra.mxu0 %v3936
    %v3938 = vand.u32 %v138, 4294901760
    %v3939 = vsub.f32 %v138, %v3938
    %v3940 = vand.u32 %v3939, 4294901760
    %3941 = vmatpush.msra.mxu0 %v3940
    %v3942 = vand.u32 %v130, 4294901760
    %v3943 = vsub.f32 %v130, %v3942
    %v3944 = vand.u32 %v3943, 4294901760
    %3945 = vmatpush.msra.mxu0 %v3944
    %v3946 = vand.u32 %v122, 4294901760
    %v3947 = vsub.f32 %v122, %v3946
    %v3948 = vand.u32 %v3947, 4294901760
    %3949 = vmatpush.msra.mxu0 %v3948
    %v3950 = vand.u32 %v114, 4294901760
    %v3951 = vsub.f32 %v114, %v3950
    %v3952 = vand.u32 %v3951, 4294901760
    %3953 = vmatpush.msra.mxu0 %v3952
    %v3954 = vand.u32 %v106, 4294901760
    %v3955 = vsub.f32 %v106, %v3954
    %v3956 = vand.u32 %v3955, 4294901760
    %3957 = vmatpush.msra.mxu0 %v3956
    %v3958 = vand.u32 %v98, 4294901760
    %v3959 = vsub.f32 %v98, %v3958
    %v3960 = vand.u32 %v3959, 4294901760
    %3961 = vmatpush.msra.mxu0 %v3960
    %v3962 = vand.u32 %v90, 4294901760
    %v3963 = vsub.f32 %v90, %v3962
    %v3964 = vand.u32 %v3963, 4294901760
    %3965 = vmatpush.msra.mxu0 %v3964
    %v3966 = vand.u32 %v82, 4294901760
    %v3967 = vsub.f32 %v82, %v3966
    %v3968 = vand.u32 %v3967, 4294901760
    %3969 = vmatpush.msra.mxu0 %v3968
    %v3970 = vand.u32 %v74, 4294901760
    %v3971 = vsub.f32 %v74, %v3970
    %v3972 = vand.u32 %v3971, 4294901760
    %3973 = vmatpush.msra.mxu0 %v3972
    %v3974 = vand.u32 %v66, 4294901760
    %v3975 = vsub.f32 %v66, %v3974
    %v3976 = vand.u32 %v3975, 4294901760
    %3977 = vmatpush.msra.mxu0 %v3976
    %v3978 = vand.u32 %v58, 4294901760
    %v3979 = vsub.f32 %v58, %v3978
    %v3980 = vand.u32 %v3979, 4294901760
    %3981 = vmatpush.msra.mxu0 %v3980
    %v3982 = vand.u32 %v50, 4294901760
    %v3983 = vsub.f32 %v50, %v3982
    %v3984 = vand.u32 %v3983, 4294901760
    %3985 = vmatpush.msra.mxu0 %v3984
    %v3986 = vand.u32 %v42, 4294901760
    %v3987 = vsub.f32 %v42, %v3986
    %v3988 = vand.u32 %v3987, 4294901760
    %3989 = vmatpush.msra.mxu0 %v3988
    %v3990 = vand.u32 %v34, 4294901760
    %v3991 = vsub.f32 %v34, %v3990
    %v3992 = vand.u32 %v3991, 4294901760
    %3993 = vmatpush.msra.mxu0 %v3992
    %v3994 = vand.u32 %v27, 4294901760
    %3995 = vmatmul.f32.gmra.mxu0 %v3994
    %v3996 = vpop.f32.mrf.mxu0
    %v3997 = vadd.f32 %v3928, %v3996
    %3998 = vdwg.mxu0
    %v3999 = vand.u32 %v154, 4294901760
    %4000 = vmatpush.msra.mxu0 %v3999
    %v4001 = vand.u32 %v146, 4294901760
    %4002 = vmatpush.msra.mxu0 %v4001
    %v4003 = vand.u32 %v138, 4294901760
    %4004 = vmatpush.msra.mxu0 %v4003
    %v4005 = vand.u32 %v130, 4294901760
    %4006 = vmatpush.msra.mxu0 %v4005
    %v4007 = vand.u32 %v122, 4294901760
    %4008 = vmatpush.msra.mxu0 %v4007
    %v4009 = vand.u32 %v114, 4294901760
    %4010 = vmatpush.msra.mxu0 %v4009
    %v4011 = vand.u32 %v106, 4294901760
    %4012 = vmatpush.msra.mxu0 %v4011
    %v4013 = vand.u32 %v98, 4294901760
    %4014 = vmatpush.msra.mxu0 %v4013
    %v4015 = vand.u32 %v90, 4294901760
    %4016 = vmatpush.msra.mxu0 %v4015
    %v4017 = vand.u32 %v82, 4294901760
    %4018 = vmatpush.msra.mxu0 %v4017
    %v4019 = vand.u32 %v74, 4294901760
    %4020 = vmatpush.msra.mxu0 %v4019
    %v4021 = vand.u32 %v66, 4294901760
    %4022 = vmatpush.msra.mxu0 %v4021
    %v4023 = vand.u32 %v58, 4294901760
    %4024 = vmatpush.msra.mxu0 %v4023
    %v4025 = vand.u32 %v50, 4294901760
    %4026 = vmatpush.msra.mxu0 %v4025
    %v4027 = vand.u32 %v42, 4294901760
    %4028 = vmatpush.msra.mxu0 %v4027
    %v4029 = vand.u32 %v34, 4294901760
    %4030 = vmatpush.msra.mxu0 %v4029
    %v4031 = vand.u32 %v27, 4294901760
    %4032 = vmatmul.f32.gmra.mxu0 %v4031
    %v4033 = vpop.f32.mrf.mxu0
    %v4034 = vadd.f32 %v3997, %v4033
    %4035 = vdwg.mxu0
    %v4036 = vand.u32 %v282, 4294901760
    %4037 = vmatpush.msra.mxu0 %v4036
    %v4038 = vand.u32 %v274, 4294901760
    %4039 = vmatpush.msra.mxu0 %v4038
    %v4040 = vand.u32 %v266, 4294901760
    %4041 = vmatpush.msra.mxu0 %v4040
    %v4042 = vand.u32 %v258, 4294901760
    %4043 = vmatpush.msra.mxu0 %v4042
    %v4044 = vand.u32 %v250, 4294901760
    %4045 = vmatpush.msra.mxu0 %v4044
    %v4046 = vand.u32 %v242, 4294901760
    %4047 = vmatpush.msra.mxu0 %v4046
    %v4048 = vand.u32 %v234, 4294901760
    %4049 = vmatpush.msra.mxu0 %v4048
    %v4050 = vand.u32 %v226, 4294901760
    %4051 = vmatpush.msra.mxu0 %v4050
    %v4052 = vand.u32 %v218, 4294901760
    %4053 = vmatpush.msra.mxu0 %v4052
    %v4054 = vand.u32 %v210, 4294901760
    %4055 = vmatpush.msra.mxu0 %v4054
    %v4056 = vand.u32 %v202, 4294901760
    %4057 = vmatpush.msra.mxu0 %v4056
    %v4058 = vand.u32 %v194, 4294901760
    %4059 = vmatpush.msra.mxu0 %v4058
    %v4060 = vand.u32 %v186, 4294901760
    %4061 = vmatpush.msra.mxu0 %v4060
    %v4062 = vand.u32 %v178, 4294901760
    %4063 = vmatpush.msra.mxu0 %v4062
    %v4064 = vand.u32 %v170, 4294901760
    %4065 = vmatpush.msra.mxu0 %v4064
    %v4066 = vand.u32 %v162, 4294901760
    %4067 = vmatpush.msra.mxu0 %v4066
    %v4068 = vand.u32 %v28, 4294901760
    %v4069 = vsub.f32 %v28, %v4068
    %v4070 = vand.u32 %v4069, 4294901760
    %v4071 = vsub.f32 %v4069, %v4070
    %v4072 = vand.u32 %v4071, 4294901760
    %4073 = vmatmul.f32.gmra.mxu0 %v4072
    %v4074 = vpop.f32.mrf.mxu0
    %v4075 = vadd.f32 %v4034, %v4074
    %4076 = vdwg.mxu0
    %v4077 = vand.u32 %v282, 4294901760
    %v4078 = vsub.f32 %v282, %v4077
    %v4079 = vand.u32 %v4078, 4294901760
    %v4080 = vsub.f32 %v4078, %v4079
    %v4081 = vand.u32 %v4080, 4294901760
    %4082 = vmatpush.msra.mxu0 %v4081
    %v4083 = vand.u32 %v274, 4294901760
    %v4084 = vsub.f32 %v274, %v4083
    %v4085 = vand.u32 %v4084, 4294901760
    %v4086 = vsub.f32 %v4084, %v4085
    %v4087 = vand.u32 %v4086, 4294901760
    %4088 = vmatpush.msra.mxu0 %v4087
    %v4089 = vand.u32 %v266, 4294901760
    %v4090 = vsub.f32 %v266, %v4089
    %v4091 = vand.u32 %v4090, 4294901760
    %v4092 = vsub.f32 %v4090, %v4091
    %v4093 = vand.u32 %v4092, 4294901760
    %4094 = vmatpush.msra.mxu0 %v4093
    %v4095 = vand.u32 %v258, 4294901760
    %v4096 = vsub.f32 %v258, %v4095
    %v4097 = vand.u32 %v4096, 4294901760
    %v4098 = vsub.f32 %v4096, %v4097
    %v4099 = vand.u32 %v4098, 4294901760
    %4100 = vmatpush.msra.mxu0 %v4099
    %v4101 = vand.u32 %v250, 4294901760
    %v4102 = vsub.f32 %v250, %v4101
    %v4103 = vand.u32 %v4102, 4294901760
    %v4104 = vsub.f32 %v4102, %v4103
    %v4105 = vand.u32 %v4104, 4294901760
    %4106 = vmatpush.msra.mxu0 %v4105
    %v4107 = vand.u32 %v242, 4294901760
    %v4108 = vsub.f32 %v242, %v4107
    %v4109 = vand.u32 %v4108, 4294901760
    %v4110 = vsub.f32 %v4108, %v4109
    %v4111 = vand.u32 %v4110, 4294901760
    %4112 = vmatpush.msra.mxu0 %v4111
    %v4113 = vand.u32 %v234, 4294901760
    %v4114 = vsub.f32 %v234, %v4113
    %v4115 = vand.u32 %v4114, 4294901760
    %v4116 = vsub.f32 %v4114, %v4115
    %v4117 = vand.u32 %v4116, 4294901760
    %4118 = vmatpush.msra.mxu0 %v4117
    %v4119 = vand.u32 %v226, 4294901760
    %v4120 = vsub.f32 %v226, %v4119
    %v4121 = vand.u32 %v4120, 4294901760
    %v4122 = vsub.f32 %v4120, %v4121
    %v4123 = vand.u32 %v4122, 4294901760
    %4124 = vmatpush.msra.mxu0 %v4123
    %v4125 = vand.u32 %v218, 4294901760
    %v4126 = vsub.f32 %v218, %v4125
    %v4127 = vand.u32 %v4126, 4294901760
    %v4128 = vsub.f32 %v4126, %v4127
    %v4129 = vand.u32 %v4128, 4294901760
    %4130 = vmatpush.msra.mxu0 %v4129
    %v4131 = vand.u32 %v210, 4294901760
    %v4132 = vsub.f32 %v210, %v4131
    %v4133 = vand.u32 %v4132, 4294901760
    %v4134 = vsub.f32 %v4132, %v4133
    %v4135 = vand.u32 %v4134, 4294901760
    %4136 = vmatpush.msra.mxu0 %v4135
    %v4137 = vand.u32 %v202, 4294901760
    %v4138 = vsub.f32 %v202, %v4137
    %v4139 = vand.u32 %v4138, 4294901760
    %v4140 = vsub.f32 %v4138, %v4139
    %v4141 = vand.u32 %v4140, 4294901760
    %4142 = vmatpush.msra.mxu0 %v4141
    %v4143 = vand.u32 %v194, 4294901760
    %v4144 = vsub.f32 %v194, %v4143
    %v4145 = vand.u32 %v4144, 4294901760
    %v4146 = vsub.f32 %v4144, %v4145
    %v4147 = vand.u32 %v4146, 4294901760
    %4148 = vmatpush.msra.mxu0 %v4147
    %v4149 = vand.u32 %v186, 4294901760
    %v4150 = vsub.f32 %v186, %v4149
    %v4151 = vand.u32 %v4150, 4294901760
    %v4152 = vsub.f32 %v4150, %v4151
    %v4153 = vand.u32 %v4152, 4294901760
    %4154 = vmatpush.msra.mxu0 %v4153
    %v4155 = vand.u32 %v178, 4294901760
    %v4156 = vsub.f32 %v178, %v4155
    %v4157 = vand.u32 %v4156, 4294901760
    %v4158 = vsub.f32 %v4156, %v4157
    %v4159 = vand.u32 %v4158, 4294901760
    %4160 = vmatpush.msra.mxu0 %v4159
    %v4161 = vand.u32 %v170, 4294901760
    %v4162 = vsub.f32 %v170, %v4161
    %v4163 = vand.u32 %v4162, 4294901760
    %v4164 = vsub.f32 %v4162, %v4163
    %v4165 = vand.u32 %v4164, 4294901760
    %4166 = vmatpush.msra.mxu0 %v4165
    %v4167 = vand.u32 %v162, 4294901760
    %v4168 = vsub.f32 %v162, %v4167
    %v4169 = vand.u32 %v4168, 4294901760
    %v4170 = vsub.f32 %v4168, %v4169
    %v4171 = vand.u32 %v4170, 4294901760
    %4172 = vmatpush.msra.mxu0 %v4171
    %v4173 = vand.u32 %v28, 4294901760
    %4174 = vmatmul.f32.gmra.mxu0 %v4173
    %v4175 = vpop.f32.mrf.mxu0
    %v4176 = vadd.f32 %v4075, %v4175
    %4177 = vdwg.mxu0
    %v4178 = vand.u32 %v282, 4294901760
    %v4179 = vsub.f32 %v282, %v4178
    %4180 = vmatpush.msra.mxu0 %v4179
    %v4181 = vand.u32 %v274, 4294901760
    %v4182 = vsub.f32 %v274, %v4181
    %4183 = vmatpush.msra.mxu0 %v4182
    %v4184 = vand.u32 %v266, 4294901760
    %v4185 = vsub.f32 %v266, %v4184
    %4186 = vmatpush.msra.mxu0 %v4185
    %v4187 = vand.u32 %v258, 4294901760
    %v4188 = vsub.f32 %v258, %v4187
    %4189 = vmatpush.msra.mxu0 %v4188
    %v4190 = vand.u32 %v250, 4294901760
    %v4191 = vsub.f32 %v250, %v4190
    %4192 = vmatpush.msra.mxu0 %v4191
    %v4193 = vand.u32 %v242, 4294901760
    %v4194 = vsub.f32 %v242, %v4193
    %4195 = vmatpush.msra.mxu0 %v4194
    %v4196 = vand.u32 %v234, 4294901760
    %v4197 = vsub.f32 %v234, %v4196
    %4198 = vmatpush.msra.mxu0 %v4197
    %v4199 = vand.u32 %v226, 4294901760
    %v4200 = vsub.f32 %v226, %v4199
    %4201 = vmatpush.msra.mxu0 %v4200
    %v4202 = vand.u32 %v218, 4294901760
    %v4203 = vsub.f32 %v218, %v4202
    %4204 = vmatpush.msra.mxu0 %v4203
    %v4205 = vand.u32 %v210, 4294901760
    %v4206 = vsub.f32 %v210, %v4205
    %4207 = vmatpush.msra.mxu0 %v4206
    %v4208 = vand.u32 %v202, 4294901760
    %v4209 = vsub.f32 %v202, %v4208
    %4210 = vmatpush.msra.mxu0 %v4209
    %v4211 = vand.u32 %v194, 4294901760
    %v4212 = vsub.f32 %v194, %v4211
    %4213 = vmatpush.msra.mxu0 %v4212
    %v4214 = vand.u32 %v186, 4294901760
    %v4215 = vsub.f32 %v186, %v4214
    %4216 = vmatpush.msra.mxu0 %v4215
    %v4217 = vand.u32 %v178, 4294901760
    %v4218 = vsub.f32 %v178, %v4217
    %4219 = vmatpush.msra.mxu0 %v4218
    %v4220 = vand.u32 %v170, 4294901760
    %v4221 = vsub.f32 %v170, %v4220
    %4222 = vmatpush.msra.mxu0 %v4221
    %v4223 = vand.u32 %v162, 4294901760
    %v4224 = vsub.f32 %v162, %v4223
    %4225 = vmatpush.msra.mxu0 %v4224
    %v4226 = vand.u32 %v28, 4294901760
    %v4227 = vsub.f32 %v28, %v4226
    %4228 = vmatmul.f32.gmra.mxu0 %v4227
    %v4229 = vpop.f32.mrf.mxu0
    %v4230 = vadd.f32 %v4176, %v4229
    %4231 = vdwg.mxu0
    %v4232 = vand.u32 %v282, 4294901760
    %4233 = vmatpush.msra.mxu0 %v4232
    %v4234 = vand.u32 %v274, 4294901760
    %4235 = vmatpush.msra.mxu0 %v4234
    %v4236 = vand.u32 %v266, 4294901760
    %4237 = vmatpush.msra.mxu0 %v4236
    %v4238 = vand.u32 %v258, 4294901760
    %4239 = vmatpush.msra.mxu0 %v4238
    %v4240 = vand.u32 %v250, 4294901760
    %4241 = vmatpush.msra.mxu0 %v4240
    %v4242 = vand.u32 %v242, 4294901760
    %4243 = vmatpush.msra.mxu0 %v4242
    %v4244 = vand.u32 %v234, 4294901760
    %4245 = vmatpush.msra.mxu0 %v4244
    %v4246 = vand.u32 %v226, 4294901760
    %4247 = vmatpush.msra.mxu0 %v4246
    %v4248 = vand.u32 %v218, 4294901760
    %4249 = vmatpush.msra.mxu0 %v4248
    %v4250 = vand.u32 %v210, 4294901760
    %4251 = vmatpush.msra.mxu0 %v4250
    %v4252 = vand.u32 %v202, 4294901760
    %4253 = vmatpush.msra.mxu0 %v4252
    %v4254 = vand.u32 %v194, 4294901760
    %4255 = vmatpush.msra.mxu0 %v4254
    %v4256 = vand.u32 %v186, 4294901760
    %4257 = vmatpush.msra.mxu0 %v4256
    %v4258 = vand.u32 %v178, 4294901760
    %4259 = vmatpush.msra.mxu0 %v4258
    %v4260 = vand.u32 %v170, 4294901760
    %4261 = vmatpush.msra.mxu0 %v4260
    %v4262 = vand.u32 %v162, 4294901760
    %4263 = vmatpush.msra.mxu0 %v4262
    %v4264 = vand.u32 %v28, 4294901760
    %v4265 = vsub.f32 %v28, %v4264
    %v4266 = vand.u32 %v4265, 4294901760
    %4267 = vmatmul.f32.gmra.mxu0 %v4266
    %v4268 = vpop.f32.mrf.mxu0
    %v4269 = vadd.f32 %v4230, %v4268
    %4270 = vdwg.mxu0
    %v4271 = vand.u32 %v282, 4294901760
    %v4272 = vsub.f32 %v282, %v4271
    %v4273 = vand.u32 %v4272, 4294901760
    %4274 = vmatpush.msra.mxu0 %v4273
    %v4275 = vand.u32 %v274, 4294901760
    %v4276 = vsub.f32 %v274, %v4275
    %v4277 = vand.u32 %v4276, 4294901760
    %4278 = vmatpush.msra.mxu0 %v4277
    %v4279 = vand.u32 %v266, 4294901760
    %v4280 = vsub.f32 %v266, %v4279
    %v4281 = vand.u32 %v4280, 4294901760
    %4282 = vmatpush.msra.mxu0 %v4281
    %v4283 = vand.u32 %v258, 4294901760
    %v4284 = vsub.f32 %v258, %v4283
    %v4285 = vand.u32 %v4284, 4294901760
    %4286 = vmatpush.msra.mxu0 %v4285
    %v4287 = vand.u32 %v250, 4294901760
    %v4288 = vsub.f32 %v250, %v4287
    %v4289 = vand.u32 %v4288, 4294901760
    %4290 = vmatpush.msra.mxu0 %v4289
    %v4291 = vand.u32 %v242, 4294901760
    %v4292 = vsub.f32 %v242, %v4291
    %v4293 = vand.u32 %v4292, 4294901760
    %4294 = vmatpush.msra.mxu0 %v4293
    %v4295 = vand.u32 %v234, 4294901760
    %v4296 = vsub.f32 %v234, %v4295
    %v4297 = vand.u32 %v4296, 4294901760
    %4298 = vmatpush.msra.mxu0 %v4297
    %v4299 = vand.u32 %v226, 4294901760
    %v4300 = vsub.f32 %v226, %v4299
    %v4301 = vand.u32 %v4300, 4294901760
    %4302 = vmatpush.msra.mxu0 %v4301
    %v4303 = vand.u32 %v218, 4294901760
    %v4304 = vsub.f32 %v218, %v4303
    %v4305 = vand.u32 %v4304, 4294901760
    %4306 = vmatpush.msra.mxu0 %v4305
    %v4307 = vand.u32 %v210, 4294901760
    %v4308 = vsub.f32 %v210, %v4307
    %v4309 = vand.u32 %v4308, 4294901760
    %4310 = vmatpush.msra.mxu0 %v4309
    %v4311 = vand.u32 %v202, 4294901760
    %v4312 = vsub.f32 %v202, %v4311
    %v4313 = vand.u32 %v4312, 4294901760
    %4314 = vmatpush.msra.mxu0 %v4313
    %v4315 = vand.u32 %v194, 4294901760
    %v4316 = vsub.f32 %v194, %v4315
    %v4317 = vand.u32 %v4316, 4294901760
    %4318 = vmatpush.msra.mxu0 %v4317
    %v4319 = vand.u32 %v186, 4294901760
    %v4320 = vsub.f32 %v186, %v4319
    %v4321 = vand.u32 %v4320, 4294901760
    %4322 = vmatpush.msra.mxu0 %v4321
    %v4323 = vand.u32 %v178, 4294901760
    %v4324 = vsub.f32 %v178, %v4323
    %v4325 = vand.u32 %v4324, 4294901760
    %4326 = vmatpush.msra.mxu0 %v4325
    %v4327 = vand.u32 %v170, 4294901760
    %v4328 = vsub.f32 %v170, %v4327
    %v4329 = vand.u32 %v4328, 4294901760
    %4330 = vmatpush.msra.mxu0 %v4329
    %v4331 = vand.u32 %v162, 4294901760
    %v4332 = vsub.f32 %v162, %v4331
    %v4333 = vand.u32 %v4332, 4294901760
    %4334 = vmatpush.msra.mxu0 %v4333
    %v4335 = vand.u32 %v28, 4294901760
    %4336 = vmatmul.f32.gmra.mxu0 %v4335
    %v4337 = vpop.f32.mrf.mxu0
    %v4338 = vadd.f32 %v4269, %v4337
    %4339 = vdwg.mxu0
    %v4340 = vand.u32 %v282, 4294901760
    %4341 = vmatpush.msra.mxu0 %v4340
    %v4342 = vand.u32 %v274, 4294901760
    %4343 = vmatpush.msra.mxu0 %v4342
    %v4344 = vand.u32 %v266, 4294901760
    %4345 = vmatpush.msra.mxu0 %v4344
    %v4346 = vand.u32 %v258, 4294901760
    %4347 = vmatpush.msra.mxu0 %v4346
    %v4348 = vand.u32 %v250, 4294901760
    %4349 = vmatpush.msra.mxu0 %v4348
    %v4350 = vand.u32 %v242, 4294901760
    %4351 = vmatpush.msra.mxu0 %v4350
    %v4352 = vand.u32 %v234, 4294901760
    %4353 = vmatpush.msra.mxu0 %v4352
    %v4354 = vand.u32 %v226, 4294901760
    %4355 = vmatpush.msra.mxu0 %v4354
    %v4356 = vand.u32 %v218, 4294901760
    %4357 = vmatpush.msra.mxu0 %v4356
    %v4358 = vand.u32 %v210, 4294901760
    %4359 = vmatpush.msra.mxu0 %v4358
    %v4360 = vand.u32 %v202, 4294901760
    %4361 = vmatpush.msra.mxu0 %v4360
    %v4362 = vand.u32 %v194, 4294901760
    %4363 = vmatpush.msra.mxu0 %v4362
    %v4364 = vand.u32 %v186, 4294901760
    %4365 = vmatpush.msra.mxu0 %v4364
    %v4366 = vand.u32 %v178, 4294901760
    %4367 = vmatpush.msra.mxu0 %v4366
    %v4368 = vand.u32 %v170, 4294901760
    %4369 = vmatpush.msra.mxu0 %v4368
    %v4370 = vand.u32 %v162, 4294901760
    %4371 = vmatpush.msra.mxu0 %v4370
    %v4372 = vand.u32 %v28, 4294901760
    %4373 = vmatmul.f32.gmra.mxu0 %v4372
    %v4374 = vpop.f32.mrf.mxu0
    %v4375 = vadd.f32 %v4338, %v4374
    %4376 = vdwg.mxu0
    %v4377 = vand.u32 %v155, 4294901760
    %4378 = vmatpush.msra.mxu0 %v4377
    %v4379 = vand.u32 %v147, 4294901760
    %4380 = vmatpush.msra.mxu0 %v4379
    %v4381 = vand.u32 %v139, 4294901760
    %4382 = vmatpush.msra.mxu0 %v4381
    %v4383 = vand.u32 %v131, 4294901760
    %4384 = vmatpush.msra.mxu0 %v4383
    %v4385 = vand.u32 %v123, 4294901760
    %4386 = vmatpush.msra.mxu0 %v4385
    %v4387 = vand.u32 %v115, 4294901760
    %4388 = vmatpush.msra.mxu0 %v4387
    %v4389 = vand.u32 %v107, 4294901760
    %4390 = vmatpush.msra.mxu0 %v4389
    %v4391 = vand.u32 %v99, 4294901760
    %4392 = vmatpush.msra.mxu0 %v4391
    %v4393 = vand.u32 %v91, 4294901760
    %4394 = vmatpush.msra.mxu0 %v4393
    %v4395 = vand.u32 %v83, 4294901760
    %4396 = vmatpush.msra.mxu0 %v4395
    %v4397 = vand.u32 %v75, 4294901760
    %4398 = vmatpush.msra.mxu0 %v4397
    %v4399 = vand.u32 %v67, 4294901760
    %4400 = vmatpush.msra.mxu0 %v4399
    %v4401 = vand.u32 %v59, 4294901760
    %4402 = vmatpush.msra.mxu0 %v4401
    %v4403 = vand.u32 %v51, 4294901760
    %4404 = vmatpush.msra.mxu0 %v4403
    %v4405 = vand.u32 %v43, 4294901760
    %4406 = vmatpush.msra.mxu0 %v4405
    %v4407 = vand.u32 %v35, 4294901760
    %4408 = vmatpush.msra.mxu0 %v4407
    %v4409 = vand.u32 %v27, 4294901760
    %v4410 = vsub.f32 %v27, %v4409
    %v4411 = vand.u32 %v4410, 4294901760
    %v4412 = vsub.f32 %v4410, %v4411
    %v4413 = vand.u32 %v4412, 4294901760
    %4414 = vmatmul.f32.gmra.mxu0 %v4413
    %v4415 = vpop.f32.mrf.mxu0
    %v4416 = vadd.f32 0.0, %v4415
    %4417 = vdwg.mxu0
    %v4418 = vand.u32 %v155, 4294901760
    %v4419 = vsub.f32 %v155, %v4418
    %v4420 = vand.u32 %v4419, 4294901760
    %v4421 = vsub.f32 %v4419, %v4420
    %v4422 = vand.u32 %v4421, 4294901760
    %4423 = vmatpush.msra.mxu0 %v4422
    %v4424 = vand.u32 %v147, 4294901760
    %v4425 = vsub.f32 %v147, %v4424
    %v4426 = vand.u32 %v4425, 4294901760
    %v4427 = vsub.f32 %v4425, %v4426
    %v4428 = vand.u32 %v4427, 4294901760
    %4429 = vmatpush.msra.mxu0 %v4428
    %v4430 = vand.u32 %v139, 4294901760
    %v4431 = vsub.f32 %v139, %v4430
    %v4432 = vand.u32 %v4431, 4294901760
    %v4433 = vsub.f32 %v4431, %v4432
    %v4434 = vand.u32 %v4433, 4294901760
    %4435 = vmatpush.msra.mxu0 %v4434
    %v4436 = vand.u32 %v131, 4294901760
    %v4437 = vsub.f32 %v131, %v4436
    %v4438 = vand.u32 %v4437, 4294901760
    %v4439 = vsub.f32 %v4437, %v4438
    %v4440 = vand.u32 %v4439, 4294901760
    %4441 = vmatpush.msra.mxu0 %v4440
    %v4442 = vand.u32 %v123, 4294901760
    %v4443 = vsub.f32 %v123, %v4442
    %v4444 = vand.u32 %v4443, 4294901760
    %v4445 = vsub.f32 %v4443, %v4444
    %v4446 = vand.u32 %v4445, 4294901760
    %4447 = vmatpush.msra.mxu0 %v4446
    %v4448 = vand.u32 %v115, 4294901760
    %v4449 = vsub.f32 %v115, %v4448
    %v4450 = vand.u32 %v4449, 4294901760
    %v4451 = vsub.f32 %v4449, %v4450
    %v4452 = vand.u32 %v4451, 4294901760
    %4453 = vmatpush.msra.mxu0 %v4452
    %v4454 = vand.u32 %v107, 4294901760
    %v4455 = vsub.f32 %v107, %v4454
    %v4456 = vand.u32 %v4455, 4294901760
    %v4457 = vsub.f32 %v4455, %v4456
    %v4458 = vand.u32 %v4457, 4294901760
    %4459 = vmatpush.msra.mxu0 %v4458
    %v4460 = vand.u32 %v99, 4294901760
    %v4461 = vsub.f32 %v99, %v4460
    %v4462 = vand.u32 %v4461, 4294901760
    %v4463 = vsub.f32 %v4461, %v4462
    %v4464 = vand.u32 %v4463, 4294901760
    %4465 = vmatpush.msra.mxu0 %v4464
    %v4466 = vand.u32 %v91, 4294901760
    %v4467 = vsub.f32 %v91, %v4466
    %v4468 = vand.u32 %v4467, 4294901760
    %v4469 = vsub.f32 %v4467, %v4468
    %v4470 = vand.u32 %v4469, 4294901760
    %4471 = vmatpush.msra.mxu0 %v4470
    %v4472 = vand.u32 %v83, 4294901760
    %v4473 = vsub.f32 %v83, %v4472
    %v4474 = vand.u32 %v4473, 4294901760
    %v4475 = vsub.f32 %v4473, %v4474
    %v4476 = vand.u32 %v4475, 4294901760
    %4477 = vmatpush.msra.mxu0 %v4476
    %v4478 = vand.u32 %v75, 4294901760
    %v4479 = vsub.f32 %v75, %v4478
    %v4480 = vand.u32 %v4479, 4294901760
    %v4481 = vsub.f32 %v4479, %v4480
    %v4482 = vand.u32 %v4481, 4294901760
    %4483 = vmatpush.msra.mxu0 %v4482
    %v4484 = vand.u32 %v67, 4294901760
    %v4485 = vsub.f32 %v67, %v4484
    %v4486 = vand.u32 %v4485, 4294901760
    %v4487 = vsub.f32 %v4485, %v4486
    %v4488 = vand.u32 %v4487, 4294901760
    %4489 = vmatpush.msra.mxu0 %v4488
    %v4490 = vand.u32 %v59, 4294901760
    %v4491 = vsub.f32 %v59, %v4490
    %v4492 = vand.u32 %v4491, 4294901760
    %v4493 = vsub.f32 %v4491, %v4492
    %v4494 = vand.u32 %v4493, 4294901760
    %4495 = vmatpush.msra.mxu0 %v4494
    %v4496 = vand.u32 %v51, 4294901760
    %v4497 = vsub.f32 %v51, %v4496
    %v4498 = vand.u32 %v4497, 4294901760
    %v4499 = vsub.f32 %v4497, %v4498
    %v4500 = vand.u32 %v4499, 4294901760
    %4501 = vmatpush.msra.mxu0 %v4500
    %v4502 = vand.u32 %v43, 4294901760
    %v4503 = vsub.f32 %v43, %v4502
    %v4504 = vand.u32 %v4503, 4294901760
    %v4505 = vsub.f32 %v4503, %v4504
    %v4506 = vand.u32 %v4505, 4294901760
    %4507 = vmatpush.msra.mxu0 %v4506
    %v4508 = vand.u32 %v35, 4294901760
    %v4509 = vsub.f32 %v35, %v4508
    %v4510 = vand.u32 %v4509, 4294901760
    %v4511 = vsub.f32 %v4509, %v4510
    %v4512 = vand.u32 %v4511, 4294901760
    %4513 = vmatpush.msra.mxu0 %v4512
    %v4514 = vand.u32 %v27, 4294901760
    %4515 = vmatmul.f32.gmra.mxu0 %v4514
    %v4516 = vpop.f32.mrf.mxu0
    %v4517 = vadd.f32 %v4416, %v4516
    %4518 = vdwg.mxu0
    %v4519 = vand.u32 %v155, 4294901760
    %v4520 = vsub.f32 %v155, %v4519
    %4521 = vmatpush.msra.mxu0 %v4520
    %v4522 = vand.u32 %v147, 4294901760
    %v4523 = vsub.f32 %v147, %v4522
    %4524 = vmatpush.msra.mxu0 %v4523
    %v4525 = vand.u32 %v139, 4294901760
    %v4526 = vsub.f32 %v139, %v4525
    %4527 = vmatpush.msra.mxu0 %v4526
    %v4528 = vand.u32 %v131, 4294901760
    %v4529 = vsub.f32 %v131, %v4528
    %4530 = vmatpush.msra.mxu0 %v4529
    %v4531 = vand.u32 %v123, 4294901760
    %v4532 = vsub.f32 %v123, %v4531
    %4533 = vmatpush.msra.mxu0 %v4532
    %v4534 = vand.u32 %v115, 4294901760
    %v4535 = vsub.f32 %v115, %v4534
    %4536 = vmatpush.msra.mxu0 %v4535
    %v4537 = vand.u32 %v107, 4294901760
    %v4538 = vsub.f32 %v107, %v4537
    %4539 = vmatpush.msra.mxu0 %v4538
    %v4540 = vand.u32 %v99, 4294901760
    %v4541 = vsub.f32 %v99, %v4540
    %4542 = vmatpush.msra.mxu0 %v4541
    %v4543 = vand.u32 %v91, 4294901760
    %v4544 = vsub.f32 %v91, %v4543
    %4545 = vmatpush.msra.mxu0 %v4544
    %v4546 = vand.u32 %v83, 4294901760
    %v4547 = vsub.f32 %v83, %v4546
    %4548 = vmatpush.msra.mxu0 %v4547
    %v4549 = vand.u32 %v75, 4294901760
    %v4550 = vsub.f32 %v75, %v4549
    %4551 = vmatpush.msra.mxu0 %v4550
    %v4552 = vand.u32 %v67, 4294901760
    %v4553 = vsub.f32 %v67, %v4552
    %4554 = vmatpush.msra.mxu0 %v4553
    %v4555 = vand.u32 %v59, 4294901760
    %v4556 = vsub.f32 %v59, %v4555
    %4557 = vmatpush.msra.mxu0 %v4556
    %v4558 = vand.u32 %v51, 4294901760
    %v4559 = vsub.f32 %v51, %v4558
    %4560 = vmatpush.msra.mxu0 %v4559
    %v4561 = vand.u32 %v43, 4294901760
    %v4562 = vsub.f32 %v43, %v4561
    %4563 = vmatpush.msra.mxu0 %v4562
    %v4564 = vand.u32 %v35, 4294901760
    %v4565 = vsub.f32 %v35, %v4564
    %4566 = vmatpush.msra.mxu0 %v4565
    %v4567 = vand.u32 %v27, 4294901760
    %v4568 = vsub.f32 %v27, %v4567
    %4569 = vmatmul.f32.gmra.mxu0 %v4568
    %v4570 = vpop.f32.mrf.mxu0
    %v4571 = vadd.f32 %v4517, %v4570
    %4572 = vdwg.mxu0
    %v4573 = vand.u32 %v155, 4294901760
    %4574 = vmatpush.msra.mxu0 %v4573
    %v4575 = vand.u32 %v147, 4294901760
    %4576 = vmatpush.msra.mxu0 %v4575
    %v4577 = vand.u32 %v139, 4294901760
    %4578 = vmatpush.msra.mxu0 %v4577
    %v4579 = vand.u32 %v131, 4294901760
    %4580 = vmatpush.msra.mxu0 %v4579
    %v4581 = vand.u32 %v123, 4294901760
    %4582 = vmatpush.msra.mxu0 %v4581
    %v4583 = vand.u32 %v115, 4294901760
    %4584 = vmatpush.msra.mxu0 %v4583
    %v4585 = vand.u32 %v107, 4294901760
    %4586 = vmatpush.msra.mxu0 %v4585
    %v4587 = vand.u32 %v99, 4294901760
    %4588 = vmatpush.msra.mxu0 %v4587
    %v4589 = vand.u32 %v91, 4294901760
    %4590 = vmatpush.msra.mxu0 %v4589
    %v4591 = vand.u32 %v83, 4294901760
    %4592 = vmatpush.msra.mxu0 %v4591
    %v4593 = vand.u32 %v75, 4294901760
    %4594 = vmatpush.msra.mxu0 %v4593
    %v4595 = vand.u32 %v67, 4294901760
    %4596 = vmatpush.msra.mxu0 %v4595
    %v4597 = vand.u32 %v59, 4294901760
    %4598 = vmatpush.msra.mxu0 %v4597
    %v4599 = vand.u32 %v51, 4294901760
    %4600 = vmatpush.msra.mxu0 %v4599
    %v4601 = vand.u32 %v43, 4294901760
    %4602 = vmatpush.msra.mxu0 %v4601
    %v4603 = vand.u32 %v35, 4294901760
    %4604 = vmatpush.msra.mxu0 %v4603
    %v4605 = vand.u32 %v27, 4294901760
    %v4606 = vsub.f32 %v27, %v4605
    %v4607 = vand.u32 %v4606, 4294901760
    %4608 = vmatmul.f32.gmra.mxu0 %v4607
    %v4609 = vpop.f32.mrf.mxu0
    %v4610 = vadd.f32 %v4571, %v4609
    %4611 = vdwg.mxu0
    %v4612 = vand.u32 %v155, 4294901760
    %v4613 = vsub.f32 %v155, %v4612
    %v4614 = vand.u32 %v4613, 4294901760
    %4615 = vmatpush.msra.mxu0 %v4614
    %v4616 = vand.u32 %v147, 4294901760
    %v4617 = vsub.f32 %v147, %v4616
    %v4618 = vand.u32 %v4617, 4294901760
    %4619 = vmatpush.msra.mxu0 %v4618
    %v4620 = vand.u32 %v139, 4294901760
    %v4621 = vsub.f32 %v139, %v4620
    %v4622 = vand.u32 %v4621, 4294901760
    %4623 = vmatpush.msra.mxu0 %v4622
    %v4624 = vand.u32 %v131, 4294901760
    %v4625 = vsub.f32 %v131, %v4624
    %v4626 = vand.u32 %v4625, 4294901760
    %4627 = vmatpush.msra.mxu0 %v4626
    %v4628 = vand.u32 %v123, 4294901760
    %v4629 = vsub.f32 %v123, %v4628
    %v4630 = vand.u32 %v4629, 4294901760
    %4631 = vmatpush.msra.mxu0 %v4630
    %v4632 = vand.u32 %v115, 4294901760
    %v4633 = vsub.f32 %v115, %v4632
    %v4634 = vand.u32 %v4633, 4294901760
    %4635 = vmatpush.msra.mxu0 %v4634
    %v4636 = vand.u32 %v107, 4294901760
    %v4637 = vsub.f32 %v107, %v4636
    %v4638 = vand.u32 %v4637, 4294901760
    %4639 = vmatpush.msra.mxu0 %v4638
    %v4640 = vand.u32 %v99, 4294901760
    %v4641 = vsub.f32 %v99, %v4640
    %v4642 = vand.u32 %v4641, 4294901760
    %4643 = vmatpush.msra.mxu0 %v4642
    %v4644 = vand.u32 %v91, 4294901760
    %v4645 = vsub.f32 %v91, %v4644
    %v4646 = vand.u32 %v4645, 4294901760
    %4647 = vmatpush.msra.mxu0 %v4646
    %v4648 = vand.u32 %v83, 4294901760
    %v4649 = vsub.f32 %v83, %v4648
    %v4650 = vand.u32 %v4649, 4294901760
    %4651 = vmatpush.msra.mxu0 %v4650
    %v4652 = vand.u32 %v75, 4294901760
    %v4653 = vsub.f32 %v75, %v4652
    %v4654 = vand.u32 %v4653, 4294901760
    %4655 = vmatpush.msra.mxu0 %v4654
    %v4656 = vand.u32 %v67, 4294901760
    %v4657 = vsub.f32 %v67, %v4656
    %v4658 = vand.u32 %v4657, 4294901760
    %4659 = vmatpush.msra.mxu0 %v4658
    %v4660 = vand.u32 %v59, 4294901760
    %v4661 = vsub.f32 %v59, %v4660
    %v4662 = vand.u32 %v4661, 4294901760
    %4663 = vmatpush.msra.mxu0 %v4662
    %v4664 = vand.u32 %v51, 4294901760
    %v4665 = vsub.f32 %v51, %v4664
    %v4666 = vand.u32 %v4665, 4294901760
    %4667 = vmatpush.msra.mxu0 %v4666
    %v4668 = vand.u32 %v43, 4294901760
    %v4669 = vsub.f32 %v43, %v4668
    %v4670 = vand.u32 %v4669, 4294901760
    %4671 = vmatpush.msra.mxu0 %v4670
    %v4672 = vand.u32 %v35, 4294901760
    %v4673 = vsub.f32 %v35, %v4672
    %v4674 = vand.u32 %v4673, 4294901760
    %4675 = vmatpush.msra.mxu0 %v4674
    %v4676 = vand.u32 %v27, 4294901760
    %4677 = vmatmul.f32.gmra.mxu0 %v4676
    %v4678 = vpop.f32.mrf.mxu0
    %v4679 = vadd.f32 %v4610, %v4678
    %4680 = vdwg.mxu0
    %v4681 = vand.u32 %v155, 4294901760
    %4682 = vmatpush.msra.mxu0 %v4681
    %v4683 = vand.u32 %v147, 4294901760
    %4684 = vmatpush.msra.mxu0 %v4683
    %v4685 = vand.u32 %v139, 4294901760
    %4686 = vmatpush.msra.mxu0 %v4685
    %v4687 = vand.u32 %v131, 4294901760
    %4688 = vmatpush.msra.mxu0 %v4687
    %v4689 = vand.u32 %v123, 4294901760
    %4690 = vmatpush.msra.mxu0 %v4689
    %v4691 = vand.u32 %v115, 4294901760
    %4692 = vmatpush.msra.mxu0 %v4691
    %v4693 = vand.u32 %v107, 4294901760
    %4694 = vmatpush.msra.mxu0 %v4693
    %v4695 = vand.u32 %v99, 4294901760
    %4696 = vmatpush.msra.mxu0 %v4695
    %v4697 = vand.u32 %v91, 4294901760
    %4698 = vmatpush.msra.mxu0 %v4697
    %v4699 = vand.u32 %v83, 4294901760
    %4700 = vmatpush.msra.mxu0 %v4699
    %v4701 = vand.u32 %v75, 4294901760
    %4702 = vmatpush.msra.mxu0 %v4701
    %v4703 = vand.u32 %v67, 4294901760
    %4704 = vmatpush.msra.mxu0 %v4703
    %v4705 = vand.u32 %v59, 4294901760
    %4706 = vmatpush.msra.mxu0 %v4705
    %v4707 = vand.u32 %v51, 4294901760
    %4708 = vmatpush.msra.mxu0 %v4707
    %v4709 = vand.u32 %v43, 4294901760
    %4710 = vmatpush.msra.mxu0 %v4709
    %v4711 = vand.u32 %v35, 4294901760
    %4712 = vmatpush.msra.mxu0 %v4711
    %v4713 = vand.u32 %v27, 4294901760
    %4714 = vmatmul.f32.gmra.mxu0 %v4713
    %v4715 = vpop.f32.mrf.mxu0
    %v4716 = vadd.f32 %v4679, %v4715
    %4717 = vdwg.mxu0
    %v4718 = vand.u32 %v283, 4294901760
    %4719 = vmatpush.msra.mxu0 %v4718
    %v4720 = vand.u32 %v275, 4294901760
    %4721 = vmatpush.msra.mxu0 %v4720
    %v4722 = vand.u32 %v267, 4294901760
    %4723 = vmatpush.msra.mxu0 %v4722
    %v4724 = vand.u32 %v259, 4294901760
    %4725 = vmatpush.msra.mxu0 %v4724
    %v4726 = vand.u32 %v251, 4294901760
    %4727 = vmatpush.msra.mxu0 %v4726
    %v4728 = vand.u32 %v243, 4294901760
    %4729 = vmatpush.msra.mxu0 %v4728
    %v4730 = vand.u32 %v235, 4294901760
    %4731 = vmatpush.msra.mxu0 %v4730
    %v4732 = vand.u32 %v227, 4294901760
    %4733 = vmatpush.msra.mxu0 %v4732
    %v4734 = vand.u32 %v219, 4294901760
    %4735 = vmatpush.msra.mxu0 %v4734
    %v4736 = vand.u32 %v211, 4294901760
    %4737 = vmatpush.msra.mxu0 %v4736
    %v4738 = vand.u32 %v203, 4294901760
    %4739 = vmatpush.msra.mxu0 %v4738
    %v4740 = vand.u32 %v195, 4294901760
    %4741 = vmatpush.msra.mxu0 %v4740
    %v4742 = vand.u32 %v187, 4294901760
    %4743 = vmatpush.msra.mxu0 %v4742
    %v4744 = vand.u32 %v179, 4294901760
    %4745 = vmatpush.msra.mxu0 %v4744
    %v4746 = vand.u32 %v171, 4294901760
    %4747 = vmatpush.msra.mxu0 %v4746
    %v4748 = vand.u32 %v163, 4294901760
    %4749 = vmatpush.msra.mxu0 %v4748
    %v4750 = vand.u32 %v28, 4294901760
    %v4751 = vsub.f32 %v28, %v4750
    %v4752 = vand.u32 %v4751, 4294901760
    %v4753 = vsub.f32 %v4751, %v4752
    %v4754 = vand.u32 %v4753, 4294901760
    %4755 = vmatmul.f32.gmra.mxu0 %v4754
    %v4756 = vpop.f32.mrf.mxu0
    %v4757 = vadd.f32 %v4716, %v4756
    %4758 = vdwg.mxu0
    %v4759 = vand.u32 %v283, 4294901760
    %v4760 = vsub.f32 %v283, %v4759
    %v4761 = vand.u32 %v4760, 4294901760
    %v4762 = vsub.f32 %v4760, %v4761
    %v4763 = vand.u32 %v4762, 4294901760
    %4764 = vmatpush.msra.mxu0 %v4763
    %v4765 = vand.u32 %v275, 4294901760
    %v4766 = vsub.f32 %v275, %v4765
    %v4767 = vand.u32 %v4766, 4294901760
    %v4768 = vsub.f32 %v4766, %v4767
    %v4769 = vand.u32 %v4768, 4294901760
    %4770 = vmatpush.msra.mxu0 %v4769
    %v4771 = vand.u32 %v267, 4294901760
    %v4772 = vsub.f32 %v267, %v4771
    %v4773 = vand.u32 %v4772, 4294901760
    %v4774 = vsub.f32 %v4772, %v4773
    %v4775 = vand.u32 %v4774, 4294901760
    %4776 = vmatpush.msra.mxu0 %v4775
    %v4777 = vand.u32 %v259, 4294901760
    %v4778 = vsub.f32 %v259, %v4777
    %v4779 = vand.u32 %v4778, 4294901760
    %v4780 = vsub.f32 %v4778, %v4779
    %v4781 = vand.u32 %v4780, 4294901760
    %4782 = vmatpush.msra.mxu0 %v4781
    %v4783 = vand.u32 %v251, 4294901760
    %v4784 = vsub.f32 %v251, %v4783
    %v4785 = vand.u32 %v4784, 4294901760
    %v4786 = vsub.f32 %v4784, %v4785
    %v4787 = vand.u32 %v4786, 4294901760
    %4788 = vmatpush.msra.mxu0 %v4787
    %v4789 = vand.u32 %v243, 4294901760
    %v4790 = vsub.f32 %v243, %v4789
    %v4791 = vand.u32 %v4790, 4294901760
    %v4792 = vsub.f32 %v4790, %v4791
    %v4793 = vand.u32 %v4792, 4294901760
    %4794 = vmatpush.msra.mxu0 %v4793
    %v4795 = vand.u32 %v235, 4294901760
    %v4796 = vsub.f32 %v235, %v4795
    %v4797 = vand.u32 %v4796, 4294901760
    %v4798 = vsub.f32 %v4796, %v4797
    %v4799 = vand.u32 %v4798, 4294901760
    %4800 = vmatpush.msra.mxu0 %v4799
    %v4801 = vand.u32 %v227, 4294901760
    %v4802 = vsub.f32 %v227, %v4801
    %v4803 = vand.u32 %v4802, 4294901760
    %v4804 = vsub.f32 %v4802, %v4803
    %v4805 = vand.u32 %v4804, 4294901760
    %4806 = vmatpush.msra.mxu0 %v4805
    %v4807 = vand.u32 %v219, 4294901760
    %v4808 = vsub.f32 %v219, %v4807
    %v4809 = vand.u32 %v4808, 4294901760
    %v4810 = vsub.f32 %v4808, %v4809
    %v4811 = vand.u32 %v4810, 4294901760
    %4812 = vmatpush.msra.mxu0 %v4811
    %v4813 = vand.u32 %v211, 4294901760
    %v4814 = vsub.f32 %v211, %v4813
    %v4815 = vand.u32 %v4814, 4294901760
    %v4816 = vsub.f32 %v4814, %v4815
    %v4817 = vand.u32 %v4816, 4294901760
    %4818 = vmatpush.msra.mxu0 %v4817
    %v4819 = vand.u32 %v203, 4294901760
    %v4820 = vsub.f32 %v203, %v4819
    %v4821 = vand.u32 %v4820, 4294901760
    %v4822 = vsub.f32 %v4820, %v4821
    %v4823 = vand.u32 %v4822, 4294901760
    %4824 = vmatpush.msra.mxu0 %v4823
    %v4825 = vand.u32 %v195, 4294901760
    %v4826 = vsub.f32 %v195, %v4825
    %v4827 = vand.u32 %v4826, 4294901760
    %v4828 = vsub.f32 %v4826, %v4827
    %v4829 = vand.u32 %v4828, 4294901760
    %4830 = vmatpush.msra.mxu0 %v4829
    %v4831 = vand.u32 %v187, 4294901760
    %v4832 = vsub.f32 %v187, %v4831
    %v4833 = vand.u32 %v4832, 4294901760
    %v4834 = vsub.f32 %v4832, %v4833
    %v4835 = vand.u32 %v4834, 4294901760
    %4836 = vmatpush.msra.mxu0 %v4835
    %v4837 = vand.u32 %v179, 4294901760
    %v4838 = vsub.f32 %v179, %v4837
    %v4839 = vand.u32 %v4838, 4294901760
    %v4840 = vsub.f32 %v4838, %v4839
    %v4841 = vand.u32 %v4840, 4294901760
    %4842 = vmatpush.msra.mxu0 %v4841
    %v4843 = vand.u32 %v171, 4294901760
    %v4844 = vsub.f32 %v171, %v4843
    %v4845 = vand.u32 %v4844, 4294901760
    %v4846 = vsub.f32 %v4844, %v4845
    %v4847 = vand.u32 %v4846, 4294901760
    %4848 = vmatpush.msra.mxu0 %v4847
    %v4849 = vand.u32 %v163, 4294901760
    %v4850 = vsub.f32 %v163, %v4849
    %v4851 = vand.u32 %v4850, 4294901760
    %v4852 = vsub.f32 %v4850, %v4851
    %v4853 = vand.u32 %v4852, 4294901760
    %4854 = vmatpush.msra.mxu0 %v4853
    %v4855 = vand.u32 %v28, 4294901760
    %4856 = vmatmul.f32.gmra.mxu0 %v4855
    %v4857 = vpop.f32.mrf.mxu0
    %v4858 = vadd.f32 %v4757, %v4857
    %4859 = vdwg.mxu0
    %v4860 = vand.u32 %v283, 4294901760
    %v4861 = vsub.f32 %v283, %v4860
    %4862 = vmatpush.msra.mxu0 %v4861
    %v4863 = vand.u32 %v275, 4294901760
    %v4864 = vsub.f32 %v275, %v4863
    %4865 = vmatpush.msra.mxu0 %v4864
    %v4866 = vand.u32 %v267, 4294901760
    %v4867 = vsub.f32 %v267, %v4866
    %4868 = vmatpush.msra.mxu0 %v4867
    %v4869 = vand.u32 %v259, 4294901760
    %v4870 = vsub.f32 %v259, %v4869
    %4871 = vmatpush.msra.mxu0 %v4870
    %v4872 = vand.u32 %v251, 4294901760
    %v4873 = vsub.f32 %v251, %v4872
    %4874 = vmatpush.msra.mxu0 %v4873
    %v4875 = vand.u32 %v243, 4294901760
    %v4876 = vsub.f32 %v243, %v4875
    %4877 = vmatpush.msra.mxu0 %v4876
    %v4878 = vand.u32 %v235, 4294901760
    %v4879 = vsub.f32 %v235, %v4878
    %4880 = vmatpush.msra.mxu0 %v4879
    %v4881 = vand.u32 %v227, 4294901760
    %v4882 = vsub.f32 %v227, %v4881
    %4883 = vmatpush.msra.mxu0 %v4882
    %v4884 = vand.u32 %v219, 4294901760
    %v4885 = vsub.f32 %v219, %v4884
    %4886 = vmatpush.msra.mxu0 %v4885
    %v4887 = vand.u32 %v211, 4294901760
    %v4888 = vsub.f32 %v211, %v4887
    %4889 = vmatpush.msra.mxu0 %v4888
    %v4890 = vand.u32 %v203, 4294901760
    %v4891 = vsub.f32 %v203, %v4890
    %4892 = vmatpush.msra.mxu0 %v4891
    %v4893 = vand.u32 %v195, 4294901760
    %v4894 = vsub.f32 %v195, %v4893
    %4895 = vmatpush.msra.mxu0 %v4894
    %v4896 = vand.u32 %v187, 4294901760
    %v4897 = vsub.f32 %v187, %v4896
    %4898 = vmatpush.msra.mxu0 %v4897
    %v4899 = vand.u32 %v179, 4294901760
    %v4900 = vsub.f32 %v179, %v4899
    %4901 = vmatpush.msra.mxu0 %v4900
    %v4902 = vand.u32 %v171, 4294901760
    %v4903 = vsub.f32 %v171, %v4902
    %4904 = vmatpush.msra.mxu0 %v4903
    %v4905 = vand.u32 %v163, 4294901760
    %v4906 = vsub.f32 %v163, %v4905
    %4907 = vmatpush.msra.mxu0 %v4906
    %v4908 = vand.u32 %v28, 4294901760
    %v4909 = vsub.f32 %v28, %v4908
    %4910 = vmatmul.f32.gmra.mxu0 %v4909
    %v4911 = vpop.f32.mrf.mxu0
    %v4912 = vadd.f32 %v4858, %v4911
    %4913 = vdwg.mxu0
    %v4914 = vand.u32 %v283, 4294901760
    %4915 = vmatpush.msra.mxu0 %v4914
    %v4916 = vand.u32 %v275, 4294901760
    %4917 = vmatpush.msra.mxu0 %v4916
    %v4918 = vand.u32 %v267, 4294901760
    %4919 = vmatpush.msra.mxu0 %v4918
    %v4920 = vand.u32 %v259, 4294901760
    %4921 = vmatpush.msra.mxu0 %v4920
    %v4922 = vand.u32 %v251, 4294901760
    %4923 = vmatpush.msra.mxu0 %v4922
    %v4924 = vand.u32 %v243, 4294901760
    %4925 = vmatpush.msra.mxu0 %v4924
    %v4926 = vand.u32 %v235, 4294901760
    %4927 = vmatpush.msra.mxu0 %v4926
    %v4928 = vand.u32 %v227, 4294901760
    %4929 = vmatpush.msra.mxu0 %v4928
    %v4930 = vand.u32 %v219, 4294901760
    %4931 = vmatpush.msra.mxu0 %v4930
    %v4932 = vand.u32 %v211, 4294901760
    %4933 = vmatpush.msra.mxu0 %v4932
    %v4934 = vand.u32 %v203, 4294901760
    %4935 = vmatpush.msra.mxu0 %v4934
    %v4936 = vand.u32 %v195, 4294901760
    %4937 = vmatpush.msra.mxu0 %v4936
    %v4938 = vand.u32 %v187, 4294901760
    %4939 = vmatpush.msra.mxu0 %v4938
    %v4940 = vand.u32 %v179, 4294901760
    %4941 = vmatpush.msra.mxu0 %v4940
    %v4942 = vand.u32 %v171, 4294901760
    %4943 = vmatpush.msra.mxu0 %v4942
    %v4944 = vand.u32 %v163, 4294901760
    %4945 = vmatpush.msra.mxu0 %v4944
    %v4946 = vand.u32 %v28, 4294901760
    %v4947 = vsub.f32 %v28, %v4946
    %v4948 = vand.u32 %v4947, 4294901760
    %4949 = vmatmul.f32.gmra.mxu0 %v4948
    %v4950 = vpop.f32.mrf.mxu0
    %v4951 = vadd.f32 %v4912, %v4950
    %4952 = vdwg.mxu0
    %v4953 = vand.u32 %v283, 4294901760
    %v4954 = vsub.f32 %v283, %v4953
    %v4955 = vand.u32 %v4954, 4294901760
    %4956 = vmatpush.msra.mxu0 %v4955
    %v4957 = vand.u32 %v275, 4294901760
    %v4958 = vsub.f32 %v275, %v4957
    %v4959 = vand.u32 %v4958, 4294901760
    %4960 = vmatpush.msra.mxu0 %v4959
    %v4961 = vand.u32 %v267, 4294901760
    %v4962 = vsub.f32 %v267, %v4961
    %v4963 = vand.u32 %v4962, 4294901760
    %4964 = vmatpush.msra.mxu0 %v4963
    %v4965 = vand.u32 %v259, 4294901760
    %v4966 = vsub.f32 %v259, %v4965
    %v4967 = vand.u32 %v4966, 4294901760
    %4968 = vmatpush.msra.mxu0 %v4967
    %v4969 = vand.u32 %v251, 4294901760
    %v4970 = vsub.f32 %v251, %v4969
    %v4971 = vand.u32 %v4970, 4294901760
    %4972 = vmatpush.msra.mxu0 %v4971
    %v4973 = vand.u32 %v243, 4294901760
    %v4974 = vsub.f32 %v243, %v4973
    %v4975 = vand.u32 %v4974, 4294901760
    %4976 = vmatpush.msra.mxu0 %v4975
    %v4977 = vand.u32 %v235, 4294901760
    %v4978 = vsub.f32 %v235, %v4977
    %v4979 = vand.u32 %v4978, 4294901760
    %4980 = vmatpush.msra.mxu0 %v4979
    %v4981 = vand.u32 %v227, 4294901760
    %v4982 = vsub.f32 %v227, %v4981
    %v4983 = vand.u32 %v4982, 4294901760
    %4984 = vmatpush.msra.mxu0 %v4983
    %v4985 = vand.u32 %v219, 4294901760
    %v4986 = vsub.f32 %v219, %v4985
    %v4987 = vand.u32 %v4986, 4294901760
    %4988 = vmatpush.msra.mxu0 %v4987
    %v4989 = vand.u32 %v211, 4294901760
    %v4990 = vsub.f32 %v211, %v4989
    %v4991 = vand.u32 %v4990, 4294901760
    %4992 = vmatpush.msra.mxu0 %v4991
    %v4993 = vand.u32 %v203, 4294901760
    %v4994 = vsub.f32 %v203, %v4993
    %v4995 = vand.u32 %v4994, 4294901760
    %4996 = vmatpush.msra.mxu0 %v4995
    %v4997 = vand.u32 %v195, 4294901760
    %v4998 = vsub.f32 %v195, %v4997
    %v4999 = vand.u32 %v4998, 4294901760
    %5000 = vmatpush.msra.mxu0 %v4999
    %v5001 = vand.u32 %v187, 4294901760
    %v5002 = vsub.f32 %v187, %v5001
    %v5003 = vand.u32 %v5002, 4294901760
    %5004 = vmatpush.msra.mxu0 %v5003
    %v5005 = vand.u32 %v179, 4294901760
    %v5006 = vsub.f32 %v179, %v5005
    %v5007 = vand.u32 %v5006, 4294901760
    %5008 = vmatpush.msra.mxu0 %v5007
    %v5009 = vand.u32 %v171, 4294901760
    %v5010 = vsub.f32 %v171, %v5009
    %v5011 = vand.u32 %v5010, 4294901760
    %5012 = vmatpush.msra.mxu0 %v5011
    %v5013 = vand.u32 %v163, 4294901760
    %v5014 = vsub.f32 %v163, %v5013
    %v5015 = vand.u32 %v5014, 4294901760
    %5016 = vmatpush.msra.mxu0 %v5015
    %v5017 = vand.u32 %v28, 4294901760
    %5018 = vmatmul.f32.gmra.mxu0 %v5017
    %v5019 = vpop.f32.mrf.mxu0
    %v5020 = vadd.f32 %v4951, %v5019
    %5021 = vdwg.mxu0
    %v5022 = vand.u32 %v283, 4294901760
    %5023 = vmatpush.msra.mxu0 %v5022
    %v5024 = vand.u32 %v275, 4294901760
    %5025 = vmatpush.msra.mxu0 %v5024
    %v5026 = vand.u32 %v267, 4294901760
    %5027 = vmatpush.msra.mxu0 %v5026
    %v5028 = vand.u32 %v259, 4294901760
    %5029 = vmatpush.msra.mxu0 %v5028
    %v5030 = vand.u32 %v251, 4294901760
    %5031 = vmatpush.msra.mxu0 %v5030
    %v5032 = vand.u32 %v243, 4294901760
    %5033 = vmatpush.msra.mxu0 %v5032
    %v5034 = vand.u32 %v235, 4294901760
    %5035 = vmatpush.msra.mxu0 %v5034
    %v5036 = vand.u32 %v227, 4294901760
    %5037 = vmatpush.msra.mxu0 %v5036
    %v5038 = vand.u32 %v219, 4294901760
    %5039 = vmatpush.msra.mxu0 %v5038
    %v5040 = vand.u32 %v211, 4294901760
    %5041 = vmatpush.msra.mxu0 %v5040
    %v5042 = vand.u32 %v203, 4294901760
    %5043 = vmatpush.msra.mxu0 %v5042
    %v5044 = vand.u32 %v195, 4294901760
    %5045 = vmatpush.msra.mxu0 %v5044
    %v5046 = vand.u32 %v187, 4294901760
    %5047 = vmatpush.msra.mxu0 %v5046
    %v5048 = vand.u32 %v179, 4294901760
    %5049 = vmatpush.msra.mxu0 %v5048
    %v5050 = vand.u32 %v171, 4294901760
    %5051 = vmatpush.msra.mxu0 %v5050
    %v5052 = vand.u32 %v163, 4294901760
    %5053 = vmatpush.msra.mxu0 %v5052
    %v5054 = vand.u32 %v28, 4294901760
    %5055 = vmatmul.f32.gmra.mxu0 %v5054
    %v5056 = vpop.f32.mrf.mxu0
    %v5057 = vadd.f32 %v5020, %v5056
    %5058 = vdwg.mxu0
    %v5059 = vand.u32 %v156, 4294901760
    %5060 = vmatpush.msra.mxu0 %v5059
    %v5061 = vand.u32 %v148, 4294901760
    %5062 = vmatpush.msra.mxu0 %v5061
    %v5063 = vand.u32 %v140, 4294901760
    %5064 = vmatpush.msra.mxu0 %v5063
    %v5065 = vand.u32 %v132, 4294901760
    %5066 = vmatpush.msra.mxu0 %v5065
    %v5067 = vand.u32 %v124, 4294901760
    %5068 = vmatpush.msra.mxu0 %v5067
    %v5069 = vand.u32 %v116, 4294901760
    %5070 = vmatpush.msra.mxu0 %v5069
    %v5071 = vand.u32 %v108, 4294901760
    %5072 = vmatpush.msra.mxu0 %v5071
    %v5073 = vand.u32 %v100, 4294901760
    %5074 = vmatpush.msra.mxu0 %v5073
    %v5075 = vand.u32 %v92, 4294901760
    %5076 = vmatpush.msra.mxu0 %v5075
    %v5077 = vand.u32 %v84, 4294901760
    %5078 = vmatpush.msra.mxu0 %v5077
    %v5079 = vand.u32 %v76, 4294901760
    %5080 = vmatpush.msra.mxu0 %v5079
    %v5081 = vand.u32 %v68, 4294901760
    %5082 = vmatpush.msra.mxu0 %v5081
    %v5083 = vand.u32 %v60, 4294901760
    %5084 = vmatpush.msra.mxu0 %v5083
    %v5085 = vand.u32 %v52, 4294901760
    %5086 = vmatpush.msra.mxu0 %v5085
    %v5087 = vand.u32 %v44, 4294901760
    %5088 = vmatpush.msra.mxu0 %v5087
    %v5089 = vand.u32 %v36, 4294901760
    %5090 = vmatpush.msra.mxu0 %v5089
    %v5091 = vand.u32 %v27, 4294901760
    %v5092 = vsub.f32 %v27, %v5091
    %v5093 = vand.u32 %v5092, 4294901760
    %v5094 = vsub.f32 %v5092, %v5093
    %v5095 = vand.u32 %v5094, 4294901760
    %5096 = vmatmul.f32.gmra.mxu0 %v5095
    %v5097 = vpop.f32.mrf.mxu0
    %v5098 = vadd.f32 0.0, %v5097
    %5099 = vdwg.mxu0
    %v5100 = vand.u32 %v156, 4294901760
    %v5101 = vsub.f32 %v156, %v5100
    %v5102 = vand.u32 %v5101, 4294901760
    %v5103 = vsub.f32 %v5101, %v5102
    %v5104 = vand.u32 %v5103, 4294901760
    %5105 = vmatpush.msra.mxu0 %v5104
    %v5106 = vand.u32 %v148, 4294901760
    %v5107 = vsub.f32 %v148, %v5106
    %v5108 = vand.u32 %v5107, 4294901760
    %v5109 = vsub.f32 %v5107, %v5108
    %v5110 = vand.u32 %v5109, 4294901760
    %5111 = vmatpush.msra.mxu0 %v5110
    %v5112 = vand.u32 %v140, 4294901760
    %v5113 = vsub.f32 %v140, %v5112
    %v5114 = vand.u32 %v5113, 4294901760
    %v5115 = vsub.f32 %v5113, %v5114
    %v5116 = vand.u32 %v5115, 4294901760
    %5117 = vmatpush.msra.mxu0 %v5116
    %v5118 = vand.u32 %v132, 4294901760
    %v5119 = vsub.f32 %v132, %v5118
    %v5120 = vand.u32 %v5119, 4294901760
    %v5121 = vsub.f32 %v5119, %v5120
    %v5122 = vand.u32 %v5121, 4294901760
    %5123 = vmatpush.msra.mxu0 %v5122
    %v5124 = vand.u32 %v124, 4294901760
    %v5125 = vsub.f32 %v124, %v5124
    %v5126 = vand.u32 %v5125, 4294901760
    %v5127 = vsub.f32 %v5125, %v5126
    %v5128 = vand.u32 %v5127, 4294901760
    %5129 = vmatpush.msra.mxu0 %v5128
    %v5130 = vand.u32 %v116, 4294901760
    %v5131 = vsub.f32 %v116, %v5130
    %v5132 = vand.u32 %v5131, 4294901760
    %v5133 = vsub.f32 %v5131, %v5132
    %v5134 = vand.u32 %v5133, 4294901760
    %5135 = vmatpush.msra.mxu0 %v5134
    %v5136 = vand.u32 %v108, 4294901760
    %v5137 = vsub.f32 %v108, %v5136
    %v5138 = vand.u32 %v5137, 4294901760
    %v5139 = vsub.f32 %v5137, %v5138
    %v5140 = vand.u32 %v5139, 4294901760
    %5141 = vmatpush.msra.mxu0 %v5140
    %v5142 = vand.u32 %v100, 4294901760
    %v5143 = vsub.f32 %v100, %v5142
    %v5144 = vand.u32 %v5143, 4294901760
    %v5145 = vsub.f32 %v5143, %v5144
    %v5146 = vand.u32 %v5145, 4294901760
    %5147 = vmatpush.msra.mxu0 %v5146
    %v5148 = vand.u32 %v92, 4294901760
    %v5149 = vsub.f32 %v92, %v5148
    %v5150 = vand.u32 %v5149, 4294901760
    %v5151 = vsub.f32 %v5149, %v5150
    %v5152 = vand.u32 %v5151, 4294901760
    %5153 = vmatpush.msra.mxu0 %v5152
    %v5154 = vand.u32 %v84, 4294901760
    %v5155 = vsub.f32 %v84, %v5154
    %v5156 = vand.u32 %v5155, 4294901760
    %v5157 = vsub.f32 %v5155, %v5156
    %v5158 = vand.u32 %v5157, 4294901760
    %5159 = vmatpush.msra.mxu0 %v5158
    %v5160 = vand.u32 %v76, 4294901760
    %v5161 = vsub.f32 %v76, %v5160
    %v5162 = vand.u32 %v5161, 4294901760
    %v5163 = vsub.f32 %v5161, %v5162
    %v5164 = vand.u32 %v5163, 4294901760
    %5165 = vmatpush.msra.mxu0 %v5164
    %v5166 = vand.u32 %v68, 4294901760
    %v5167 = vsub.f32 %v68, %v5166
    %v5168 = vand.u32 %v5167, 4294901760
    %v5169 = vsub.f32 %v5167, %v5168
    %v5170 = vand.u32 %v5169, 4294901760
    %5171 = vmatpush.msra.mxu0 %v5170
    %v5172 = vand.u32 %v60, 4294901760
    %v5173 = vsub.f32 %v60, %v5172
    %v5174 = vand.u32 %v5173, 4294901760
    %v5175 = vsub.f32 %v5173, %v5174
    %v5176 = vand.u32 %v5175, 4294901760
    %5177 = vmatpush.msra.mxu0 %v5176
    %v5178 = vand.u32 %v52, 4294901760
    %v5179 = vsub.f32 %v52, %v5178
    %v5180 = vand.u32 %v5179, 4294901760
    %v5181 = vsub.f32 %v5179, %v5180
    %v5182 = vand.u32 %v5181, 4294901760
    %5183 = vmatpush.msra.mxu0 %v5182
    %v5184 = vand.u32 %v44, 4294901760
    %v5185 = vsub.f32 %v44, %v5184
    %v5186 = vand.u32 %v5185, 4294901760
    %v5187 = vsub.f32 %v5185, %v5186
    %v5188 = vand.u32 %v5187, 4294901760
    %5189 = vmatpush.msra.mxu0 %v5188
    %v5190 = vand.u32 %v36, 4294901760
    %v5191 = vsub.f32 %v36, %v5190
    %v5192 = vand.u32 %v5191, 4294901760
    %v5193 = vsub.f32 %v5191, %v5192
    %v5194 = vand.u32 %v5193, 4294901760
    %5195 = vmatpush.msra.mxu0 %v5194
    %v5196 = vand.u32 %v27, 4294901760
    %5197 = vmatmul.f32.gmra.mxu0 %v5196
    %v5198 = vpop.f32.mrf.mxu0
    %v5199 = vadd.f32 %v5098, %v5198
    %5200 = vdwg.mxu0
    %v5201 = vand.u32 %v156, 4294901760
    %v5202 = vsub.f32 %v156, %v5201
    %5203 = vmatpush.msra.mxu0 %v5202
    %v5204 = vand.u32 %v148, 4294901760
    %v5205 = vsub.f32 %v148, %v5204
    %5206 = vmatpush.msra.mxu0 %v5205
    %v5207 = vand.u32 %v140, 4294901760
    %v5208 = vsub.f32 %v140, %v5207
    %5209 = vmatpush.msra.mxu0 %v5208
    %v5210 = vand.u32 %v132, 4294901760
    %v5211 = vsub.f32 %v132, %v5210
    %5212 = vmatpush.msra.mxu0 %v5211
    %v5213 = vand.u32 %v124, 4294901760
    %v5214 = vsub.f32 %v124, %v5213
    %5215 = vmatpush.msra.mxu0 %v5214
    %v5216 = vand.u32 %v116, 4294901760
    %v5217 = vsub.f32 %v116, %v5216
    %5218 = vmatpush.msra.mxu0 %v5217
    %v5219 = vand.u32 %v108, 4294901760
    %v5220 = vsub.f32 %v108, %v5219
    %5221 = vmatpush.msra.mxu0 %v5220
    %v5222 = vand.u32 %v100, 4294901760
    %v5223 = vsub.f32 %v100, %v5222
    %5224 = vmatpush.msra.mxu0 %v5223
    %v5225 = vand.u32 %v92, 4294901760
    %v5226 = vsub.f32 %v92, %v5225
    %5227 = vmatpush.msra.mxu0 %v5226
    %v5228 = vand.u32 %v84, 4294901760
    %v5229 = vsub.f32 %v84, %v5228
    %5230 = vmatpush.msra.mxu0 %v5229
    %v5231 = vand.u32 %v76, 4294901760
    %v5232 = vsub.f32 %v76, %v5231
    %5233 = vmatpush.msra.mxu0 %v5232
    %v5234 = vand.u32 %v68, 4294901760
    %v5235 = vsub.f32 %v68, %v5234
    %5236 = vmatpush.msra.mxu0 %v5235
    %v5237 = vand.u32 %v60, 4294901760
    %v5238 = vsub.f32 %v60, %v5237
    %5239 = vmatpush.msra.mxu0 %v5238
    %v5240 = vand.u32 %v52, 4294901760
    %v5241 = vsub.f32 %v52, %v5240
    %5242 = vmatpush.msra.mxu0 %v5241
    %v5243 = vand.u32 %v44, 4294901760
    %v5244 = vsub.f32 %v44, %v5243
    %5245 = vmatpush.msra.mxu0 %v5244
    %v5246 = vand.u32 %v36, 4294901760
    %v5247 = vsub.f32 %v36, %v5246
    %5248 = vmatpush.msra.mxu0 %v5247
    %v5249 = vand.u32 %v27, 4294901760
    %v5250 = vsub.f32 %v27, %v5249
    %5251 = vmatmul.f32.gmra.mxu0 %v5250
    %v5252 = vpop.f32.mrf.mxu0
    %v5253 = vadd.f32 %v5199, %v5252
    %5254 = vdwg.mxu0
    %v5255 = vand.u32 %v156, 4294901760
    %5256 = vmatpush.msra.mxu0 %v5255
    %v5257 = vand.u32 %v148, 4294901760
    %5258 = vmatpush.msra.mxu0 %v5257
    %v5259 = vand.u32 %v140, 4294901760
    %5260 = vmatpush.msra.mxu0 %v5259
    %v5261 = vand.u32 %v132, 4294901760
    %5262 = vmatpush.msra.mxu0 %v5261
    %v5263 = vand.u32 %v124, 4294901760
    %5264 = vmatpush.msra.mxu0 %v5263
    %v5265 = vand.u32 %v116, 4294901760
    %5266 = vmatpush.msra.mxu0 %v5265
    %v5267 = vand.u32 %v108, 4294901760
    %5268 = vmatpush.msra.mxu0 %v5267
    %v5269 = vand.u32 %v100, 4294901760
    %5270 = vmatpush.msra.mxu0 %v5269
    %v5271 = vand.u32 %v92, 4294901760
    %5272 = vmatpush.msra.mxu0 %v5271
    %v5273 = vand.u32 %v84, 4294901760
    %5274 = vmatpush.msra.mxu0 %v5273
    %v5275 = vand.u32 %v76, 4294901760
    %5276 = vmatpush.msra.mxu0 %v5275
    %v5277 = vand.u32 %v68, 4294901760
    %5278 = vmatpush.msra.mxu0 %v5277
    %v5279 = vand.u32 %v60, 4294901760
    %5280 = vmatpush.msra.mxu0 %v5279
    %v5281 = vand.u32 %v52, 4294901760
    %5282 = vmatpush.msra.mxu0 %v5281
    %v5283 = vand.u32 %v44, 4294901760
    %5284 = vmatpush.msra.mxu0 %v5283
    %v5285 = vand.u32 %v36, 4294901760
    %5286 = vmatpush.msra.mxu0 %v5285
    %v5287 = vand.u32 %v27, 4294901760
    %v5288 = vsub.f32 %v27, %v5287
    %v5289 = vand.u32 %v5288, 4294901760
    %5290 = vmatmul.f32.gmra.mxu0 %v5289
    %v5291 = vpop.f32.mrf.mxu0
    %v5292 = vadd.f32 %v5253, %v5291
    %5293 = vdwg.mxu0
    %v5294 = vand.u32 %v156, 4294901760
    %v5295 = vsub.f32 %v156, %v5294
    %v5296 = vand.u32 %v5295, 4294901760
    %5297 = vmatpush.msra.mxu0 %v5296
    %v5298 = vand.u32 %v148, 4294901760
    %v5299 = vsub.f32 %v148, %v5298
    %v5300 = vand.u32 %v5299, 4294901760
    %5301 = vmatpush.msra.mxu0 %v5300
    %v5302 = vand.u32 %v140, 4294901760
    %v5303 = vsub.f32 %v140, %v5302
    %v5304 = vand.u32 %v5303, 4294901760
    %5305 = vmatpush.msra.mxu0 %v5304
    %v5306 = vand.u32 %v132, 4294901760
    %v5307 = vsub.f32 %v132, %v5306
    %v5308 = vand.u32 %v5307, 4294901760
    %5309 = vmatpush.msra.mxu0 %v5308
    %v5310 = vand.u32 %v124, 4294901760
    %v5311 = vsub.f32 %v124, %v5310
    %v5312 = vand.u32 %v5311, 4294901760
    %5313 = vmatpush.msra.mxu0 %v5312
    %v5314 = vand.u32 %v116, 4294901760
    %v5315 = vsub.f32 %v116, %v5314
    %v5316 = vand.u32 %v5315, 4294901760
    %5317 = vmatpush.msra.mxu0 %v5316
    %v5318 = vand.u32 %v108, 4294901760
    %v5319 = vsub.f32 %v108, %v5318
    %v5320 = vand.u32 %v5319, 4294901760
    %5321 = vmatpush.msra.mxu0 %v5320
    %v5322 = vand.u32 %v100, 4294901760
    %v5323 = vsub.f32 %v100, %v5322
    %v5324 = vand.u32 %v5323, 4294901760
    %5325 = vmatpush.msra.mxu0 %v5324
    %v5326 = vand.u32 %v92, 4294901760
    %v5327 = vsub.f32 %v92, %v5326
    %v5328 = vand.u32 %v5327, 4294901760
    %5329 = vmatpush.msra.mxu0 %v5328
    %v5330 = vand.u32 %v84, 4294901760
    %v5331 = vsub.f32 %v84, %v5330
    %v5332 = vand.u32 %v5331, 4294901760
    %5333 = vmatpush.msra.mxu0 %v5332
    %v5334 = vand.u32 %v76, 4294901760
    %v5335 = vsub.f32 %v76, %v5334
    %v5336 = vand.u32 %v5335, 4294901760
    %5337 = vmatpush.msra.mxu0 %v5336
    %v5338 = vand.u32 %v68, 4294901760
    %v5339 = vsub.f32 %v68, %v5338
    %v5340 = vand.u32 %v5339, 4294901760
    %5341 = vmatpush.msra.mxu0 %v5340
    %v5342 = vand.u32 %v60, 4294901760
    %v5343 = vsub.f32 %v60, %v5342
    %v5344 = vand.u32 %v5343, 4294901760
    %5345 = vmatpush.msra.mxu0 %v5344
    %v5346 = vand.u32 %v52, 4294901760
    %v5347 = vsub.f32 %v52, %v5346
    %v5348 = vand.u32 %v5347, 4294901760
    %5349 = vmatpush.msra.mxu0 %v5348
    %v5350 = vand.u32 %v44, 4294901760
    %v5351 = vsub.f32 %v44, %v5350
    %v5352 = vand.u32 %v5351, 4294901760
    %5353 = vmatpush.msra.mxu0 %v5352
    %v5354 = vand.u32 %v36, 4294901760
    %v5355 = vsub.f32 %v36, %v5354
    %v5356 = vand.u32 %v5355, 4294901760
    %5357 = vmatpush.msra.mxu0 %v5356
    %v5358 = vand.u32 %v27, 4294901760
    %5359 = vmatmul.f32.gmra.mxu0 %v5358
    %v5360 = vpop.f32.mrf.mxu0
    %v5361 = vadd.f32 %v5292, %v5360
    %5362 = vdwg.mxu0
    %v5363 = vand.u32 %v156, 4294901760
    %5364 = vmatpush.msra.mxu0 %v5363
    %v5365 = vand.u32 %v148, 4294901760
    %5366 = vmatpush.msra.mxu0 %v5365
    %v5367 = vand.u32 %v140, 4294901760
    %5368 = vmatpush.msra.mxu0 %v5367
    %v5369 = vand.u32 %v132, 4294901760
    %5370 = vmatpush.msra.mxu0 %v5369
    %v5371 = vand.u32 %v124, 4294901760
    %5372 = vmatpush.msra.mxu0 %v5371
    %v5373 = vand.u32 %v116, 4294901760
    %5374 = vmatpush.msra.mxu0 %v5373
    %v5375 = vand.u32 %v108, 4294901760
    %5376 = vmatpush.msra.mxu0 %v5375
    %v5377 = vand.u32 %v100, 4294901760
    %5378 = vmatpush.msra.mxu0 %v5377
    %v5379 = vand.u32 %v92, 4294901760
    %5380 = vmatpush.msra.mxu0 %v5379
    %v5381 = vand.u32 %v84, 4294901760
    %5382 = vmatpush.msra.mxu0 %v5381
    %v5383 = vand.u32 %v76, 4294901760
    %5384 = vmatpush.msra.mxu0 %v5383
    %v5385 = vand.u32 %v68, 4294901760
    %5386 = vmatpush.msra.mxu0 %v5385
    %v5387 = vand.u32 %v60, 4294901760
    %5388 = vmatpush.msra.mxu0 %v5387
    %v5389 = vand.u32 %v52, 4294901760
    %5390 = vmatpush.msra.mxu0 %v5389
    %v5391 = vand.u32 %v44, 4294901760
    %5392 = vmatpush.msra.mxu0 %v5391
    %v5393 = vand.u32 %v36, 4294901760
    %5394 = vmatpush.msra.mxu0 %v5393
    %v5395 = vand.u32 %v27, 4294901760
    %5396 = vmatmul.f32.gmra.mxu0 %v5395
    %v5397 = vpop.f32.mrf.mxu0
    %v5398 = vadd.f32 %v5361, %v5397
    %5399 = vdwg.mxu0
    %v5400 = vand.u32 %v284, 4294901760
    %5401 = vmatpush.msra.mxu0 %v5400
    %v5402 = vand.u32 %v276, 4294901760
    %5403 = vmatpush.msra.mxu0 %v5402
    %v5404 = vand.u32 %v268, 4294901760
    %5405 = vmatpush.msra.mxu0 %v5404
    %v5406 = vand.u32 %v260, 4294901760
    %5407 = vmatpush.msra.mxu0 %v5406
    %v5408 = vand.u32 %v252, 4294901760
    %5409 = vmatpush.msra.mxu0 %v5408
    %v5410 = vand.u32 %v244, 4294901760
    %5411 = vmatpush.msra.mxu0 %v5410
    %v5412 = vand.u32 %v236, 4294901760
    %5413 = vmatpush.msra.mxu0 %v5412
    %v5414 = vand.u32 %v228, 4294901760
    %5415 = vmatpush.msra.mxu0 %v5414
    %v5416 = vand.u32 %v220, 4294901760
    %5417 = vmatpush.msra.mxu0 %v5416
    %v5418 = vand.u32 %v212, 4294901760
    %5419 = vmatpush.msra.mxu0 %v5418
    %v5420 = vand.u32 %v204, 4294901760
    %5421 = vmatpush.msra.mxu0 %v5420
    %v5422 = vand.u32 %v196, 4294901760
    %5423 = vmatpush.msra.mxu0 %v5422
    %v5424 = vand.u32 %v188, 4294901760
    %5425 = vmatpush.msra.mxu0 %v5424
    %v5426 = vand.u32 %v180, 4294901760
    %5427 = vmatpush.msra.mxu0 %v5426
    %v5428 = vand.u32 %v172, 4294901760
    %5429 = vmatpush.msra.mxu0 %v5428
    %v5430 = vand.u32 %v164, 4294901760
    %5431 = vmatpush.msra.mxu0 %v5430
    %v5432 = vand.u32 %v28, 4294901760
    %v5433 = vsub.f32 %v28, %v5432
    %v5434 = vand.u32 %v5433, 4294901760
    %v5435 = vsub.f32 %v5433, %v5434
    %v5436 = vand.u32 %v5435, 4294901760
    %5437 = vmatmul.f32.gmra.mxu0 %v5436
    %v5438 = vpop.f32.mrf.mxu0
    %v5439 = vadd.f32 %v5398, %v5438
    %5440 = vdwg.mxu0
    %v5441 = vand.u32 %v284, 4294901760
    %v5442 = vsub.f32 %v284, %v5441
    %v5443 = vand.u32 %v5442, 4294901760
    %v5444 = vsub.f32 %v5442, %v5443
    %v5445 = vand.u32 %v5444, 4294901760
    %5446 = vmatpush.msra.mxu0 %v5445
    %v5447 = vand.u32 %v276, 4294901760
    %v5448 = vsub.f32 %v276, %v5447
    %v5449 = vand.u32 %v5448, 4294901760
    %v5450 = vsub.f32 %v5448, %v5449
    %v5451 = vand.u32 %v5450, 4294901760
    %5452 = vmatpush.msra.mxu0 %v5451
    %v5453 = vand.u32 %v268, 4294901760
    %v5454 = vsub.f32 %v268, %v5453
    %v5455 = vand.u32 %v5454, 4294901760
    %v5456 = vsub.f32 %v5454, %v5455
    %v5457 = vand.u32 %v5456, 4294901760
    %5458 = vmatpush.msra.mxu0 %v5457
    %v5459 = vand.u32 %v260, 4294901760
    %v5460 = vsub.f32 %v260, %v5459
    %v5461 = vand.u32 %v5460, 4294901760
    %v5462 = vsub.f32 %v5460, %v5461
    %v5463 = vand.u32 %v5462, 4294901760
    %5464 = vmatpush.msra.mxu0 %v5463
    %v5465 = vand.u32 %v252, 4294901760
    %v5466 = vsub.f32 %v252, %v5465
    %v5467 = vand.u32 %v5466, 4294901760
    %v5468 = vsub.f32 %v5466, %v5467
    %v5469 = vand.u32 %v5468, 4294901760
    %5470 = vmatpush.msra.mxu0 %v5469
    %v5471 = vand.u32 %v244, 4294901760
    %v5472 = vsub.f32 %v244, %v5471
    %v5473 = vand.u32 %v5472, 4294901760
    %v5474 = vsub.f32 %v5472, %v5473
    %v5475 = vand.u32 %v5474, 4294901760
    %5476 = vmatpush.msra.mxu0 %v5475
    %v5477 = vand.u32 %v236, 4294901760
    %v5478 = vsub.f32 %v236, %v5477
    %v5479 = vand.u32 %v5478, 4294901760
    %v5480 = vsub.f32 %v5478, %v5479
    %v5481 = vand.u32 %v5480, 4294901760
    %5482 = vmatpush.msra.mxu0 %v5481
    %v5483 = vand.u32 %v228, 4294901760
    %v5484 = vsub.f32 %v228, %v5483
    %v5485 = vand.u32 %v5484, 4294901760
    %v5486 = vsub.f32 %v5484, %v5485
    %v5487 = vand.u32 %v5486, 4294901760
    %5488 = vmatpush.msra.mxu0 %v5487
    %v5489 = vand.u32 %v220, 4294901760
    %v5490 = vsub.f32 %v220, %v5489
    %v5491 = vand.u32 %v5490, 4294901760
    %v5492 = vsub.f32 %v5490, %v5491
    %v5493 = vand.u32 %v5492, 4294901760
    %5494 = vmatpush.msra.mxu0 %v5493
    %v5495 = vand.u32 %v212, 4294901760
    %v5496 = vsub.f32 %v212, %v5495
    %v5497 = vand.u32 %v5496, 4294901760
    %v5498 = vsub.f32 %v5496, %v5497
    %v5499 = vand.u32 %v5498, 4294901760
    %5500 = vmatpush.msra.mxu0 %v5499
    %v5501 = vand.u32 %v204, 4294901760
    %v5502 = vsub.f32 %v204, %v5501
    %v5503 = vand.u32 %v5502, 4294901760
    %v5504 = vsub.f32 %v5502, %v5503
    %v5505 = vand.u32 %v5504, 4294901760
    %5506 = vmatpush.msra.mxu0 %v5505
    %v5507 = vand.u32 %v196, 4294901760
    %v5508 = vsub.f32 %v196, %v5507
    %v5509 = vand.u32 %v5508, 4294901760
    %v5510 = vsub.f32 %v5508, %v5509
    %v5511 = vand.u32 %v5510, 4294901760
    %5512 = vmatpush.msra.mxu0 %v5511
    %v5513 = vand.u32 %v188, 4294901760
    %v5514 = vsub.f32 %v188, %v5513
    %v5515 = vand.u32 %v5514, 4294901760
    %v5516 = vsub.f32 %v5514, %v5515
    %v5517 = vand.u32 %v5516, 4294901760
    %5518 = vmatpush.msra.mxu0 %v5517
    %v5519 = vand.u32 %v180, 4294901760
    %v5520 = vsub.f32 %v180, %v5519
    %v5521 = vand.u32 %v5520, 4294901760
    %v5522 = vsub.f32 %v5520, %v5521
    %v5523 = vand.u32 %v5522, 4294901760
    %5524 = vmatpush.msra.mxu0 %v5523
    %v5525 = vand.u32 %v172, 4294901760
    %v5526 = vsub.f32 %v172, %v5525
    %v5527 = vand.u32 %v5526, 4294901760
    %v5528 = vsub.f32 %v5526, %v5527
    %v5529 = vand.u32 %v5528, 4294901760
    %5530 = vmatpush.msra.mxu0 %v5529
    %v5531 = vand.u32 %v164, 4294901760
    %v5532 = vsub.f32 %v164, %v5531
    %v5533 = vand.u32 %v5532, 4294901760
    %v5534 = vsub.f32 %v5532, %v5533
    %v5535 = vand.u32 %v5534, 4294901760
    %5536 = vmatpush.msra.mxu0 %v5535
    %v5537 = vand.u32 %v28, 4294901760
    %5538 = vmatmul.f32.gmra.mxu0 %v5537
    %v5539 = vpop.f32.mrf.mxu0
    %v5540 = vadd.f32 %v5439, %v5539
    %5541 = vdwg.mxu0
    %v5542 = vand.u32 %v284, 4294901760
    %v5543 = vsub.f32 %v284, %v5542
    %5544 = vmatpush.msra.mxu0 %v5543
    %v5545 = vand.u32 %v276, 4294901760
    %v5546 = vsub.f32 %v276, %v5545
    %5547 = vmatpush.msra.mxu0 %v5546
    %v5548 = vand.u32 %v268, 4294901760
    %v5549 = vsub.f32 %v268, %v5548
    %5550 = vmatpush.msra.mxu0 %v5549
    %v5551 = vand.u32 %v260, 4294901760
    %v5552 = vsub.f32 %v260, %v5551
    %5553 = vmatpush.msra.mxu0 %v5552
    %v5554 = vand.u32 %v252, 4294901760
    %v5555 = vsub.f32 %v252, %v5554
    %5556 = vmatpush.msra.mxu0 %v5555
    %v5557 = vand.u32 %v244, 4294901760
    %v5558 = vsub.f32 %v244, %v5557
    %5559 = vmatpush.msra.mxu0 %v5558
    %v5560 = vand.u32 %v236, 4294901760
    %v5561 = vsub.f32 %v236, %v5560
    %5562 = vmatpush.msra.mxu0 %v5561
    %v5563 = vand.u32 %v228, 4294901760
    %v5564 = vsub.f32 %v228, %v5563
    %5565 = vmatpush.msra.mxu0 %v5564
    %v5566 = vand.u32 %v220, 4294901760
    %v5567 = vsub.f32 %v220, %v5566
    %5568 = vmatpush.msra.mxu0 %v5567
    %v5569 = vand.u32 %v212, 4294901760
    %v5570 = vsub.f32 %v212, %v5569
    %5571 = vmatpush.msra.mxu0 %v5570
    %v5572 = vand.u32 %v204, 4294901760
    %v5573 = vsub.f32 %v204, %v5572
    %5574 = vmatpush.msra.mxu0 %v5573
    %v5575 = vand.u32 %v196, 4294901760
    %v5576 = vsub.f32 %v196, %v5575
    %5577 = vmatpush.msra.mxu0 %v5576
    %v5578 = vand.u32 %v188, 4294901760
    %v5579 = vsub.f32 %v188, %v5578
    %5580 = vmatpush.msra.mxu0 %v5579
    %v5581 = vand.u32 %v180, 4294901760
    %v5582 = vsub.f32 %v180, %v5581
    %5583 = vmatpush.msra.mxu0 %v5582
    %v5584 = vand.u32 %v172, 4294901760
    %v5585 = vsub.f32 %v172, %v5584
    %5586 = vmatpush.msra.mxu0 %v5585
    %v5587 = vand.u32 %v164, 4294901760
    %v5588 = vsub.f32 %v164, %v5587
    %5589 = vmatpush.msra.mxu0 %v5588
    %v5590 = vand.u32 %v28, 4294901760
    %v5591 = vsub.f32 %v28, %v5590
    %5592 = vmatmul.f32.gmra.mxu0 %v5591
    %v5593 = vpop.f32.mrf.mxu0
    %v5594 = vadd.f32 %v5540, %v5593
    %5595 = vdwg.mxu0
    %v5596 = vand.u32 %v284, 4294901760
    %5597 = vmatpush.msra.mxu0 %v5596
    %v5598 = vand.u32 %v276, 4294901760
    %5599 = vmatpush.msra.mxu0 %v5598
    %v5600 = vand.u32 %v268, 4294901760
    %5601 = vmatpush.msra.mxu0 %v5600
    %v5602 = vand.u32 %v260, 4294901760
    %5603 = vmatpush.msra.mxu0 %v5602
    %v5604 = vand.u32 %v252, 4294901760
    %5605 = vmatpush.msra.mxu0 %v5604
    %v5606 = vand.u32 %v244, 4294901760
    %5607 = vmatpush.msra.mxu0 %v5606
    %v5608 = vand.u32 %v236, 4294901760
    %5609 = vmatpush.msra.mxu0 %v5608
    %v5610 = vand.u32 %v228, 4294901760
    %5611 = vmatpush.msra.mxu0 %v5610
    %v5612 = vand.u32 %v220, 4294901760
    %5613 = vmatpush.msra.mxu0 %v5612
    %v5614 = vand.u32 %v212, 4294901760
    %5615 = vmatpush.msra.mxu0 %v5614
    %v5616 = vand.u32 %v204, 4294901760
    %5617 = vmatpush.msra.mxu0 %v5616
    %v5618 = vand.u32 %v196, 4294901760
    %5619 = vmatpush.msra.mxu0 %v5618
    %v5620 = vand.u32 %v188, 4294901760
    %5621 = vmatpush.msra.mxu0 %v5620
    %v5622 = vand.u32 %v180, 4294901760
    %5623 = vmatpush.msra.mxu0 %v5622
    %v5624 = vand.u32 %v172, 4294901760
    %5625 = vmatpush.msra.mxu0 %v5624
    %v5626 = vand.u32 %v164, 4294901760
    %5627 = vmatpush.msra.mxu0 %v5626
    %v5628 = vand.u32 %v28, 4294901760
    %v5629 = vsub.f32 %v28, %v5628
    %v5630 = vand.u32 %v5629, 4294901760
    %5631 = vmatmul.f32.gmra.mxu0 %v5630
    %v5632 = vpop.f32.mrf.mxu0
    %v5633 = vadd.f32 %v5594, %v5632
    %5634 = vdwg.mxu0
    %v5635 = vand.u32 %v284, 4294901760
    %v5636 = vsub.f32 %v284, %v5635
    %v5637 = vand.u32 %v5636, 4294901760
    %5638 = vmatpush.msra.mxu0 %v5637
    %v5639 = vand.u32 %v276, 4294901760
    %v5640 = vsub.f32 %v276, %v5639
    %v5641 = vand.u32 %v5640, 4294901760
    %5642 = vmatpush.msra.mxu0 %v5641
    %v5643 = vand.u32 %v268, 4294901760
    %v5644 = vsub.f32 %v268, %v5643
    %v5645 = vand.u32 %v5644, 4294901760
    %5646 = vmatpush.msra.mxu0 %v5645
    %v5647 = vand.u32 %v260, 4294901760
    %v5648 = vsub.f32 %v260, %v5647
    %v5649 = vand.u32 %v5648, 4294901760
    %5650 = vmatpush.msra.mxu0 %v5649
    %v5651 = vand.u32 %v252, 4294901760
    %v5652 = vsub.f32 %v252, %v5651
    %v5653 = vand.u32 %v5652, 4294901760
    %5654 = vmatpush.msra.mxu0 %v5653
    %v5655 = vand.u32 %v244, 4294901760
    %v5656 = vsub.f32 %v244, %v5655
    %v5657 = vand.u32 %v5656, 4294901760
    %5658 = vmatpush.msra.mxu0 %v5657
    %v5659 = vand.u32 %v236, 4294901760
    %v5660 = vsub.f32 %v236, %v5659
    %v5661 = vand.u32 %v5660, 4294901760
    %5662 = vmatpush.msra.mxu0 %v5661
    %v5663 = vand.u32 %v228, 4294901760
    %v5664 = vsub.f32 %v228, %v5663
    %v5665 = vand.u32 %v5664, 4294901760
    %5666 = vmatpush.msra.mxu0 %v5665
    %v5667 = vand.u32 %v220, 4294901760
    %v5668 = vsub.f32 %v220, %v5667
    %v5669 = vand.u32 %v5668, 4294901760
    %5670 = vmatpush.msra.mxu0 %v5669
    %v5671 = vand.u32 %v212, 4294901760
    %v5672 = vsub.f32 %v212, %v5671
    %v5673 = vand.u32 %v5672, 4294901760
    %5674 = vmatpush.msra.mxu0 %v5673
    %v5675 = vand.u32 %v204, 4294901760
    %v5676 = vsub.f32 %v204, %v5675
    %v5677 = vand.u32 %v5676, 4294901760
    %5678 = vmatpush.msra.mxu0 %v5677
    %v5679 = vand.u32 %v196, 4294901760
    %v5680 = vsub.f32 %v196, %v5679
    %v5681 = vand.u32 %v5680, 4294901760
    %5682 = vmatpush.msra.mxu0 %v5681
    %v5683 = vand.u32 %v188, 4294901760
    %v5684 = vsub.f32 %v188, %v5683
    %v5685 = vand.u32 %v5684, 4294901760
    %5686 = vmatpush.msra.mxu0 %v5685
    %v5687 = vand.u32 %v180, 4294901760
    %v5688 = vsub.f32 %v180, %v5687
    %v5689 = vand.u32 %v5688, 4294901760
    %5690 = vmatpush.msra.mxu0 %v5689
    %v5691 = vand.u32 %v172, 4294901760
    %v5692 = vsub.f32 %v172, %v5691
    %v5693 = vand.u32 %v5692, 4294901760
    %5694 = vmatpush.msra.mxu0 %v5693
    %v5695 = vand.u32 %v164, 4294901760
    %v5696 = vsub.f32 %v164, %v5695
    %v5697 = vand.u32 %v5696, 4294901760
    %5698 = vmatpush.msra.mxu0 %v5697
    %v5699 = vand.u32 %v28, 4294901760
    %5700 = vmatmul.f32.gmra.mxu0 %v5699
    %v5701 = vpop.f32.mrf.mxu0
    %v5702 = vadd.f32 %v5633, %v5701
    %5703 = vdwg.mxu0
    %v5704 = vand.u32 %v284, 4294901760
    %5705 = vmatpush.msra.mxu0 %v5704
    %v5706 = vand.u32 %v276, 4294901760
    %5707 = vmatpush.msra.mxu0 %v5706
    %v5708 = vand.u32 %v268, 4294901760
    %5709 = vmatpush.msra.mxu0 %v5708
    %v5710 = vand.u32 %v260, 4294901760
    %5711 = vmatpush.msra.mxu0 %v5710
    %v5712 = vand.u32 %v252, 4294901760
    %5713 = vmatpush.msra.mxu0 %v5712
    %v5714 = vand.u32 %v244, 4294901760
    %5715 = vmatpush.msra.mxu0 %v5714
    %v5716 = vand.u32 %v236, 4294901760
    %5717 = vmatpush.msra.mxu0 %v5716
    %v5718 = vand.u32 %v228, 4294901760
    %5719 = vmatpush.msra.mxu0 %v5718
    %v5720 = vand.u32 %v220, 4294901760
    %5721 = vmatpush.msra.mxu0 %v5720
    %v5722 = vand.u32 %v212, 4294901760
    %5723 = vmatpush.msra.mxu0 %v5722
    %v5724 = vand.u32 %v204, 4294901760
    %5725 = vmatpush.msra.mxu0 %v5724
    %v5726 = vand.u32 %v196, 4294901760
    %5727 = vmatpush.msra.mxu0 %v5726
    %v5728 = vand.u32 %v188, 4294901760
    %5729 = vmatpush.msra.mxu0 %v5728
    %v5730 = vand.u32 %v180, 4294901760
    %5731 = vmatpush.msra.mxu0 %v5730
    %v5732 = vand.u32 %v172, 4294901760
    %5733 = vmatpush.msra.mxu0 %v5732
    %v5734 = vand.u32 %v164, 4294901760
    %5735 = vmatpush.msra.mxu0 %v5734
    %v5736 = vand.u32 %v28, 4294901760
    %5737 = vmatmul.f32.gmra.mxu0 %v5736
    %v5738 = vpop.f32.mrf.mxu0
    %v5739 = vadd.f32 %v5702, %v5738
    %5740 = vdwg.mxu0
    %5741 = vst [vmem:[%s2] sm:$0xff] %v965
    %5742 = vst [vmem:[%s2 + $0x8] sm:$0xff] %v1647
    %5743 = vst [vmem:[%s2 + $0x10] sm:$0xff] %v2329
    %5744 = vst [vmem:[%s2 + $0x18] sm:$0xff] %v3011
    %5745 = vst [vmem:[%s2 + $0x20] sm:$0xff] %v3693
    %5746 = vst [vmem:[%s2 + $0x28] sm:$0xff] %v4375
    %5747 = vst [vmem:[%s2 + $0x30] sm:$0xff] %v5057
    %5748 = vst [vmem:[%s2 + $0x38] sm:$0xff] %v5739
    // Predicated region
    $region14: #{upsample_one.1} parent=1 // pred_check
      _
    $region15: #{upsample_one.1} parent=1 // pred_check_branch
      %5750 = sbr.rel (0) target = $region17
    $region16: #{upsample_one.1} parent=1 // pred_region
      _
    $region17: #{upsample_one.1} parent=1 // pred_fallthru
      _
    // Predicated region
    $region18: #{upsample_one.1} parent=1 // pred_check
      _
    $region19: #{upsample_one.1} parent=1 // pred_check_branch
      %5752 = sbr.rel (0) target = $region21
    $region20: #{upsample_one.1} parent=1 // pred_region
      _
    $region21: #{upsample_one.1} parent=1 // pred_fallthru
      _
    %5753 = vsyncpa [#allocation3], 1

</llo_original>
